<compile_context>
chip_gen: v7x
topology: tpu7x:2x2x1
jax: 0.10.0
libtpu: 0.0.40
codegen_flags: <defaults>
</compile_context>

<pallas_src>
import functools
import math

import jax
import jax.numpy as jnp
import numpy as np
from jax.experimental import pallas as pl
from jax.experimental.pallas import tpu as pltpu


def _round_up(x, m):
    return ((x + m - 1) // m) * m


# -----------------------------------------------------------------------------
# Fused per-layer kernel: chunk input projection + bidirectional recurrence.
# Grid axis 0 = time chunks (sequential / "arbitrary"); h/c carries live in
# VMEM scratch across grid iterations.
# -----------------------------------------------------------------------------
def _bilstm_layer_kernel(*refs, n_pieces, t_chunk, hidden, t_real, t_pad,
                         padded):
    # ref layout (inputs, in order):
    #   pieces_f[0..n-1] : (t_chunk, B, D_i)  layer input, fwd chunk order
    #   pieces_r[0..n-1] : (t_chunk, B, D_i)  same arrays, rev chunk order
    #   wih_f[0..n-1]    : (D_i, 4H)          input weights (fwd dir, per piece)
    #   wih_r[0..n-1]    : (D_i, 4H)
    #   b_f, b_r         : (1, 4H)  float32   combined bias per direction
    #   whh_f, whh_r     : (H, 4H)            recurrent weights
    # outputs:
    #   out_f, out_r     : (t_chunk, B, H)    (rev output block walks backwards)
    # scratch:
    #   xw_scr           : (2, t_chunk, B, 4H) f32  chunk input projections
    #   h_scr, c_scr     : (2B, H) f32              stacked [fwd; rev] carries
    n = n_pieces
    pieces_f = refs[0:n]
    pieces_r = refs[n:2 * n]
    wih_f = refs[2 * n:3 * n]
    wih_r = refs[3 * n:4 * n]
    b_f_ref, b_r_ref, whh_f_ref, whh_r_ref = refs[4 * n:4 * n + 4]
    out_f_ref, out_r_ref = refs[4 * n + 4:4 * n + 6]
    xw_scr, h_scr, c_scr = refs[4 * n + 6:4 * n + 9]

    c_idx = pl.program_id(0)
    H = hidden
    B = out_f_ref.shape[1]
    m = t_chunk * B

    @pl.when(c_idx == 0)
    def _():
        h_scr[...] = jnp.zeros_like(h_scr)
        c_scr[...] = jnp.zeros_like(c_scr)

    # ---- chunk input projection (hoisted out of the recurrence; M = t_chunk*B,
    #      one matmul per piece per direction, result kept in VMEM scratch).
    def project(pieces, wih, bias_ref):
        acc = None
        for p_ref, w_ref in zip(pieces, wih):
            a = p_ref[...].reshape(m, p_ref.shape[-1])
            part = jnp.dot(a, w_ref[...], preferred_element_type=jnp.float32)
            acc = part if acc is None else acc + part
        return acc + b_ref_f32(bias_ref)

    def b_ref_f32(bias_ref):
        return bias_ref[...].astype(jnp.float32)

    xw_scr[0] = project(pieces_f, wih_f, b_f_ref).reshape(t_chunk, B, 4 * H)
    xw_scr[1] = project(pieces_r, wih_r, b_r_ref).reshape(t_chunk, B, 4 * H)

    # ---- recurrence: both directions fused on a stacked (2B, ...) epilogue.
    whh_f = whh_f_ref[...]
    whh_r = whh_r_ref[...]
    wdtype = whh_f.dtype
    pad_amt = t_pad - t_real
    if padded:
        row_is_fwd = jax.lax.broadcasted_iota(jnp.int32, (2 * B, 1), 0) < B

    def body(s, carry):
        h_prev, c_prev = carry                                   # (2B, H) f32
        sr = t_chunk - 1 - s
        g_f = jnp.dot(h_prev[:B].astype(wdtype), whh_f,
                      preferred_element_type=jnp.float32)        # (B, 4H)
        g_r = jnp.dot(h_prev[B:].astype(wdtype), whh_r,
                      preferred_element_type=jnp.float32)
        gates = jnp.concatenate(
            [xw_scr[0, s] + g_f, xw_scr[1, sr] + g_r], axis=0)   # (2B, 4H) f32
        i_g = jax.nn.sigmoid(gates[:, 0 * H:1 * H])
        f_g = jax.nn.sigmoid(gates[:, 1 * H:2 * H])
        g_g = jnp.tanh(gates[:, 2 * H:3 * H])
        o_g = jax.nn.sigmoid(gates[:, 3 * H:4 * H])
        c_new = f_g * c_prev + i_g * g_g
        h_new = o_g * jnp.tanh(c_new)
        if padded:
            # padded time steps: carry h/c through unchanged so the reverse
            # direction starts from exactly zero at its first real step.
            t_glob = c_idx * t_chunk + s
            valid = jnp.where(row_is_fwd, t_glob < t_real, t_glob >= pad_amt)
            h_new = jnp.where(valid, h_new, h_prev)
            c_new = jnp.where(valid, c_new, c_prev)
        out_f_ref[s] = h_new[:B].astype(out_f_ref.dtype)
        out_r_ref[sr] = h_new[B:].astype(out_r_ref.dtype)
        return h_new, c_new

    h_fin, c_fin = jax.lax.fori_loop(0, t_chunk, body,
                                     (h_scr[...], c_scr[...]),
                                     unroll=min(t_chunk, 8))
    h_scr[...] = h_fin
    c_scr[...] = c_fin


def _bilstm_layer(pieces, wih_f, wih_r, b_f, b_r, whh_f, whh_r, *,
                  out_dtype, t_chunk, t_real):
    """One fused bidirectional LSTM layer (projection + recurrence).

    pieces : tuple of (T_pad, B, D_i) arrays whose feature-concat is the layer
             input (layer 0: (x,); layer>0: (out_f, out_r) of previous layer).
    wih_f/wih_r : matching tuples of (D_i, 4H) weights; whh_*: (H, 4H);
    b_* : (1, 4H) float32.  Returns (out_f, out_r), each (T_pad, B, H), both
    indexed by original (forward) time.
    """
    t_pad, B, _ = pieces[0].shape
    H = whh_f.shape[0]
    G = 4 * H
    assert t_pad % t_chunk == 0
    n_chunks = t_pad // t_chunk
    n = len(pieces)
    padded = t_pad != t_real

    kernel = functools.partial(
        _bilstm_layer_kernel, n_pieces=n, t_chunk=t_chunk, hidden=H,
        t_real=t_real, t_pad=t_pad, padded=padded)

    def fwd_spec(d):
        return pl.BlockSpec((t_chunk, B, d), lambda c: (c, 0, 0))

    def rev_spec(d):
        return pl.BlockSpec((t_chunk, B, d), lambda c: (n_chunks - 1 - c, 0, 0))

    def const2d(arr):
        return pl.BlockSpec(arr.shape, lambda c: (0, 0))

    in_specs = ([fwd_spec(p.shape[-1]) for p in pieces]
                + [rev_spec(p.shape[-1]) for p in pieces]
                + [const2d(w) for w in wih_f]
                + [const2d(w) for w in wih_r]
                + [const2d(b_f), const2d(b_r), const2d(whh_f), const2d(whh_r)])

    out_specs = (pl.BlockSpec((t_chunk, B, H), lambda c: (c, 0, 0)),
                 pl.BlockSpec((t_chunk, B, H),
                              lambda c: (n_chunks - 1 - c, 0, 0)))

    return pl.pallas_call(
        kernel,
        out_shape=(jax.ShapeDtypeStruct((t_pad, B, H), out_dtype),
                   jax.ShapeDtypeStruct((t_pad, B, H), out_dtype)),
        grid_spec=pltpu.PrefetchScalarGridSpec(
            num_scalar_prefetch=0,
            grid=(n_chunks,),
            in_specs=in_specs,
            out_specs=out_specs,
            scratch_shapes=[
                pltpu.VMEM((2, t_chunk, B, G), jnp.float32),  # chunk xw (f/r)
                pltpu.VMEM((2 * B, H), jnp.float32),          # h carry [f; r]
                pltpu.VMEM((2 * B, H), jnp.float32),          # c carry [f; r]
            ],
        ),
        compiler_params=pltpu.CompilerParams(
            dimension_semantics=("arbitrary",),   # time recurrence is sequential
            vmem_limit_bytes=48 * 1024 * 1024,    # fits v5e/v6e/v7x
        ),
    )(*pieces, *pieces, *wih_f, *wih_r, b_f, b_r, whh_f, whh_r)


# -----------------------------------------------------------------------------
# Weight preparation: transpose, gate-block pad hidden -> Hp (multiple of 128),
# split W_ih into per-piece row blocks for layers > 0.  All padding is with
# zeros, which keeps padded hidden units exactly zero through the recurrence.
# -----------------------------------------------------------------------------
def _pad_gate_axis(w, H, Hp):
    if H == Hp:
        return w
    parts = []
    for k in range(4):
        blk = w[..., k * H:(k + 1) * H]
        pad = [(0, 0)] * (w.ndim - 1) + [(0, Hp - H)]
        parts.append(jnp.pad(blk, pad))
    return jnp.concatenate(parts, axis=-1)


def _prepare_dir(dir_params, layer, H, Hp, dtype):
    w_ih, w_hh, b_ih, b_hh = dir_params          # PyTorch layout
    wih_t = _pad_gate_axis(w_ih.T, H, Hp)        # (d_in, 4Hp)
    whh_t = _pad_gate_axis(w_hh.T, H, Hp)        # (H, 4Hp)
    whh_t = jnp.pad(whh_t, ((0, Hp - H), (0, 0)))            # (Hp, 4Hp)
    bias = _pad_gate_axis((b_ih + b_hh)[None, :], H, Hp)     # (1, 4Hp)
    if layer == 0:
        wih_pieces = (wih_t.astype(dtype),)
    else:
        # previous-layer input is [out_f (Hp) | out_r (Hp)]: split + row-pad
        wf = jnp.pad(wih_t[:H], ((0, Hp - H), (0, 0)))
        wr = jnp.pad(wih_t[H:2 * H], ((0, Hp - H), (0, 0)))
        wih_pieces = (wf.astype(dtype), wr.astype(dtype))
    return wih_pieces, bias.astype(jnp.float32), whh_t.astype(dtype)


def _pick_chunk(T, max_t_chunk):
    """Fixed-size chunking with minimal zero time-padding (no divisor search)."""
    max_c = max(1, int(max_t_chunk))
    if T <= max_c:
        return T, T
    best_c, best_pad = max_c, _round_up(T, max_c) - T
    for c in range(max_c, max(1, max_c // 2) - 1, -1):
        pad = _round_up(T, c) - T
        if pad < best_pad:
            best_c, best_pad = c, pad
        if pad == 0:
            break
    return best_c, _round_up(T, best_c)


# -----------------------------------------------------------------------------
# BiLSTM wrapper (stacking is plain-JAX glue; one concat at the very end).
# -----------------------------------------------------------------------------
def bilstm_forward(x_btd, params, *, dtype=jnp.float32, max_t_chunk=32):
    """x_btd: (B, T, input_dim) batch-first, like the PyTorch module.
    params: list over layers of ((w_ih, w_hh, b_ih, b_hh)_fwd, (...)_rev) in
            native PyTorch layout (w_ih: (4H, d_in), w_hh: (4H, H), b: (4H,)).
    dtype: compute/storage dtype for weights & activations (f32 or bf16);
           gate accumulation and the h/c recurrence are always f32.
    returns (B, T, 2*hidden) float32 (only the output sequence, like forward())."""
    B, T, _ = x_btd.shape
    H = params[0][0][1].shape[1]
    Hp = _round_up(H, 128)                       # lane-dense gate slices/stores
    sub = 16 if dtype == jnp.bfloat16 else 8
    Bp = _round_up(B, sub)                       # sublane-dense batch

    t_chunk, t_pad = _pick_chunk(T, max_t_chunk)

    # time-major + zero pad batch/time (padded steps are masked in the kernel)
    x_tbd = jnp.transpose(x_btd, (1, 0, 2))
    x_tbd = jnp.pad(x_tbd, ((0, t_pad - T), (0, Bp - B), (0, 0)))
    pieces = (x_tbd.astype(dtype),)

    for layer, (fwd, rev) in enumerate(params):
        wih_f, b_f, whh_f = _prepare_dir(fwd, layer, H, Hp, dtype)
        wih_r, b_r, whh_r = _prepare_dir(rev, layer, H, Hp, dtype)
        out_f, out_r = _bilstm_layer(
            pieces, wih_f, wih_r, b_f, b_r, whh_f, whh_r,
            out_dtype=dtype, t_chunk=t_chunk, t_real=T)
        pieces = (out_f, out_r)

    out_f, out_r = pieces
    y = jnp.concatenate([out_f[:T, :B, :H], out_r[:T, :B, :H]], axis=-1)
    return jnp.transpose(y, (1, 0, 2)).astype(jnp.float32)     # (B, T, 2H)


# -----------------------------------------------------------------------------
# Deterministic parameter init (PyTorch LSTM default: U(-1/sqrt(H), 1/sqrt(H))),
# in native PyTorch layout.
# -----------------------------------------------------------------------------
def init_bilstm_params(key, input_dim, hidden_dim, num_layers):
    k = 1.0 / math.sqrt(hidden_dim)
    params = []
    for layer in range(num_layers):
        d_in = input_dim if layer == 0 else 2 * hidden_dim
        dir_params = []
        for _ in range(2):  # forward, reverse
            key, k1, k2, k3, k4 = jax.random.split(key, 5)
            w_ih = jax.random.uniform(k1, (4 * hidden_dim, d_in), jnp.float32, -k, k)
            w_hh = jax.random.uniform(k2, (4 * hidden_dim, hidden_dim), jnp.float32, -k, k)
            b_ih = jax.random.uniform(k3, (4 * hidden_dim,), jnp.float32, -k, k)
            b_hh = jax.random.uniform(k4, (4 * hidden_dim,), jnp.float32, -k, k)
            dir_params.append((w_ih, w_hh, b_ih, b_hh))
        params.append(tuple(dir_params))
    return params


# -----------------------------------------------------------------------------
# Pure-JAX reference (lax.scan, float32) for correctness checks.
# -----------------------------------------------------------------------------
def _ref_direction(x_tbd, w_ih, w_hh, b_ih, b_hh):
    _, B, _ = x_tbd.shape
    H = w_hh.shape[1]
    wih_t, whh_t, bias = w_ih.T, w_hh.T, b_ih + b_hh

    def step(carry, x_t):
        h, c = carry
        gates = x_t @ wih_t + h @ whh_t + bias
        i = jax.nn.sigmoid(gates[:, :H])
        f = jax.nn.sigmoid(gates[:, H:2 * H])
        g = jnp.tanh(gates[:, 2 * H:3 * H])
        o = jax.nn.sigmoid(gates[:, 3 * H:])
        c = f * c + i * g
        h = o * jnp.tanh(c)
        return (h, c), h

    init = (jnp.zeros((B, H), jnp.float32), jnp.zeros((B, H), jnp.float32))
    _, hs = jax.lax.scan(step, init, x_tbd)
    return hs


def bilstm_ref(x_btd, params):
    h = jnp.transpose(x_btd, (1, 0, 2))
    for (fwd, rev) in params:
        out_f = _ref_direction(h, *fwd)
        out_r = _ref_direction(h[::-1], *rev)[::-1]
        h = jnp.concatenate([out_f, out_r], axis=-1)
    return jnp.transpose(h, (1, 0, 2))


if __name__ == "__main__":
    key = jax.random.PRNGKey(0)

    def check(B, T, D, H, layers, max_t_chunk, key):
        kx, kp, key = jax.random.split(key, 3)
        x = jax.random.normal(kx, (B, T, D), jnp.float32)
        params = init_bilstm_params(kp, D, H, layers)
        ref = jax.block_until_ready(bilstm_ref(x, params))

        out_f32 = jax.block_until_ready(
            bilstm_forward(x, params, dtype=jnp.float32, max_t_chunk=max_t_chunk))
        assert out_f32.shape == (B, T, 2 * H), out_f32.shape
        np.testing.assert_allclose(np.asarray(out_f32), np.asarray(ref),
                                   rtol=1e-4, atol=1e-4)

        out_bf16 = jax.block_until_ready(
            bilstm_forward(x, params, dtype=jnp.bfloat16, max_t_chunk=max_t_chunk))
        assert out_bf16.shape == (B, T, 2 * H), out_bf16.shape
        max_err = float(np.max(np.abs(np.asarray(out_bf16) - np.asarray(ref))))
        assert max_err < 0.1, f"bf16 path max abs err too large: {max_err}"
        return key

    # Small shapes consistent with the module's forward: x is (B, T, input_dim).
    # Case 1: simple small case (single chunk, no time padding).
    key = check(B=2, T=8, D=16, H=32, layers=2, max_t_chunk=32, key=key)
    # Case 2: awkward T (multi-chunk + time padding/masking) and ragged batch
    # (exercises batch padding) — the situations the chunking fix targets.
    key = check(B=3, T=13, D=16, H=32, layers=2, max_t_chunk=8, key=key)

    print("KERNEL_OK")
</pallas_src>

<mosaic_0001>
module attributes {stable_mosaic.version = 11 : i64} {
  func.func @_bilstm_layer_kernel(%arg0: i32, %arg1: memref<8x8x16xf32, #tpu.memory_space<vmem>>, %arg2: memref<8x8x16xf32, #tpu.memory_space<vmem>>, %arg3: memref<16x512xf32, #tpu.memory_space<vmem>>, %arg4: memref<16x512xf32, #tpu.memory_space<vmem>>, %arg5: memref<1x512xf32, #tpu.memory_space<vmem>>, %arg6: memref<1x512xf32, #tpu.memory_space<vmem>>, %arg7: memref<128x512xf32, #tpu.memory_space<vmem>>, %arg8: memref<128x512xf32, #tpu.memory_space<vmem>>, %arg9: memref<8x8x128xf32, #tpu.memory_space<vmem>>, %arg10: memref<8x8x128xf32, #tpu.memory_space<vmem>>, %arg11: memref<2x8x8x512xf32, #tpu.memory_space<vmem>>, %arg12: memref<16x128xf32, #tpu.memory_space<vmem>>, %arg13: memref<16x128xf32, #tpu.memory_space<vmem>>) attributes {dimension_semantics = [#tpu.dimension_semantics<arbitrary>], iteration_bounds = array<i64: 1>, scalar_prefetch = 0 : i64, scratch_operands = 3 : i64, tpu.core_type = #tpu.core_type<tc>, window_params = [{transform_indices = @transform_0, window_bounds = array<i64: 8, 8, 16>}, {transform_indices = @transform_1, window_bounds = array<i64: 8, 8, 16>}, {pipeline_mode = #tpu.pipeline_mode<synchronous>, transform_indices = @transform_2, window_bounds = array<i64: 16, 512>}, {pipeline_mode = #tpu.pipeline_mode<synchronous>, transform_indices = @transform_3, window_bounds = array<i64: 16, 512>}, {pipeline_mode = #tpu.pipeline_mode<synchronous>, transform_indices = @transform_4, window_bounds = array<i64: 1, 512>}, {pipeline_mode = #tpu.pipeline_mode<synchronous>, transform_indices = @transform_5, window_bounds = array<i64: 1, 512>}, {pipeline_mode = #tpu.pipeline_mode<synchronous>, transform_indices = @transform_6, window_bounds = array<i64: 128, 512>}, {pipeline_mode = #tpu.pipeline_mode<synchronous>, transform_indices = @transform_7, window_bounds = array<i64: 128, 512>}, {transform_indices = @transform_8, window_bounds = array<i64: 8, 8, 128>}, {transform_indices = @transform_9, window_bounds = array<i64: 8, 8, 128>}]} {
    %c0_i32 = arith.constant 0 : i32
    %0 = arith.cmpi eq, %arg0, %c0_i32 : i32
    %1 = arith.extui %0 : i1 to i32
    %c0_i32_0 = arith.constant 0 : i32
    %2 = arith.cmpi ne, %1, %c0_i32_0 : i32
    scf.if %2 {
      %cst_163 = arith.constant 0.000000e+00 : f32
      %423 = vector.broadcast %cst_163 : f32 to vector<16x128xf32>
      %c0_164 = arith.constant 0 : index
      %c0_165 = arith.constant 0 : index
      %424 = vector.load %arg12[%c0_164, %c0_165] : memref<16x128xf32, #tpu.memory_space<vmem>>, vector<16x128xf32>
      tpu.vector_store %arg12[%c0_164, %c0_165], %423 {strides = array<i32>} : memref<16x128xf32, #tpu.memory_space<vmem>>, vector<16x128xf32>,
      %cst_166 = arith.constant 0.000000e+00 : f32
      %425 = vector.broadcast %cst_166 : f32 to vector<16x128xf32>
      %c0_167 = arith.constant 0 : index
      %c0_168 = arith.constant 0 : index
      %426 = vector.load %arg13[%c0_167, %c0_168] : memref<16x128xf32, #tpu.memory_space<vmem>>, vector<16x128xf32>
      tpu.vector_store %arg13[%c0_167, %c0_168], %425 {strides = array<i32>} : memref<16x128xf32, #tpu.memory_space<vmem>>, vector<16x128xf32>,
    } else {
    }
    %c0 = arith.constant 0 : index
    %c0_1 = arith.constant 0 : index
    %c0_2 = arith.constant 0 : index
    %3 = vector.load %arg1[%c0, %c0_1, %c0_2] : memref<8x8x16xf32, #tpu.memory_space<vmem>>, vector<8x8x16xf32>
    %4 = vector.shape_cast %3 : vector<8x8x16xf32> to vector<64x16xf32>
    %c0_3 = arith.constant 0 : index
    %c0_4 = arith.constant 0 : index
    %5 = vector.load %arg3[%c0_3, %c0_4] : memref<16x512xf32, #tpu.memory_space<vmem>>, vector<16x512xf32>
    %cst = arith.constant dense<0.000000e+00> : vector<64x512xf32>
    %6 = tpu.matmul %4, %5, %cst {dimension_numbers = #tpu.dot_dimension_numbers<[1], [0], [0], [1], [0, 0, 1, 1], [], []>} : vector<64x16xf32>, vector<16x512xf32>, vector<64x512xf32> -> vector<64x512xf32>
    %c0_5 = arith.constant 0 : index
    %c0_6 = arith.constant 0 : index
    %7 = vector.load %arg5[%c0_5, %c0_6] : memref<1x512xf32, #tpu.memory_space<vmem>>, vector<1x512xf32>
    %8 = vector.broadcast %7 : vector<1x512xf32> to vector<64x512xf32>
    %9 = arith.addf %6, %8 : vector<64x512xf32>
    %10 = vector.shape_cast %9 : vector<64x512xf32> to vector<8x8x512xf32>
    %c0_7 = arith.constant 0 : index
    %c0_8 = arith.constant 0 : index
    %c0_9 = arith.constant 0 : index
    %c0_10 = arith.constant 0 : index
    %11 = vector.load %arg11[%c0_7, %c0_8, %c0_9, %c0_10] : memref<2x8x8x512xf32, #tpu.memory_space<vmem>>, vector<1x8x8x512xf32>
    %12 = vector.shape_cast %11 : vector<1x8x8x512xf32> to vector<8x8x512xf32>
    %13 = vector.shape_cast %10 : vector<8x8x512xf32> to vector<1x8x8x512xf32>
    tpu.vector_store %arg11[%c0_7, %c0_8, %c0_9, %c0_10], %13 {strides = array<i32>} : memref<2x8x8x512xf32, #tpu.memory_space<vmem>>, vector<1x8x8x512xf32>,
    %c0_11 = arith.constant 0 : index
    %c0_12 = arith.constant 0 : index
    %c0_13 = arith.constant 0 : index
    %14 = vector.load %arg2[%c0_11, %c0_12, %c0_13] : memref<8x8x16xf32, #tpu.memory_space<vmem>>, vector<8x8x16xf32>
    %15 = vector.shape_cast %14 : vector<8x8x16xf32> to vector<64x16xf32>
    %c0_14 = arith.constant 0 : index
    %c0_15 = arith.constant 0 : index
    %16 = vector.load %arg4[%c0_14, %c0_15] : memref<16x512xf32, #tpu.memory_space<vmem>>, vector<16x512xf32>
    %cst_16 = arith.constant dense<0.000000e+00> : vector<64x512xf32>
    %17 = tpu.matmul %15, %16, %cst_16 {dimension_numbers = #tpu.dot_dimension_numbers<[1], [0], [0], [1], [0, 0, 1, 1], [], []>} : vector<64x16xf32>, vector<16x512xf32>, vector<64x512xf32> -> vector<64x512xf32>
    %c0_17 = arith.constant 0 : index
    %c0_18 = arith.constant 0 : index
    %18 = vector.load %arg6[%c0_17, %c0_18] : memref<1x512xf32, #tpu.memory_space<vmem>>, vector<1x512xf32>
    %19 = vector.broadcast %18 : vector<1x512xf32> to vector<64x512xf32>
    %20 = arith.addf %17, %19 : vector<64x512xf32>
    %21 = vector.shape_cast %20 : vector<64x512xf32> to vector<8x8x512xf32>
    %c1 = arith.constant 1 : index
    %c0_19 = arith.constant 0 : index
    %c0_20 = arith.constant 0 : index
    %c0_21 = arith.constant 0 : index
    %22 = vector.load %arg11[%c1, %c0_19, %c0_20, %c0_21] : memref<2x8x8x512xf32, #tpu.memory_space<vmem>>, vector<1x8x8x512xf32>
    %23 = vector.shape_cast %22 : vector<1x8x8x512xf32> to vector<8x8x512xf32>
    %24 = vector.shape_cast %21 : vector<8x8x512xf32> to vector<1x8x8x512xf32>
    tpu.vector_store %arg11[%c1, %c0_19, %c0_20, %c0_21], %24 {strides = array<i32>} : memref<2x8x8x512xf32, #tpu.memory_space<vmem>>, vector<1x8x8x512xf32>,
    %c0_22 = arith.constant 0 : index
    %c0_23 = arith.constant 0 : index
    %25 = vector.load %arg7[%c0_22, %c0_23] : memref<128x512xf32, #tpu.memory_space<vmem>>, vector<128x512xf32>
    %c0_24 = arith.constant 0 : index
    %c0_25 = arith.constant 0 : index
    %26 = vector.load %arg8[%c0_24, %c0_25] : memref<128x512xf32, #tpu.memory_space<vmem>>, vector<128x512xf32>
    %c0_26 = arith.constant 0 : index
    %c0_27 = arith.constant 0 : index
    %27 = vector.load %arg12[%c0_26, %c0_27] : memref<16x128xf32, #tpu.memory_space<vmem>>, vector<16x128xf32>
    %c0_28 = arith.constant 0 : index
    %c0_29 = arith.constant 0 : index
    %28 = vector.load %arg13[%c0_28, %c0_29] : memref<16x128xf32, #tpu.memory_space<vmem>>, vector<16x128xf32>
    %c0_i32_30 = arith.constant 0 : i32
    %c7_i32 = arith.constant 7 : i32
    %29 = arith.subi %c7_i32, %c0_i32_30 : i32
    %30 = vector.extract_strided_slice %27 {offsets = [0, 0], sizes = [8, 128], strides = [1, 1]} : vector<16x128xf32> to vector<8x128xf32>
    %cst_31 = arith.constant dense<0.000000e+00> : vector<8x512xf32>
    %31 = tpu.matmul %30, %25, %cst_31 {dimension_numbers = #tpu.dot_dimension_numbers<[1], [0], [0], [1], [0, 0, 1, 1], [], []>} : vector<8x128xf32>, vector<128x512xf32>, vector<8x512xf32> -> vector<8x512xf32>
    %32 = vector.extract_strided_slice %27 {offsets = [8, 0], sizes = [8, 128], strides = [1, 1]} : vector<16x128xf32> to vector<8x128xf32>
    %cst_32 = arith.constant dense<0.000000e+00> : vector<8x512xf32>
    %33 = tpu.matmul %32, %26, %cst_32 {dimension_numbers = #tpu.dot_dimension_numbers<[1], [0], [0], [1], [0, 0, 1, 1], [], []>} : vector<8x128xf32>, vector<128x512xf32>, vector<8x512xf32> -> vector<8x512xf32>
    %c0_33 = arith.constant 0 : index
    %34 = arith.index_cast %c0_i32_30 : i32 to index
    %c0_34 = arith.constant 0 : index
    %c0_35 = arith.constant 0 : index
    %35 = vector.load %arg11[%c0_33, %34, %c0_34, %c0_35] : memref<2x8x8x512xf32, #tpu.memory_space<vmem>>, vector<1x1x8x512xf32>
    %36 = vector.shape_cast %35 : vector<1x1x8x512xf32> to vector<8x512xf32>
    %37 = arith.addf %36, %31 : vector<8x512xf32>
    %c1_36 = arith.constant 1 : index
    %38 = arith.index_cast %29 : i32 to index
    %c0_37 = arith.constant 0 : index
    %c0_38 = arith.constant 0 : index
    %39 = vector.load %arg11[%c1_36, %38, %c0_37, %c0_38] : memref<2x8x8x512xf32, #tpu.memory_space<vmem>>, vector<1x1x8x512xf32>
    %40 = vector.shape_cast %39 : vector<1x1x8x512xf32> to vector<8x512xf32>
    %41 = arith.addf %40, %33 : vector<8x512xf32>
    %42 = tpu.concatenate %37, %41 in 0 : vector<8x512xf32>, vector<8x512xf32> -> vector<16x512xf32>
    %43 = vector.extract_strided_slice %42 {offsets = [0, 0], sizes = [16, 128], strides = [1, 1]} : vector<16x512xf32> to vector<16x128xf32>
    %44 = arith.negf %43 : vector<16x128xf32>
    %45 = math.exp %44 : vector<16x128xf32>
    %cst_39 = arith.constant 1.000000e+00 : f32
    %46 = vector.broadcast %cst_39 : f32 to vector<16x128xf32>
    %47 = arith.addf %46, %45 : vector<16x128xf32>
    %48 = arith.divf %46, %47 : vector<16x128xf32>
    %49 = vector.extract_strided_slice %42 {offsets = [0, 128], sizes = [16, 128], strides = [1, 1]} : vector<16x512xf32> to vector<16x128xf32>
    %50 = arith.negf %49 : vector<16x128xf32>
    %51 = math.exp %50 : vector<16x128xf32>
    %cst_40 = arith.constant 1.000000e+00 : f32
    %52 = vector.broadcast %cst_40 : f32 to vector<16x128xf32>
    %53 = arith.addf %52, %51 : vector<16x128xf32>
    %54 = arith.divf %52, %53 : vector<16x128xf32>
    %55 = vector.extract_strided_slice %42 {offsets = [0, 256], sizes = [16, 128], strides = [1, 1]} : vector<16x512xf32> to vector<16x128xf32>
    %56 = math.tanh %55 : vector<16x128xf32>
    %57 = vector.extract_strided_slice %42 {offsets = [0, 384], sizes = [16, 128], strides = [1, 1]} : vector<16x512xf32> to vector<16x128xf32>
    %58 = arith.negf %57 : vector<16x128xf32>
    %59 = math.exp %58 : vector<16x128xf32>
    %cst_41 = arith.constant 1.000000e+00 : f32
    %60 = vector.broadcast %cst_41 : f32 to vector<16x128xf32>
    %61 = arith.addf %60, %59 : vector<16x128xf32>
    %62 = arith.divf %60, %61 : vector<16x128xf32>
    %63 = arith.mulf %54, %28 : vector<16x128xf32>
    %64 = arith.mulf %48, %56 : vector<16x128xf32>
    %65 = arith.addf %63, %64 : vector<16x128xf32>
    %66 = math.tanh %65 : vector<16x128xf32>
    %67 = arith.mulf %62, %66 : vector<16x128xf32>
    %68 = vector.extract_strided_slice %67 {offsets = [0, 0], sizes = [8, 128], strides = [1, 1]} : vector<16x128xf32> to vector<8x128xf32>
    %69 = arith.index_cast %c0_i32_30 : i32 to index
    %c0_42 = arith.constant 0 : index
    %c0_43 = arith.constant 0 : index
    %70 = vector.load %arg9[%69, %c0_42, %c0_43] : memref<8x8x128xf32, #tpu.memory_space<vmem>>, vector<1x8x128xf32>
    %71 = vector.shape_cast %70 : vector<1x8x128xf32> to vector<8x128xf32>
    %72 = vector.shape_cast %68 : vector<8x128xf32> to vector<1x8x128xf32>
    tpu.vector_store %arg9[%69, %c0_42, %c0_43], %72 {strides = array<i32>} : memref<8x8x128xf32, #tpu.memory_space<vmem>>, vector<1x8x128xf32>,
    %73 = vector.extract_strided_slice %67 {offsets = [8, 0], sizes = [8, 128], strides = [1, 1]} : vector<16x128xf32> to vector<8x128xf32>
    %74 = arith.index_cast %29 : i32 to index
    %c0_44 = arith.constant 0 : index
    %c0_45 = arith.constant 0 : index
    %75 = vector.load %arg10[%74, %c0_44, %c0_45] : memref<8x8x128xf32, #tpu.memory_space<vmem>>, vector<1x8x128xf32>
    %76 = vector.shape_cast %75 : vector<1x8x128xf32> to vector<8x128xf32>
    %77 = vector.shape_cast %73 : vector<8x128xf32> to vector<1x8x128xf32>
    tpu.vector_store %arg10[%74, %c0_44, %c0_45], %77 {strides = array<i32>} : memref<8x8x128xf32, #tpu.memory_space<vmem>>, vector<1x8x128xf32>,
    %c1_i32 = arith.constant 1 : i32
    %c7_i32_46 = arith.constant 7 : i32
    %78 = arith.subi %c7_i32_46, %c1_i32 : i32
    %79 = vector.extract_strided_slice %67 {offsets = [0, 0], sizes = [8, 128], strides = [1, 1]} : vector<16x128xf32> to vector<8x128xf32>
    %cst_47 = arith.constant dense<0.000000e+00> : vector<8x512xf32>
    %80 = tpu.matmul %79, %25, %cst_47 {dimension_numbers = #tpu.dot_dimension_numbers<[1], [0], [0], [1], [0, 0, 1, 1], [], []>} : vector<8x128xf32>, vector<128x512xf32>, vector<8x512xf32> -> vector<8x512xf32>
    %81 = vector.extract_strided_slice %67 {offsets = [8, 0], sizes = [8, 128], strides = [1, 1]} : vector<16x128xf32> to vector<8x128xf32>
    %cst_48 = arith.constant dense<0.000000e+00> : vector<8x512xf32>
    %82 = tpu.matmul %81, %26, %cst_48 {dimension_numbers = #tpu.dot_dimension_numbers<[1], [0], [0], [1], [0, 0, 1, 1], [], []>} : vector<8x128xf32>, vector<128x512xf32>, vector<8x512xf32> -> vector<8x512xf32>
    %c0_49 = arith.constant 0 : index
    %83 = arith.index_cast %c1_i32 : i32 to index
    %c0_50 = arith.constant 0 : index
    %c0_51 = arith.constant 0 : index
    %84 = vector.load %arg11[%c0_49, %83, %c0_50, %c0_51] : memref<2x8x8x512xf32, #tpu.memory_space<vmem>>, vector<1x1x8x512xf32>
    %85 = vector.shape_cast %84 : vector<1x1x8x512xf32> to vector<8x512xf32>
    %86 = arith.addf %85, %80 : vector<8x512xf32>
    %c1_52 = arith.constant 1 : index
    %87 = arith.index_cast %78 : i32 to index
    %c0_53 = arith.constant 0 : index
    %c0_54 = arith.constant 0 : index
    %88 = vector.load %arg11[%c1_52, %87, %c0_53, %c0_54] : memref<2x8x8x512xf32, #tpu.memory_space<vmem>>, vector<1x1x8x512xf32>
    %89 = vector.shape_cast %88 : vector<1x1x8x512xf32> to vector<8x512xf32>
    %90 = arith.addf %89, %82 : vector<8x512xf32>
    %91 = tpu.concatenate %86, %90 in 0 : vector<8x512xf32>, vector<8x512xf32> -> vector<16x512xf32>
    %92 = vector.extract_strided_slice %91 {offsets = [0, 0], sizes = [16, 128], strides = [1, 1]} : vector<16x512xf32> to vector<16x128xf32>
    %93 = arith.negf %92 : vector<16x128xf32>
    %94 = math.exp %93 : vector<16x128xf32>
    %cst_55 = arith.constant 1.000000e+00 : f32
    %95 = vector.broadcast %cst_55 : f32 to vector<16x128xf32>
    %96 = arith.addf %95, %94 : vector<16x128xf32>
    %97 = arith.divf %95, %96 : vector<16x128xf32>
    %98 = vector.extract_strided_slice %91 {offsets = [0, 128], sizes = [16, 128], strides = [1, 1]} : vector<16x512xf32> to vector<16x128xf32>
    %99 = arith.negf %98 : vector<16x128xf32>
    %100 = math.exp %99 : vector<16x128xf32>
    %cst_56 = arith.constant 1.000000e+00 : f32
    %101 = vector.broadcast %cst_56 : f32 to vector<16x128xf32>
    %102 = arith.addf %101, %100 : vector<16x128xf32>
    %103 = arith.divf %101, %102 : vector<16x128xf32>
    %104 = vector.extract_strided_slice %91 {offsets = [0, 256], sizes = [16, 128], strides = [1, 1]} : vector<16x512xf32> to vector<16x128xf32>
    %105 = math.tanh %104 : vector<16x128xf32>
    %106 = vector.extract_strided_slice %91 {offsets = [0, 384], sizes = [16, 128], strides = [1, 1]} : vector<16x512xf32> to vector<16x128xf32>
    %107 = arith.negf %106 : vector<16x128xf32>
    %108 = math.exp %107 : vector<16x128xf32>
    %cst_57 = arith.constant 1.000000e+00 : f32
    %109 = vector.broadcast %cst_57 : f32 to vector<16x128xf32>
    %110 = arith.addf %109, %108 : vector<16x128xf32>
    %111 = arith.divf %109, %110 : vector<16x128xf32>
    %112 = arith.mulf %103, %65 : vector<16x128xf32>
    %113 = arith.mulf %97, %105 : vector<16x128xf32>
    %114 = arith.addf %112, %113 : vector<16x128xf32>
    %115 = math.tanh %114 : vector<16x128xf32>
    %116 = arith.mulf %111, %115 : vector<16x128xf32>
    %117 = vector.extract_strided_slice %116 {offsets = [0, 0], sizes = [8, 128], strides = [1, 1]} : vector<16x128xf32> to vector<8x128xf32>
    %118 = arith.index_cast %c1_i32 : i32 to index
    %c0_58 = arith.constant 0 : index
    %c0_59 = arith.constant 0 : index
    %119 = vector.load %arg9[%118, %c0_58, %c0_59] : memref<8x8x128xf32, #tpu.memory_space<vmem>>, vector<1x8x128xf32>
    %120 = vector.shape_cast %119 : vector<1x8x128xf32> to vector<8x128xf32>
    %121 = vector.shape_cast %117 : vector<8x128xf32> to vector<1x8x128xf32>
    tpu.vector_store %arg9[%118, %c0_58, %c0_59], %121 {strides = array<i32>} : memref<8x8x128xf32, #tpu.memory_space<vmem>>, vector<1x8x128xf32>,
    %122 = vector.extract_strided_slice %116 {offsets = [8, 0], sizes = [8, 128], strides = [1, 1]} : vector<16x128xf32> to vector<8x128xf32>
    %123 = arith.index_cast %78 : i32 to index
    %c0_60 = arith.constant 0 : index
    %c0_61 = arith.constant 0 : index
    %124 = vector.load %arg10[%123, %c0_60, %c0_61] : memref<8x8x128xf32, #tpu.memory_space<vmem>>, vector<1x8x128xf32>
    %125 = vector.shape_cast %124 : vector<1x8x128xf32> to vector<8x128xf32>
    %126 = vector.shape_cast %122 : vector<8x128xf32> to vector<1x8x128xf32>
    tpu.vector_store %arg10[%123, %c0_60, %c0_61], %126 {strides = array<i32>} : memref<8x8x128xf32, #tpu.memory_space<vmem>>, vector<1x8x128xf32>,
    %c2_i32 = arith.constant 2 : i32
    %c7_i32_62 = arith.constant 7 : i32
    %127 = arith.subi %c7_i32_62, %c2_i32 : i32
    %128 = vector.extract_strided_slice %116 {offsets = [0, 0], sizes = [8, 128], strides = [1, 1]} : vector<16x128xf32> to vector<8x128xf32>
    %cst_63 = arith.constant dense<0.000000e+00> : vector<8x512xf32>
    %129 = tpu.matmul %128, %25, %cst_63 {dimension_numbers = #tpu.dot_dimension_numbers<[1], [0], [0], [1], [0, 0, 1, 1], [], []>} : vector<8x128xf32>, vector<128x512xf32>, vector<8x512xf32> -> vector<8x512xf32>
    %130 = vector.extract_strided_slice %116 {offsets = [8, 0], sizes = [8, 128], strides = [1, 1]} : vector<16x128xf32> to vector<8x128xf32>
    %cst_64 = arith.constant dense<0.000000e+00> : vector<8x512xf32>
    %131 = tpu.matmul %130, %26, %cst_64 {dimension_numbers = #tpu.dot_dimension_numbers<[1], [0], [0], [1], [0, 0, 1, 1], [], []>} : vector<8x128xf32>, vector<128x512xf32>, vector<8x512xf32> -> vector<8x512xf32>
    %c0_65 = arith.constant 0 : index
    %132 = arith.index_cast %c2_i32 : i32 to index
    %c0_66 = arith.constant 0 : index
    %c0_67 = arith.constant 0 : index
    %133 = vector.load %arg11[%c0_65, %132, %c0_66, %c0_67] : memref<2x8x8x512xf32, #tpu.memory_space<vmem>>, vector<1x1x8x512xf32>
    %134 = vector.shape_cast %133 : vector<1x1x8x512xf32> to vector<8x512xf32>
    %135 = arith.addf %134, %129 : vector<8x512xf32>
    %c1_68 = arith.constant 1 : index
    %136 = arith.index_cast %127 : i32 to index
    %c0_69 = arith.constant 0 : index
    %c0_70 = arith.constant 0 : index
    %137 = vector.load %arg11[%c1_68, %136, %c0_69, %c0_70] : memref<2x8x8x512xf32, #tpu.memory_space<vmem>>, vector<1x1x8x512xf32>
    %138 = vector.shape_cast %137 : vector<1x1x8x512xf32> to vector<8x512xf32>
    %139 = arith.addf %138, %131 : vector<8x512xf32>
    %140 = tpu.concatenate %135, %139 in 0 : vector<8x512xf32>, vector<8x512xf32> -> vector<16x512xf32>
    %141 = vector.extract_strided_slice %140 {offsets = [0, 0], sizes = [16, 128], strides = [1, 1]} : vector<16x512xf32> to vector<16x128xf32>
    %142 = arith.negf %141 : vector<16x128xf32>
    %143 = math.exp %142 : vector<16x128xf32>
    %cst_71 = arith.constant 1.000000e+00 : f32
    %144 = vector.broadcast %cst_71 : f32 to vector<16x128xf32>
    %145 = arith.addf %144, %143 : vector<16x128xf32>
    %146 = arith.divf %144, %145 : vector<16x128xf32>
    %147 = vector.extract_strided_slice %140 {offsets = [0, 128], sizes = [16, 128], strides = [1, 1]} : vector<16x512xf32> to vector<16x128xf32>
    %148 = arith.negf %147 : vector<16x128xf32>
    %149 = math.exp %148 : vector<16x128xf32>
    %cst_72 = arith.constant 1.000000e+00 : f32
    %150 = vector.broadcast %cst_72 : f32 to vector<16x128xf32>
    %151 = arith.addf %150, %149 : vector<16x128xf32>
    %152 = arith.divf %150, %151 : vector<16x128xf32>
    %153 = vector.extract_strided_slice %140 {offsets = [0, 256], sizes = [16, 128], strides = [1, 1]} : vector<16x512xf32> to vector<16x128xf32>
    %154 = math.tanh %153 : vector<16x128xf32>
    %155 = vector.extract_strided_slice %140 {offsets = [0, 384], sizes = [16, 128], strides = [1, 1]} : vector<16x512xf32> to vector<16x128xf32>
    %156 = arith.negf %155 : vector<16x128xf32>
    %157 = math.exp %156 : vector<16x128xf32>
    %cst_73 = arith.constant 1.000000e+00 : f32
    %158 = vector.broadcast %cst_73 : f32 to vector<16x128xf32>
    %159 = arith.addf %158, %157 : vector<16x128xf32>
    %160 = arith.divf %158, %159 : vector<16x128xf32>
    %161 = arith.mulf %152, %114 : vector<16x128xf32>
    %162 = arith.mulf %146, %154 : vector<16x128xf32>
    %163 = arith.addf %161, %162 : vector<16x128xf32>
    %164 = math.tanh %163 : vector<16x128xf32>
    %165 = arith.mulf %160, %164 : vector<16x128xf32>
    %166 = vector.extract_strided_slice %165 {offsets = [0, 0], sizes = [8, 128], strides = [1, 1]} : vector<16x128xf32> to vector<8x128xf32>
    %167 = arith.index_cast %c2_i32 : i32 to index
    %c0_74 = arith.constant 0 : index
    %c0_75 = arith.constant 0 : index
    %168 = vector.load %arg9[%167, %c0_74, %c0_75] : memref<8x8x128xf32, #tpu.memory_space<vmem>>, vector<1x8x128xf32>
    %169 = vector.shape_cast %168 : vector<1x8x128xf32> to vector<8x128xf32>
    %170 = vector.shape_cast %166 : vector<8x128xf32> to vector<1x8x128xf32>
    tpu.vector_store %arg9[%167, %c0_74, %c0_75], %170 {strides = array<i32>} : memref<8x8x128xf32, #tpu.memory_space<vmem>>, vector<1x8x128xf32>,
    %171 = vector.extract_strided_slice %165 {offsets = [8, 0], sizes = [8, 128], strides = [1, 1]} : vector<16x128xf32> to vector<8x128xf32>
    %172 = arith.index_cast %127 : i32 to index
    %c0_76 = arith.constant 0 : index
    %c0_77 = arith.constant 0 : index
    %173 = vector.load %arg10[%172, %c0_76, %c0_77] : memref<8x8x128xf32, #tpu.memory_space<vmem>>, vector<1x8x128xf32>
    %174 = vector.shape_cast %173 : vector<1x8x128xf32> to vector<8x128xf32>
    %175 = vector.shape_cast %171 : vector<8x128xf32> to vector<1x8x128xf32>
    tpu.vector_store %arg10[%172, %c0_76, %c0_77], %175 {strides = array<i32>} : memref<8x8x128xf32, #tpu.memory_space<vmem>>, vector<1x8x128xf32>,
    %c3_i32 = arith.constant 3 : i32
    %c7_i32_78 = arith.constant 7 : i32
    %176 = arith.subi %c7_i32_78, %c3_i32 : i32
    %177 = vector.extract_strided_slice %165 {offsets = [0, 0], sizes = [8, 128], strides = [1, 1]} : vector<16x128xf32> to vector<8x128xf32>
    %cst_79 = arith.constant dense<0.000000e+00> : vector<8x512xf32>
    %178 = tpu.matmul %177, %25, %cst_79 {dimension_numbers = #tpu.dot_dimension_numbers<[1], [0], [0], [1], [0, 0, 1, 1], [], []>} : vector<8x128xf32>, vector<128x512xf32>, vector<8x512xf32> -> vector<8x512xf32>
    %179 = vector.extract_strided_slice %165 {offsets = [8, 0], sizes = [8, 128], strides = [1, 1]} : vector<16x128xf32> to vector<8x128xf32>
    %cst_80 = arith.constant dense<0.000000e+00> : vector<8x512xf32>
    %180 = tpu.matmul %179, %26, %cst_80 {dimension_numbers = #tpu.dot_dimension_numbers<[1], [0], [0], [1], [0, 0, 1, 1], [], []>} : vector<8x128xf32>, vector<128x512xf32>, vector<8x512xf32> -> vector<8x512xf32>
    %c0_81 = arith.constant 0 : index
    %181 = arith.index_cast %c3_i32 : i32 to index
    %c0_82 = arith.constant 0 : index
    %c0_83 = arith.constant 0 : index
    %182 = vector.load %arg11[%c0_81, %181, %c0_82, %c0_83] : memref<2x8x8x512xf32, #tpu.memory_space<vmem>>, vector<1x1x8x512xf32>
    %183 = vector.shape_cast %182 : vector<1x1x8x512xf32> to vector<8x512xf32>
    %184 = arith.addf %183, %178 : vector<8x512xf32>
    %c1_84 = arith.constant 1 : index
    %185 = arith.index_cast %176 : i32 to index
    %c0_85 = arith.constant 0 : index
    %c0_86 = arith.constant 0 : index
    %186 = vector.load %arg11[%c1_84, %185, %c0_85, %c0_86] : memref<2x8x8x512xf32, #tpu.memory_space<vmem>>, vector<1x1x8x512xf32>
    %187 = vector.shape_cast %186 : vector<1x1x8x512xf32> to vector<8x512xf32>
    %188 = arith.addf %187, %180 : vector<8x512xf32>
    %189 = tpu.concatenate %184, %188 in 0 : vector<8x512xf32>, vector<8x512xf32> -> vector<16x512xf32>
    %190 = vector.extract_strided_slice %189 {offsets = [0, 0], sizes = [16, 128], strides = [1, 1]} : vector<16x512xf32> to vector<16x128xf32>
    %191 = arith.negf %190 : vector<16x128xf32>
    %192 = math.exp %191 : vector<16x128xf32>
    %cst_87 = arith.constant 1.000000e+00 : f32
    %193 = vector.broadcast %cst_87 : f32 to vector<16x128xf32>
    %194 = arith.addf %193, %192 : vector<16x128xf32>
    %195 = arith.divf %193, %194 : vector<16x128xf32>
    %196 = vector.extract_strided_slice %189 {offsets = [0, 128], sizes = [16, 128], strides = [1, 1]} : vector<16x512xf32> to vector<16x128xf32>
    %197 = arith.negf %196 : vector<16x128xf32>
    %198 = math.exp %197 : vector<16x128xf32>
    %cst_88 = arith.constant 1.000000e+00 : f32
    %199 = vector.broadcast %cst_88 : f32 to vector<16x128xf32>
    %200 = arith.addf %199, %198 : vector<16x128xf32>
    %201 = arith.divf %199, %200 : vector<16x128xf32>
    %202 = vector.extract_strided_slice %189 {offsets = [0, 256], sizes = [16, 128], strides = [1, 1]} : vector<16x512xf32> to vector<16x128xf32>
    %203 = math.tanh %202 : vector<16x128xf32>
    %204 = vector.extract_strided_slice %189 {offsets = [0, 384], sizes = [16, 128], strides = [1, 1]} : vector<16x512xf32> to vector<16x128xf32>
    %205 = arith.negf %204 : vector<16x128xf32>
    %206 = math.exp %205 : vector<16x128xf32>
    %cst_89 = arith.constant 1.000000e+00 : f32
    %207 = vector.broadcast %cst_89 : f32 to vector<16x128xf32>
    %208 = arith.addf %207, %206 : vector<16x128xf32>
    %209 = arith.divf %207, %208 : vector<16x128xf32>
    %210 = arith.mulf %201, %163 : vector<16x128xf32>
    %211 = arith.mulf %195, %203 : vector<16x128xf32>
    %212 = arith.addf %210, %211 : vector<16x128xf32>
    %213 = math.tanh %212 : vector<16x128xf32>
    %214 = arith.mulf %209, %213 : vector<16x128xf32>
    %215 = vector.extract_strided_slice %214 {offsets = [0, 0], sizes = [8, 128], strides = [1, 1]} : vector<16x128xf32> to vector<8x128xf32>
    %216 = arith.index_cast %c3_i32 : i32 to index
    %c0_90 = arith.constant 0 : index
    %c0_91 = arith.constant 0 : index
    %217 = vector.load %arg9[%216, %c0_90, %c0_91] : memref<8x8x128xf32, #tpu.memory_space<vmem>>, vector<1x8x128xf32>
    %218 = vector.shape_cast %217 : vector<1x8x128xf32> to vector<8x128xf32>
    %219 = vector.shape_cast %215 : vector<8x128xf32> to vector<1x8x128xf32>
    tpu.vector_store %arg9[%216, %c0_90, %c0_91], %219 {strides = array<i32>} : memref<8x8x128xf32, #tpu.memory_space<vmem>>, vector<1x8x128xf32>,
    %220 = vector.extract_strided_slice %214 {offsets = [8, 0], sizes = [8, 128], strides = [1, 1]} : vector<16x128xf32> to vector<8x128xf32>
    %221 = arith.index_cast %176 : i32 to index
    %c0_92 = arith.constant 0 : index
    %c0_93 = arith.constant 0 : index
    %222 = vector.load %arg10[%221, %c0_92, %c0_93] : memref<8x8x128xf32, #tpu.memory_space<vmem>>, vector<1x8x128xf32>
    %223 = vector.shape_cast %222 : vector<1x8x128xf32> to vector<8x128xf32>
    %224 = vector.shape_cast %220 : vector<8x128xf32> to vector<1x8x128xf32>
    tpu.vector_store %arg10[%221, %c0_92, %c0_93], %224 {strides = array<i32>} : memref<8x8x128xf32, #tpu.memory_space<vmem>>, vector<1x8x128xf32>,
    %c4_i32 = arith.constant 4 : i32
    %c7_i32_94 = arith.constant 7 : i32
    %225 = arith.subi %c7_i32_94, %c4_i32 : i32
    %226 = vector.extract_strided_slice %214 {offsets = [0, 0], sizes = [8, 128], strides = [1, 1]} : vector<16x128xf32> to vector<8x128xf32>
    %cst_95 = arith.constant dense<0.000000e+00> : vector<8x512xf32>
    %227 = tpu.matmul %226, %25, %cst_95 {dimension_numbers = #tpu.dot_dimension_numbers<[1], [0], [0], [1], [0, 0, 1, 1], [], []>} : vector<8x128xf32>, vector<128x512xf32>, vector<8x512xf32> -> vector<8x512xf32>
    %228 = vector.extract_strided_slice %214 {offsets = [8, 0], sizes = [8, 128], strides = [1, 1]} : vector<16x128xf32> to vector<8x128xf32>
    %cst_96 = arith.constant dense<0.000000e+00> : vector<8x512xf32>
    %229 = tpu.matmul %228, %26, %cst_96 {dimension_numbers = #tpu.dot_dimension_numbers<[1], [0], [0], [1], [0, 0, 1, 1], [], []>} : vector<8x128xf32>, vector<128x512xf32>, vector<8x512xf32> -> vector<8x512xf32>
    %c0_97 = arith.constant 0 : index
    %230 = arith.index_cast %c4_i32 : i32 to index
    %c0_98 = arith.constant 0 : index
    %c0_99 = arith.constant 0 : index
    %231 = vector.load %arg11[%c0_97, %230, %c0_98, %c0_99] : memref<2x8x8x512xf32, #tpu.memory_space<vmem>>, vector<1x1x8x512xf32>
    %232 = vector.shape_cast %231 : vector<1x1x8x512xf32> to vector<8x512xf32>
    %233 = arith.addf %232, %227 : vector<8x512xf32>
    %c1_100 = arith.constant 1 : index
    %234 = arith.index_cast %225 : i32 to index
    %c0_101 = arith.constant 0 : index
    %c0_102 = arith.constant 0 : index
    %235 = vector.load %arg11[%c1_100, %234, %c0_101, %c0_102] : memref<2x8x8x512xf32, #tpu.memory_space<vmem>>, vector<1x1x8x512xf32>
    %236 = vector.shape_cast %235 : vector<1x1x8x512xf32> to vector<8x512xf32>
    %237 = arith.addf %236, %229 : vector<8x512xf32>
    %238 = tpu.concatenate %233, %237 in 0 : vector<8x512xf32>, vector<8x512xf32> -> vector<16x512xf32>
    %239 = vector.extract_strided_slice %238 {offsets = [0, 0], sizes = [16, 128], strides = [1, 1]} : vector<16x512xf32> to vector<16x128xf32>
    %240 = arith.negf %239 : vector<16x128xf32>
    %241 = math.exp %240 : vector<16x128xf32>
    %cst_103 = arith.constant 1.000000e+00 : f32
    %242 = vector.broadcast %cst_103 : f32 to vector<16x128xf32>
    %243 = arith.addf %242, %241 : vector<16x128xf32>
    %244 = arith.divf %242, %243 : vector<16x128xf32>
    %245 = vector.extract_strided_slice %238 {offsets = [0, 128], sizes = [16, 128], strides = [1, 1]} : vector<16x512xf32> to vector<16x128xf32>
    %246 = arith.negf %245 : vector<16x128xf32>
    %247 = math.exp %246 : vector<16x128xf32>
    %cst_104 = arith.constant 1.000000e+00 : f32
    %248 = vector.broadcast %cst_104 : f32 to vector<16x128xf32>
    %249 = arith.addf %248, %247 : vector<16x128xf32>
    %250 = arith.divf %248, %249 : vector<16x128xf32>
    %251 = vector.extract_strided_slice %238 {offsets = [0, 256], sizes = [16, 128], strides = [1, 1]} : vector<16x512xf32> to vector<16x128xf32>
    %252 = math.tanh %251 : vector<16x128xf32>
    %253 = vector.extract_strided_slice %238 {offsets = [0, 384], sizes = [16, 128], strides = [1, 1]} : vector<16x512xf32> to vector<16x128xf32>
    %254 = arith.negf %253 : vector<16x128xf32>
    %255 = math.exp %254 : vector<16x128xf32>
    %cst_105 = arith.constant 1.000000e+00 : f32
    %256 = vector.broadcast %cst_105 : f32 to vector<16x128xf32>
    %257 = arith.addf %256, %255 : vector<16x128xf32>
    %258 = arith.divf %256, %257 : vector<16x128xf32>
    %259 = arith.mulf %250, %212 : vector<16x128xf32>
    %260 = arith.mulf %244, %252 : vector<16x128xf32>
    %261 = arith.addf %259, %260 : vector<16x128xf32>
    %262 = math.tanh %261 : vector<16x128xf32>
    %263 = arith.mulf %258, %262 : vector<16x128xf32>
    %264 = vector.extract_strided_slice %263 {offsets = [0, 0], sizes = [8, 128], strides = [1, 1]} : vector<16x128xf32> to vector<8x128xf32>
    %265 = arith.index_cast %c4_i32 : i32 to index
    %c0_106 = arith.constant 0 : index
    %c0_107 = arith.constant 0 : index
    %266 = vector.load %arg9[%265, %c0_106, %c0_107] : memref<8x8x128xf32, #tpu.memory_space<vmem>>, vector<1x8x128xf32>
    %267 = vector.shape_cast %266 : vector<1x8x128xf32> to vector<8x128xf32>
    %268 = vector.shape_cast %264 : vector<8x128xf32> to vector<1x8x128xf32>
    tpu.vector_store %arg9[%265, %c0_106, %c0_107], %268 {strides = array<i32>} : memref<8x8x128xf32, #tpu.memory_space<vmem>>, vector<1x8x128xf32>,
    %269 = vector.extract_strided_slice %263 {offsets = [8, 0], sizes = [8, 128], strides = [1, 1]} : vector<16x128xf32> to vector<8x128xf32>
    %270 = arith.index_cast %225 : i32 to index
    %c0_108 = arith.constant 0 : index
    %c0_109 = arith.constant 0 : index
    %271 = vector.load %arg10[%270, %c0_108, %c0_109] : memref<8x8x128xf32, #tpu.memory_space<vmem>>, vector<1x8x128xf32>
    %272 = vector.shape_cast %271 : vector<1x8x128xf32> to vector<8x128xf32>
    %273 = vector.shape_cast %269 : vector<8x128xf32> to vector<1x8x128xf32>
    tpu.vector_store %arg10[%270, %c0_108, %c0_109], %273 {strides = array<i32>} : memref<8x8x128xf32, #tpu.memory_space<vmem>>, vector<1x8x128xf32>,
    %c5_i32 = arith.constant 5 : i32
    %c7_i32_110 = arith.constant 7 : i32
    %274 = arith.subi %c7_i32_110, %c5_i32 : i32
    %275 = vector.extract_strided_slice %263 {offsets = [0, 0], sizes = [8, 128], strides = [1, 1]} : vector<16x128xf32> to vector<8x128xf32>
    %cst_111 = arith.constant dense<0.000000e+00> : vector<8x512xf32>
    %276 = tpu.matmul %275, %25, %cst_111 {dimension_numbers = #tpu.dot_dimension_numbers<[1], [0], [0], [1], [0, 0, 1, 1], [], []>} : vector<8x128xf32>, vector<128x512xf32>, vector<8x512xf32> -> vector<8x512xf32>
    %277 = vector.extract_strided_slice %263 {offsets = [8, 0], sizes = [8, 128], strides = [1, 1]} : vector<16x128xf32> to vector<8x128xf32>
    %cst_112 = arith.constant dense<0.000000e+00> : vector<8x512xf32>
    %278 = tpu.matmul %277, %26, %cst_112 {dimension_numbers = #tpu.dot_dimension_numbers<[1], [0], [0], [1], [0, 0, 1, 1], [], []>} : vector<8x128xf32>, vector<128x512xf32>, vector<8x512xf32> -> vector<8x512xf32>
    %c0_113 = arith.constant 0 : index
    %279 = arith.index_cast %c5_i32 : i32 to index
    %c0_114 = arith.constant 0 : index
    %c0_115 = arith.constant 0 : index
    %280 = vector.load %arg11[%c0_113, %279, %c0_114, %c0_115] : memref<2x8x8x512xf32, #tpu.memory_space<vmem>>, vector<1x1x8x512xf32>
    %281 = vector.shape_cast %280 : vector<1x1x8x512xf32> to vector<8x512xf32>
    %282 = arith.addf %281, %276 : vector<8x512xf32>
    %c1_116 = arith.constant 1 : index
    %283 = arith.index_cast %274 : i32 to index
    %c0_117 = arith.constant 0 : index
    %c0_118 = arith.constant 0 : index
    %284 = vector.load %arg11[%c1_116, %283, %c0_117, %c0_118] : memref<2x8x8x512xf32, #tpu.memory_space<vmem>>, vector<1x1x8x512xf32>
    %285 = vector.shape_cast %284 : vector<1x1x8x512xf32> to vector<8x512xf32>
    %286 = arith.addf %285, %278 : vector<8x512xf32>
    %287 = tpu.concatenate %282, %286 in 0 : vector<8x512xf32>, vector<8x512xf32> -> vector<16x512xf32>
    %288 = vector.extract_strided_slice %287 {offsets = [0, 0], sizes = [16, 128], strides = [1, 1]} : vector<16x512xf32> to vector<16x128xf32>
    %289 = arith.negf %288 : vector<16x128xf32>
    %290 = math.exp %289 : vector<16x128xf32>
    %cst_119 = arith.constant 1.000000e+00 : f32
    %291 = vector.broadcast %cst_119 : f32 to vector<16x128xf32>
    %292 = arith.addf %291, %290 : vector<16x128xf32>
    %293 = arith.divf %291, %292 : vector<16x128xf32>
    %294 = vector.extract_strided_slice %287 {offsets = [0, 128], sizes = [16, 128], strides = [1, 1]} : vector<16x512xf32> to vector<16x128xf32>
    %295 = arith.negf %294 : vector<16x128xf32>
    %296 = math.exp %295 : vector<16x128xf32>
    %cst_120 = arith.constant 1.000000e+00 : f32
    %297 = vector.broadcast %cst_120 : f32 to vector<16x128xf32>
    %298 = arith.addf %297, %296 : vector<16x128xf32>
    %299 = arith.divf %297, %298 : vector<16x128xf32>
    %300 = vector.extract_strided_slice %287 {offsets = [0, 256], sizes = [16, 128], strides = [1, 1]} : vector<16x512xf32> to vector<16x128xf32>
    %301 = math.tanh %300 : vector<16x128xf32>
    %302 = vector.extract_strided_slice %287 {offsets = [0, 384], sizes = [16, 128], strides = [1, 1]} : vector<16x512xf32> to vector<16x128xf32>
    %303 = arith.negf %302 : vector<16x128xf32>
    %304 = math.exp %303 : vector<16x128xf32>
    %cst_121 = arith.constant 1.000000e+00 : f32
    %305 = vector.broadcast %cst_121 : f32 to vector<16x128xf32>
    %306 = arith.addf %305, %304 : vector<16x128xf32>
    %307 = arith.divf %305, %306 : vector<16x128xf32>
    %308 = arith.mulf %299, %261 : vector<16x128xf32>
    %309 = arith.mulf %293, %301 : vector<16x128xf32>
    %310 = arith.addf %308, %309 : vector<16x128xf32>
    %311 = math.tanh %310 : vector<16x128xf32>
    %312 = arith.mulf %307, %311 : vector<16x128xf32>
    %313 = vector.extract_strided_slice %312 {offsets = [0, 0], sizes = [8, 128], strides = [1, 1]} : vector<16x128xf32> to vector<8x128xf32>
    %314 = arith.index_cast %c5_i32 : i32 to index
    %c0_122 = arith.constant 0 : index
    %c0_123 = arith.constant 0 : index
    %315 = vector.load %arg9[%314, %c0_122, %c0_123] : memref<8x8x128xf32, #tpu.memory_space<vmem>>, vector<1x8x128xf32>
    %316 = vector.shape_cast %315 : vector<1x8x128xf32> to vector<8x128xf32>
    %317 = vector.shape_cast %313 : vector<8x128xf32> to vector<1x8x128xf32>
    tpu.vector_store %arg9[%314, %c0_122, %c0_123], %317 {strides = array<i32>} : memref<8x8x128xf32, #tpu.memory_space<vmem>>, vector<1x8x128xf32>,
    %318 = vector.extract_strided_slice %312 {offsets = [8, 0], sizes = [8, 128], strides = [1, 1]} : vector<16x128xf32> to vector<8x128xf32>
    %319 = arith.index_cast %274 : i32 to index
    %c0_124 = arith.constant 0 : index
    %c0_125 = arith.constant 0 : index
    %320 = vector.load %arg10[%319, %c0_124, %c0_125] : memref<8x8x128xf32, #tpu.memory_space<vmem>>, vector<1x8x128xf32>
    %321 = vector.shape_cast %320 : vector<1x8x128xf32> to vector<8x128xf32>
    %322 = vector.shape_cast %318 : vector<8x128xf32> to vector<1x8x128xf32>
    tpu.vector_store %arg10[%319, %c0_124, %c0_125], %322 {strides = array<i32>} : memref<8x8x128xf32, #tpu.memory_space<vmem>>, vector<1x8x128xf32>,
    %c6_i32 = arith.constant 6 : i32
    %c7_i32_126 = arith.constant 7 : i32
    %323 = arith.subi %c7_i32_126, %c6_i32 : i32
    %324 = vector.extract_strided_slice %312 {offsets = [0, 0], sizes = [8, 128], strides = [1, 1]} : vector<16x128xf32> to vector<8x128xf32>
    %cst_127 = arith.constant dense<0.000000e+00> : vector<8x512xf32>
    %325 = tpu.matmul %324, %25, %cst_127 {dimension_numbers = #tpu.dot_dimension_numbers<[1], [0], [0], [1], [0, 0, 1, 1], [], []>} : vector<8x128xf32>, vector<128x512xf32>, vector<8x512xf32> -> vector<8x512xf32>
    %326 = vector.extract_strided_slice %312 {offsets = [8, 0], sizes = [8, 128], strides = [1, 1]} : vector<16x128xf32> to vector<8x128xf32>
    %cst_128 = arith.constant dense<0.000000e+00> : vector<8x512xf32>
    %327 = tpu.matmul %326, %26, %cst_128 {dimension_numbers = #tpu.dot_dimension_numbers<[1], [0], [0], [1], [0, 0, 1, 1], [], []>} : vector<8x128xf32>, vector<128x512xf32>, vector<8x512xf32> -> vector<8x512xf32>
    %c0_129 = arith.constant 0 : index
    %328 = arith.index_cast %c6_i32 : i32 to index
    %c0_130 = arith.constant 0 : index
    %c0_131 = arith.constant 0 : index
    %329 = vector.load %arg11[%c0_129, %328, %c0_130, %c0_131] : memref<2x8x8x512xf32, #tpu.memory_space<vmem>>, vector<1x1x8x512xf32>
    %330 = vector.shape_cast %329 : vector<1x1x8x512xf32> to vector<8x512xf32>
    %331 = arith.addf %330, %325 : vector<8x512xf32>
    %c1_132 = arith.constant 1 : index
    %332 = arith.index_cast %323 : i32 to index
    %c0_133 = arith.constant 0 : index
    %c0_134 = arith.constant 0 : index
    %333 = vector.load %arg11[%c1_132, %332, %c0_133, %c0_134] : memref<2x8x8x512xf32, #tpu.memory_space<vmem>>, vector<1x1x8x512xf32>
    %334 = vector.shape_cast %333 : vector<1x1x8x512xf32> to vector<8x512xf32>
    %335 = arith.addf %334, %327 : vector<8x512xf32>
    %336 = tpu.concatenate %331, %335 in 0 : vector<8x512xf32>, vector<8x512xf32> -> vector<16x512xf32>
    %337 = vector.extract_strided_slice %336 {offsets = [0, 0], sizes = [16, 128], strides = [1, 1]} : vector<16x512xf32> to vector<16x128xf32>
    %338 = arith.negf %337 : vector<16x128xf32>
    %339 = math.exp %338 : vector<16x128xf32>
    %cst_135 = arith.constant 1.000000e+00 : f32
    %340 = vector.broadcast %cst_135 : f32 to vector<16x128xf32>
    %341 = arith.addf %340, %339 : vector<16x128xf32>
    %342 = arith.divf %340, %341 : vector<16x128xf32>
    %343 = vector.extract_strided_slice %336 {offsets = [0, 128], sizes = [16, 128], strides = [1, 1]} : vector<16x512xf32> to vector<16x128xf32>
    %344 = arith.negf %343 : vector<16x128xf32>
    %345 = math.exp %344 : vector<16x128xf32>
    %cst_136 = arith.constant 1.000000e+00 : f32
    %346 = vector.broadcast %cst_136 : f32 to vector<16x128xf32>
    %347 = arith.addf %346, %345 : vector<16x128xf32>
    %348 = arith.divf %346, %347 : vector<16x128xf32>
    %349 = vector.extract_strided_slice %336 {offsets = [0, 256], sizes = [16, 128], strides = [1, 1]} : vector<16x512xf32> to vector<16x128xf32>
    %350 = math.tanh %349 : vector<16x128xf32>
    %351 = vector.extract_strided_slice %336 {offsets = [0, 384], sizes = [16, 128], strides = [1, 1]} : vector<16x512xf32> to vector<16x128xf32>
    %352 = arith.negf %351 : vector<16x128xf32>
    %353 = math.exp %352 : vector<16x128xf32>
    %cst_137 = arith.constant 1.000000e+00 : f32
    %354 = vector.broadcast %cst_137 : f32 to vector<16x128xf32>
    %355 = arith.addf %354, %353 : vector<16x128xf32>
    %356 = arith.divf %354, %355 : vector<16x128xf32>
    %357 = arith.mulf %348, %310 : vector<16x128xf32>
    %358 = arith.mulf %342, %350 : vector<16x128xf32>
    %359 = arith.addf %357, %358 : vector<16x128xf32>
    %360 = math.tanh %359 : vector<16x128xf32>
    %361 = arith.mulf %356, %360 : vector<16x128xf32>
    %362 = vector.extract_strided_slice %361 {offsets = [0, 0], sizes = [8, 128], strides = [1, 1]} : vector<16x128xf32> to vector<8x128xf32>
    %363 = arith.index_cast %c6_i32 : i32 to index
    %c0_138 = arith.constant 0 : index
    %c0_139 = arith.constant 0 : index
    %364 = vector.load %arg9[%363, %c0_138, %c0_139] : memref<8x8x128xf32, #tpu.memory_space<vmem>>, vector<1x8x128xf32>
    %365 = vector.shape_cast %364 : vector<1x8x128xf32> to vector<8x128xf32>
    %366 = vector.shape_cast %362 : vector<8x128xf32> to vector<1x8x128xf32>
    tpu.vector_store %arg9[%363, %c0_138, %c0_139], %366 {strides = array<i32>} : memref<8x8x128xf32, #tpu.memory_space<vmem>>, vector<1x8x128xf32>,
    %367 = vector.extract_strided_slice %361 {offsets = [8, 0], sizes = [8, 128], strides = [1, 1]} : vector<16x128xf32> to vector<8x128xf32>
    %368 = arith.index_cast %323 : i32 to index
    %c0_140 = arith.constant 0 : index
    %c0_141 = arith.constant 0 : index
    %369 = vector.load %arg10[%368, %c0_140, %c0_141] : memref<8x8x128xf32, #tpu.memory_space<vmem>>, vector<1x8x128xf32>
    %370 = vector.shape_cast %369 : vector<1x8x128xf32> to vector<8x128xf32>
    %371 = vector.shape_cast %367 : vector<8x128xf32> to vector<1x8x128xf32>
    tpu.vector_store %arg10[%368, %c0_140, %c0_141], %371 {strides = array<i32>} : memref<8x8x128xf32, #tpu.memory_space<vmem>>, vector<1x8x128xf32>,
    %c7_i32_142 = arith.constant 7 : i32
    %c7_i32_143 = arith.constant 7 : i32
    %372 = arith.subi %c7_i32_143, %c7_i32_142 : i32
    %373 = vector.extract_strided_slice %361 {offsets = [0, 0], sizes = [8, 128], strides = [1, 1]} : vector<16x128xf32> to vector<8x128xf32>
    %cst_144 = arith.constant dense<0.000000e+00> : vector<8x512xf32>
    %374 = tpu.matmul %373, %25, %cst_144 {dimension_numbers = #tpu.dot_dimension_numbers<[1], [0], [0], [1], [0, 0, 1, 1], [], []>} : vector<8x128xf32>, vector<128x512xf32>, vector<8x512xf32> -> vector<8x512xf32>
    %375 = vector.extract_strided_slice %361 {offsets = [8, 0], sizes = [8, 128], strides = [1, 1]} : vector<16x128xf32> to vector<8x128xf32>
    %cst_145 = arith.constant dense<0.000000e+00> : vector<8x512xf32>
    %376 = tpu.matmul %375, %26, %cst_145 {dimension_numbers = #tpu.dot_dimension_numbers<[1], [0], [0], [1], [0, 0, 1, 1], [], []>} : vector<8x128xf32>, vector<128x512xf32>, vector<8x512xf32> -> vector<8x512xf32>
    %c0_146 = arith.constant 0 : index
    %377 = arith.index_cast %c7_i32_142 : i32 to index
    %c0_147 = arith.constant 0 : index
    %c0_148 = arith.constant 0 : index
    %378 = vector.load %arg11[%c0_146, %377, %c0_147, %c0_148] : memref<2x8x8x512xf32, #tpu.memory_space<vmem>>, vector<1x1x8x512xf32>
    %379 = vector.shape_cast %378 : vector<1x1x8x512xf32> to vector<8x512xf32>
    %380 = arith.addf %379, %374 : vector<8x512xf32>
    %c1_149 = arith.constant 1 : index
    %381 = arith.index_cast %372 : i32 to index
    %c0_150 = arith.constant 0 : index
    %c0_151 = arith.constant 0 : index
    %382 = vector.load %arg11[%c1_149, %381, %c0_150, %c0_151] : memref<2x8x8x512xf32, #tpu.memory_space<vmem>>, vector<1x1x8x512xf32>
    %383 = vector.shape_cast %382 : vector<1x1x8x512xf32> to vector<8x512xf32>
    %384 = arith.addf %383, %376 : vector<8x512xf32>
    %385 = tpu.concatenate %380, %384 in 0 : vector<8x512xf32>, vector<8x512xf32> -> vector<16x512xf32>
    %386 = vector.extract_strided_slice %385 {offsets = [0, 0], sizes = [16, 128], strides = [1, 1]} : vector<16x512xf32> to vector<16x128xf32>
    %387 = arith.negf %386 : vector<16x128xf32>
    %388 = math.exp %387 : vector<16x128xf32>
    %cst_152 = arith.constant 1.000000e+00 : f32
    %389 = vector.broadcast %cst_152 : f32 to vector<16x128xf32>
    %390 = arith.addf %389, %388 : vector<16x128xf32>
    %391 = arith.divf %389, %390 : vector<16x128xf32>
    %392 = vector.extract_strided_slice %385 {offsets = [0, 128], sizes = [16, 128], strides = [1, 1]} : vector<16x512xf32> to vector<16x128xf32>
    %393 = arith.negf %392 : vector<16x128xf32>
    %394 = math.exp %393 : vector<16x128xf32>
    %cst_153 = arith.constant 1.000000e+00 : f32
    %395 = vector.broadcast %cst_153 : f32 to vector<16x128xf32>
    %396 = arith.addf %395, %394 : vector<16x128xf32>
    %397 = arith.divf %395, %396 : vector<16x128xf32>
    %398 = vector.extract_strided_slice %385 {offsets = [0, 256], sizes = [16, 128], strides = [1, 1]} : vector<16x512xf32> to vector<16x128xf32>
    %399 = math.tanh %398 : vector<16x128xf32>
    %400 = vector.extract_strided_slice %385 {offsets = [0, 384], sizes = [16, 128], strides = [1, 1]} : vector<16x512xf32> to vector<16x128xf32>
    %401 = arith.negf %400 : vector<16x128xf32>
    %402 = math.exp %401 : vector<16x128xf32>
    %cst_154 = arith.constant 1.000000e+00 : f32
    %403 = vector.broadcast %cst_154 : f32 to vector<16x128xf32>
    %404 = arith.addf %403, %402 : vector<16x128xf32>
    %405 = arith.divf %403, %404 : vector<16x128xf32>
    %406 = arith.mulf %397, %359 : vector<16x128xf32>
    %407 = arith.mulf %391, %399 : vector<16x128xf32>
    %408 = arith.addf %406, %407 : vector<16x128xf32>
    %409 = math.tanh %408 : vector<16x128xf32>
    %410 = arith.mulf %405, %409 : vector<16x128xf32>
    %411 = vector.extract_strided_slice %410 {offsets = [0, 0], sizes = [8, 128], strides = [1, 1]} : vector<16x128xf32> to vector<8x128xf32>
    %412 = arith.index_cast %c7_i32_142 : i32 to index
    %c0_155 = arith.constant 0 : index
    %c0_156 = arith.constant 0 : index
    %413 = vector.load %arg9[%412, %c0_155, %c0_156] : memref<8x8x128xf32, #tpu.memory_space<vmem>>, vector<1x8x128xf32>
    %414 = vector.shape_cast %413 : vector<1x8x128xf32> to vector<8x128xf32>
    %415 = vector.shape_cast %411 : vector<8x128xf32> to vector<1x8x128xf32>
    tpu.vector_store %arg9[%412, %c0_155, %c0_156], %415 {strides = array<i32>} : memref<8x8x128xf32, #tpu.memory_space<vmem>>, vector<1x8x128xf32>,
    %416 = vector.extract_strided_slice %410 {offsets = [8, 0], sizes = [8, 128], strides = [1, 1]} : vector<16x128xf32> to vector<8x128xf32>
    %417 = arith.index_cast %372 : i32 to index
    %c0_157 = arith.constant 0 : index
    %c0_158 = arith.constant 0 : index
    %418 = vector.load %arg10[%417, %c0_157, %c0_158] : memref<8x8x128xf32, #tpu.memory_space<vmem>>, vector<1x8x128xf32>
    %419 = vector.shape_cast %418 : vector<1x8x128xf32> to vector<8x128xf32>
    %420 = vector.shape_cast %416 : vector<8x128xf32> to vector<1x8x128xf32>
    tpu.vector_store %arg10[%417, %c0_157, %c0_158], %420 {strides = array<i32>} : memref<8x8x128xf32, #tpu.memory_space<vmem>>, vector<1x8x128xf32>,
    %c8_i32 = arith.constant 8 : i32
    %c0_159 = arith.constant 0 : index
    %c0_160 = arith.constant 0 : index
    %421 = vector.load %arg12[%c0_159, %c0_160] : memref<16x128xf32, #tpu.memory_space<vmem>>, vector<16x128xf32>
    tpu.vector_store %arg12[%c0_159, %c0_160], %410 {strides = array<i32>} : memref<16x128xf32, #tpu.memory_space<vmem>>, vector<16x128xf32>,
    %c0_161 = arith.constant 0 : index
    %c0_162 = arith.constant 0 : index
    %422 = vector.load %arg13[%c0_161, %c0_162] : memref<16x128xf32, #tpu.memory_space<vmem>>, vector<16x128xf32>
    tpu.vector_store %arg13[%c0_161, %c0_162], %408 {strides = array<i32>} : memref<16x128xf32, #tpu.memory_space<vmem>>, vector<16x128xf32>,
    return
  }
  func.func @transform_0(%arg0: i32) -> (i32, i32, i32) {
    %c0_i32 = arith.constant 0 : i32
    %c0_i32_0 = arith.constant 0 : i32
    %c0_i32_1 = arith.constant 0 : i32
    return %arg0, %c0_i32, %c0_i32_0 : i32, i32, i32
  }
  func.func @transform_1(%arg0: i32) -> (i32, i32, i32) {
    %c0_i32 = arith.constant 0 : i32
    %0 = arith.subi %c0_i32, %arg0 : i32
    %c0_i32_0 = arith.constant 0 : i32
    %c0_i32_1 = arith.constant 0 : i32
    %c0_i32_2 = arith.constant 0 : i32
    return %0, %c0_i32_0, %c0_i32_1 : i32, i32, i32
  }
  func.func @transform_2(%arg0: i32) -> (i32, i32) {
    %c0_i32 = arith.constant 0 : i32
    %c0_i32_0 = arith.constant 0 : i32
    %c0_i32_1 = arith.constant 0 : i32
    return %c0_i32, %c0_i32_0 : i32, i32
  }
  func.func @transform_3(%arg0: i32) -> (i32, i32) {
    %c0_i32 = arith.constant 0 : i32
    %c0_i32_0 = arith.constant 0 : i32
    %c0_i32_1 = arith.constant 0 : i32
    return %c0_i32, %c0_i32_0 : i32, i32
  }
  func.func @transform_4(%arg0: i32) -> (i32, i32) {
    %c0_i32 = arith.constant 0 : i32
    %c0_i32_0 = arith.constant 0 : i32
    %c0_i32_1 = arith.constant 0 : i32
    return %c0_i32, %c0_i32_0 : i32, i32
  }
  func.func @transform_5(%arg0: i32) -> (i32, i32) {
    %c0_i32 = arith.constant 0 : i32
    %c0_i32_0 = arith.constant 0 : i32
    %c0_i32_1 = arith.constant 0 : i32
    return %c0_i32, %c0_i32_0 : i32, i32
  }
  func.func @transform_6(%arg0: i32) -> (i32, i32) {
    %c0_i32 = arith.constant 0 : i32
    %c0_i32_0 = arith.constant 0 : i32
    %c0_i32_1 = arith.constant 0 : i32
    return %c0_i32, %c0_i32_0 : i32, i32
  }
  func.func @transform_7(%arg0: i32) -> (i32, i32) {
    %c0_i32 = arith.constant 0 : i32
    %c0_i32_0 = arith.constant 0 : i32
    %c0_i32_1 = arith.constant 0 : i32
    return %c0_i32, %c0_i32_0 : i32, i32
  }
  func.func @transform_8(%arg0: i32) -> (i32, i32, i32) {
    %c0_i32 = arith.constant 0 : i32
    %c0_i32_0 = arith.constant 0 : i32
    %c0_i32_1 = arith.constant 0 : i32
    return %arg0, %c0_i32, %c0_i32_0 : i32, i32, i32
  }
  func.func @transform_9(%arg0: i32) -> (i32, i32, i32) {
    %c0_i32 = arith.constant 0 : i32
    %0 = arith.subi %c0_i32, %arg0 : i32
    %c0_i32_0 = arith.constant 0 : i32
    %c0_i32_1 = arith.constant 0 : i32
    %c0_i32_2 = arith.constant 0 : i32
    return %0, %c0_i32_0, %c0_i32_1 : i32, i32, i32
  }
}

</mosaic_0001>

<llo_original>
// kernel: tpu_custom_call.1
$region0: #{tpu_custom_call.1}
  #allocation0 [shape = 'u32[]', space=smem, size = 0x4, offset = 0x4, fixed_abs, tag = 'smem constant byte address 0x4 - core index']
  #allocation1 [shape = 'u32[144,128]{1,0:T(1,128)}', space=vmem, size = 0x12000, scoped, tag = 'internal scratch']
  #allocation2 [shape = 'f32[2,8,8,512]{3,2,1,0:T(8,128)}', space=vmem, size = 0x40000, scoped, tag = 'scratch operand']
  #allocation3 [shape = 'f32[16,128]{1,0:T(8,128)}', space=vmem, size = 0x2000, scoped, tag = 'scratch operand']
  #allocation4 [shape = 'f32[16,128]{1,0:T(8,128)}', space=vmem, size = 0x2000, scoped, tag = 'scratch operand']
  %s0 = inlined_call_operand.hbm [shape: f32[8,8,16], index: 0, kind: input, shape index: {}]
  %s1 = inlined_call_operand.hbm [shape: f32[8,8,16], index: 1, kind: input, shape index: {}]
  %s2 = inlined_call_operand.hbm [shape: f32[16,512], index: 2, kind: input, shape index: {}]
  %s3 = inlined_call_operand.hbm [shape: f32[16,512], index: 3, kind: input, shape index: {}]
  %s4 = inlined_call_operand.vmem [shape: f32[1,512], index: 4, kind: input, shape index: {}]
  %s5 = inlined_call_operand.vmem [shape: f32[1,512], index: 5, kind: input, shape index: {}]
  %s6 = inlined_call_operand.hbm [shape: f32[128,512], index: 6, kind: input, shape index: {}]
  %s7 = inlined_call_operand.hbm [shape: f32[128,512], index: 7, kind: input, shape index: {}]
  %s8 = inlined_call_operand.hbm [shape: f32[8,8,128], index: 8, kind: output, shape index: {0}]
  %s9 = inlined_call_operand.hbm [shape: f32[8,8,128], index: 9, kind: output, shape index: {1}]
  %10 = xla_tuple %s8, %s9
  %s11 = sld [smem:[#allocation0]]
  $region78: #{tpu_custom_call.1} parent=0
    _
  %s13 = ssub.s32 1, %s11
  %s14 = scalar_select 0, %s13, %s11
  $region1: #{tpu_custom_call.1} parent=0
    #allocation5 [shape = 'u8[32768]{0}', space=vmem, size = 0x8000, scoped, tag = 'input window, operand 0, single buffered']
    #allocation6 [shape = 's32[1]{0}', space=sflag, size = 0x4, scoped, tag = 'scoped memory for tpu_custom_call.1']
    #allocation7 [shape = 's32[1]{0}', space=sflag, size = 0x4, scoped, tag = 'scoped memory for tpu_custom_call.1']
    #allocation8 [shape = 'u8[32768]{0}', space=vmem, size = 0x8000, scoped, tag = 'input window, operand 1, single buffered']
    #allocation9 [shape = 's32[1]{0}', space=sflag, size = 0x4, scoped, tag = 'scoped memory for tpu_custom_call.1']
    #allocation10 [shape = 'u8[32768]{0}', space=vmem, size = 0x8000, scoped, tag = 'input window, operand 2, single buffered']
    #allocation11 [shape = 'u8[32768]{0}', space=vmem, size = 0x8000, scoped, tag = 'input window, operand 3, single buffered']
    #allocation12 [shape = 's32[1]{0}', space=sflag, size = 0x4, scoped, tag = 'scoped memory for tpu_custom_call.1']
    #allocation13 [shape = 'u8[262144]{0}', space=vmem, size = 0x40000, scoped, tag = 'input window, operand 6, single buffered']
    #allocation14 [shape = 'u8[262144]{0}', space=vmem, size = 0x40000, scoped, tag = 'input window, operand 7, single buffered']
    #allocation15 [shape = 's32[1]{0}', space=sflag, size = 0x4, scoped, tag = 'scoped memory for tpu_custom_call.1']
    #allocation16 [shape = 'u8[32768]{0}', space=vmem, size = 0x8000, scoped, tag = 'output window, operand 0, single buffered']
    #allocation17 [shape = 'u8[32768]{0}', space=vmem, size = 0x8000, scoped, tag = 'output window, operand 1, single buffered']
    #allocation18 [shape = 's32[1]{0}', space=sflag, size = 0x4, scoped, tag = 'scoped memory for tpu_custom_call.1']
    %15 = vsyncpa [#allocation6], 0
    %16 = vsyncpa [#allocation9], 0
    %17 = vsyncpa [#allocation12], 0
    %18 = vsyncpa [#allocation15], 0
    %19 = vsyncpa [#allocation7], 0
    %20 = vsyncpa [#allocation18], 0
    // Predicated region
    $region2: #{tpu_custom_call.1} parent=1 // pred_check
      _
    $region3: #{tpu_custom_call.1} parent=1 // pred_check_branch
      %22 = sbr.rel (0) target = $region5
    $region4: #{tpu_custom_call.1} parent=1 // pred_region
      %s24 = ssub.s32 1024, 1024
      %25 = vsyncadd [#allocation6], %s24
      %s26 = sshll.u32 [#allocation5], 4
      %s27 = int_to_ptr.vmem [resolvable:$true] %s26
      %32 = dma.hbm_to_vmem [thread:$0]  %s0, 1024, %s27, [#allocation6], 128, 128, 8
    $region5: #{tpu_custom_call.1} parent=1 // pred_fallthru
      _
    // Predicated region
    $region6: #{tpu_custom_call.1} parent=1 // pred_check
      _
    $region7: #{tpu_custom_call.1} parent=1 // pred_check_branch
      %34 = sbr.rel (0) target = $region9
    $region8: #{tpu_custom_call.1} parent=1 // pred_region
      %s35 = ssub.s32 0, 0
      %s36 = smul.u32 8, %s35
      %s38 = ssub.s32 1024, 1024
      %39 = vsyncadd [#allocation9], %s38
      %s40 = smul.addr %s36, 128
      %s41 = scalar_lea.hbm %s1, %s40
      %s42 = sshll.u32 [#allocation8], 4
      %s43 = int_to_ptr.vmem [resolvable:$true] %s42
      %48 = dma.hbm_to_vmem [thread:$0]  %s41, 1024, %s43, [#allocation9], 128, 128, 8
    $region9: #{tpu_custom_call.1} parent=1 // pred_fallthru
      _
    // Predicated region
    $region10: #{tpu_custom_call.1} parent=1 // pred_check
      _
    $region11: #{tpu_custom_call.1} parent=1 // pred_check_branch
      %50 = sbr.rel (0) target = $region13
    $region12: #{tpu_custom_call.1} parent=1 // pred_region
      %s52 = ssub.s32 1024, 1024
      %53 = vsyncadd [#allocation9], %s52
      %s54 = sshll.u32 [#allocation10], 4
      %s55 = int_to_ptr.vmem [resolvable:$true] %s54
      %60 = dma.hbm_to_vmem [thread:$0]  %s2, 1024, %s55, [#allocation9], 512, 512, 32
    $region13: #{tpu_custom_call.1} parent=1 // pred_fallthru
      _
    // Predicated region
    $region14: #{tpu_custom_call.1} parent=1 // pred_check
      _
    $region15: #{tpu_custom_call.1} parent=1 // pred_check_branch
      %62 = sbr.rel (0) target = $region17
    $region16: #{tpu_custom_call.1} parent=1 // pred_region
      %s64 = ssub.s32 1024, 1024
      %65 = vsyncadd [#allocation12], %s64
      %s66 = sshll.u32 [#allocation11], 4
      %s67 = int_to_ptr.vmem [resolvable:$true] %s66
      %72 = dma.hbm_to_vmem [thread:$0]  %s3, 1024, %s67, [#allocation12], 512, 512, 32
    $region17: #{tpu_custom_call.1} parent=1 // pred_fallthru
      _
    // Predicated region
    $region18: #{tpu_custom_call.1} parent=1 // pred_check
      _
    $region19: #{tpu_custom_call.1} parent=1 // pred_check_branch
      %74 = sbr.rel (0) target = $region21
    $region20: #{tpu_custom_call.1} parent=1 // pred_region
      _
    $region21: #{tpu_custom_call.1} parent=1 // pred_fallthru
      _
    // Predicated region
    $region22: #{tpu_custom_call.1} parent=1 // pred_check
      _
    $region23: #{tpu_custom_call.1} parent=1 // pred_check_branch
      %76 = sbr.rel (0) target = $region25
    $region24: #{tpu_custom_call.1} parent=1 // pred_region
      _
    $region25: #{tpu_custom_call.1} parent=1 // pred_fallthru
      _
    // Predicated region
    $region26: #{tpu_custom_call.1} parent=1 // pred_check
      _
    $region27: #{tpu_custom_call.1} parent=1 // pred_check_branch
      %78 = sbr.rel (0) target = $region29
    $region28: #{tpu_custom_call.1} parent=1 // pred_region
      %s80 = ssub.s32 8192, 8192
      %81 = vsyncadd [#allocation12], %s80
      %s82 = sshll.u32 [#allocation13], 4
      %s83 = int_to_ptr.vmem [resolvable:$true] %s82
      %88 = dma.hbm_to_vmem [thread:$0]  %s6, 8192, %s83, [#allocation12], 512, 512, 32
    $region29: #{tpu_custom_call.1} parent=1 // pred_fallthru
      _
    // Predicated region
    $region30: #{tpu_custom_call.1} parent=1 // pred_check
      _
    $region31: #{tpu_custom_call.1} parent=1 // pred_check_branch
      %90 = sbr.rel (0) target = $region33
    $region32: #{tpu_custom_call.1} parent=1 // pred_region
      %s92 = ssub.s32 8192, 8192
      %93 = vsyncadd [#allocation15], %s92
      %s94 = sshll.u32 [#allocation14], 4
      %s95 = int_to_ptr.vmem [resolvable:$true] %s94
      %100 = dma.hbm_to_vmem [thread:$0]  %s7, 8192, %s95, [#allocation15], 512, 512, 32
    $region33: #{tpu_custom_call.1} parent=1 // pred_fallthru
      _
    // Predicated region
    $region34: #{tpu_custom_call.1} parent=1 // pred_check
      _
    $region35: #{tpu_custom_call.1} parent=1 // pred_check_branch
      %102 = sbr.rel (0) target = $region37
    $region36: #{tpu_custom_call.1} parent=1 // pred_region
      %103 = dma.done [#allocation6], 1024
    $region37: #{tpu_custom_call.1} parent=1 // pred_fallthru
      _
    // Predicated region
    $region38: #{tpu_custom_call.1} parent=1 // pred_check
      _
    $region39: #{tpu_custom_call.1} parent=1 // pred_check_branch
      %105 = sbr.rel (0) target = $region41
    $region40: #{tpu_custom_call.1} parent=1 // pred_region
      %106 = dma.done [#allocation9], 1024
    $region41: #{tpu_custom_call.1} parent=1 // pred_fallthru
      _
    // Predicated region
    $region42: #{tpu_custom_call.1} parent=1 // pred_check
      _
    $region43: #{tpu_custom_call.1} parent=1 // pred_check_branch
      %108 = sbr.rel (0) target = $region45
    $region44: #{tpu_custom_call.1} parent=1 // pred_region
      %109 = dma.done [#allocation9], 1024
    $region45: #{tpu_custom_call.1} parent=1 // pred_fallthru
      _
    // Predicated region
    $region46: #{tpu_custom_call.1} parent=1 // pred_check
      _
    $region47: #{tpu_custom_call.1} parent=1 // pred_check_branch
      %111 = sbr.rel (0) target = $region49
    $region48: #{tpu_custom_call.1} parent=1 // pred_region
      %112 = dma.done [#allocation12], 1024
    $region49: #{tpu_custom_call.1} parent=1 // pred_fallthru
      _
    // Predicated region
    $region50: #{tpu_custom_call.1} parent=1 // pred_check
      _
    $region51: #{tpu_custom_call.1} parent=1 // pred_check_branch
      %114 = sbr.rel (0) target = $region53
    $region52: #{tpu_custom_call.1} parent=1 // pred_region
      %115 = dma.done [#allocation12], 8192
    $region53: #{tpu_custom_call.1} parent=1 // pred_fallthru
      _
    // Predicated region
    $region54: #{tpu_custom_call.1} parent=1 // pred_check
      _
    $region55: #{tpu_custom_call.1} parent=1 // pred_check_branch
      %117 = sbr.rel (0) target = $region57
    $region56: #{tpu_custom_call.1} parent=1 // pred_region
      %118 = dma.done [#allocation15], 8192
    $region57: #{tpu_custom_call.1} parent=1 // pred_fallthru
      _
    %s119 = ssub.s32 0, 0
    %s120 = smul.u32 8, %s119
    %s121 = ssub.s32 0, 0
    %s122 = smul.u32 8, %s121
    %p123 = scmp.eq.s32.totalorder 0, 0
    // Predicated region
    $region58: #{tpu_custom_call.1} parent=1 // pred_check
      %p124 = pneg %p123
    $region59: #{tpu_custom_call.1} parent=1 // pred_check_branch
      %126 = sbr.rel (%p124) target = $region61
    $region60: #{tpu_custom_call.1} parent=1 // pred_region
      %127 = vst [vmem:[#allocation3] sm:$0xff] 0.0
      %128 = vst [vmem:[#allocation3 + $0x8] sm:$0xff] 0.0
      %129 = vst [vmem:[#allocation4] sm:$0xff] 0.0
      %130 = vst [vmem:[#allocation4 + $0x8] sm:$0xff] 0.0
    $region61: #{tpu_custom_call.1} parent=1 // pred_fallthru
      _
    %v131 = vld [vmem:[#allocation5] sm:$0xff]
    %v132 = vld [vmem:[#allocation5 + $0x8] sm:$0xff]
    %v133 = vld [vmem:[#allocation5 + $0x10] sm:$0xff]
    %v134 = vld [vmem:[#allocation5 + $0x18] sm:$0xff]
    %v135 = vld [vmem:[#allocation5 + $0x20] sm:$0xff]
    %v136 = vld [vmem:[#allocation5 + $0x28] sm:$0xff]
    %v137 = vld [vmem:[#allocation5 + $0x30] sm:$0xff]
    %v138 = vld [vmem:[#allocation5 + $0x38] sm:$0xff]
    %v139 = vld [vmem:[#allocation10] sm:$0xff]
    %v140 = vld [vmem:[#allocation10 + $0x8] sm:$0xff]
    %v141 = vld [vmem:[#allocation10 + $0x10] sm:$0xff]
    %v142 = vld [vmem:[#allocation10 + $0x18] sm:$0xff]
    %v143 = vld [vmem:[#allocation10 + $0x20] sm:$0xff]
    %v144 = vld [vmem:[#allocation10 + $0x28] sm:$0xff]
    %v145 = vld [vmem:[#allocation10 + $0x30] sm:$0xff]
    %v146 = vld [vmem:[#allocation10 + $0x38] sm:$0xff]
    %v147 = vld [vmem:[%s4] sm:$0xf]
    %v149 = vlaneseq
    %v150 = vshrl.u32 %v149, 7
    %v151 = vsub.s32 0, %v150
    %v152 = vrot.slane %v147, %v151
    %v153 = vlaneseq
    %v154 = vshrl.u32 %v153, 7
    %v155 = vsub.s32 1, %v154
    %v156 = vrot.slane %v147, %v155
    %v157 = vlaneseq
    %v158 = vshrl.u32 %v157, 7
    %v159 = vsub.s32 2, %v158
    %v160 = vrot.slane %v147, %v159
    %v161 = vlaneseq
    %v162 = vshrl.u32 %v161, 7
    %v163 = vsub.s32 3, %v162
    %v164 = vrot.slane %v147, %v163
    %vm169 = vcmask 130048
    %v171 = vsel %vm169, %v131, 0
    %v174 = vsel %vm169, %v132, 0
    %v177 = vsel %vm169, %v133, 0
    %v180 = vsel %vm169, %v134, 0
    %v183 = vsel %vm169, %v135, 0
    %v186 = vsel %vm169, %v136, 0
    %v189 = vsel %vm169, %v137, 0
    %v192 = vsel %vm169, %v138, 0
    %194 = vmatprep.subr.mxu0 %v140
    %195 = vmatpush1.msra.mxu0 %v139
    %196 = vmatprep.subr.mxu0 %v144
    %197 = vmatpush1.msra.mxu0 %v143
    %198 = vmatprep.subr.mxu0 0.0
    %199 = vmatpush1.msra.mxu0 0.0
    %200 = vmatprep.subr.mxu0 0.0
    %201 = vmatpush1.msra.mxu0 0.0
    %202 = vmatprep.subr.mxu0 0.0
    %203 = vmatpush1.msra.mxu0 0.0
    %204 = vmatprep.subr.mxu0 0.0
    %205 = vmatpush1.msra.mxu0 0.0
    %206 = vmatprep.subr.mxu0 0.0
    %207 = vmatpush1.msra.mxu0 0.0
    %208 = vmatprep.subr.mxu0 0.0
    %209 = vmatpush1.msra.mxu0 0.0
    %210 = vmatprep.subr.mxu0 0.0
    %211 = vmatpush1.msra.mxu0 0.0
    %212 = vmatprep.subr.mxu0 0.0
    %213 = vmatpush1.msra.mxu0 0.0
    %214 = vmatprep.subr.mxu0 0.0
    %215 = vmatpush1.msra.mxu0 0.0
    %216 = vmatprep.subr.mxu0 0.0
    %217 = vmatpush1.msra.mxu0 0.0
    %218 = vmatprep.subr.mxu0 0.0
    %219 = vmatpush1.msra.mxu0 0.0
    %220 = vmatprep.subr.mxu0 0.0
    %221 = vmatpush1.msra.mxu0 0.0
    %222 = vmatprep.subr.mxu0 0.0
    %223 = vmatpush1.msra.mxu0 0.0
    %224 = vmatprep.subr.mxu0 0.0
    %225 = vmatpush1.msra.mxu0 0.0
    %226 = vmatprep.subr.mxu0 0.0
    %227 = vmatpush1.msra.mxu0 0.0
    %228 = vmatprep.subr.mxu0 0.0
    %229 = vmatpush1.msra.mxu0 0.0
    %230 = vmatprep.subr.mxu0 0.0
    %231 = vmatpush1.msra.mxu0 0.0
    %232 = vmatprep.subr.mxu0 0.0
    %233 = vmatpush1.msra.mxu0 0.0
    %234 = vmatprep.subr.mxu0 0.0
    %235 = vmatpush1.msra.mxu0 0.0
    %236 = vmatprep.subr.mxu0 0.0
    %237 = vmatpush1.msra.mxu0 0.0
    %238 = vmatprep.subr.mxu0 0.0
    %239 = vmatpush1.msra.mxu0 0.0
    %240 = vmatprep.subr.mxu0 0.0
    %241 = vmatpush1.msra.mxu0 0.0
    %242 = vmatprep.subr.mxu0 0.0
    %243 = vmatpush1.msra.mxu0 0.0
    %244 = vmatprep.subr.mxu0 0.0
    %245 = vmatpush1.msra.mxu0 0.0
    %246 = vmatprep.subr.mxu0 0.0
    %247 = vmatpush1.msra.mxu0 0.0
    %248 = vmatprep.subr.mxu0 0.0
    %249 = vmatpush1.msra.mxu0 0.0
    %250 = vmatprep.subr.mxu0 0.0
    %251 = vmatpush1.msra.mxu0 0.0
    %252 = vmatprep.subr.mxu0 0.0
    %253 = vmatpush1.msra.mxu0 0.0
    %254 = vmatprep.subr.mxu0 0.0
    %255 = vmatpush1.msra.mxu0 0.0
    %256 = vmatprep.subr.mxu0 0.0
    %257 = vmatpush1.msra.mxu0 0.0
    %258 = vmatprep.mubr.f32.mxu0 0.0
    %259 = vmatmul.mubr.f32.gmra.mrb[0].mxu0 %v171
    %v260 = vpop.f32.mrb[0].mxu0
    %v261 = vadd.f32 %v152, %v260
    %v262 = vpop.f32.mrb[0].mxu0
    %v263 = vadd.f32 %v156, %v262
    %264 = vmatprep.mubr.f32.mxu0 0.0
    %265 = vmatmul.mubr.f32.gmra.mrb[0].mxu0 %v174
    %v266 = vpop.f32.mrb[0].mxu0
    %v267 = vadd.f32 %v152, %v266
    %v268 = vpop.f32.mrb[0].mxu0
    %v269 = vadd.f32 %v156, %v268
    %270 = vmatprep.mubr.f32.mxu0 0.0
    %271 = vmatmul.mubr.f32.gmra.mrb[0].mxu0 %v177
    %v272 = vpop.f32.mrb[0].mxu0
    %v273 = vadd.f32 %v152, %v272
    %v274 = vpop.f32.mrb[0].mxu0
    %v275 = vadd.f32 %v156, %v274
    %276 = vmatprep.mubr.f32.mxu0 0.0
    %277 = vmatmul.mubr.f32.gmra.mrb[0].mxu0 %v180
    %v278 = vpop.f32.mrb[0].mxu0
    %v279 = vadd.f32 %v152, %v278
    %v280 = vpop.f32.mrb[0].mxu0
    %v281 = vadd.f32 %v156, %v280
    %282 = vmatprep.mubr.f32.mxu0 0.0
    %283 = vmatmul.mubr.f32.gmra.mrb[0].mxu0 %v183
    %v284 = vpop.f32.mrb[0].mxu0
    %v285 = vadd.f32 %v152, %v284
    %v286 = vpop.f32.mrb[0].mxu0
    %v287 = vadd.f32 %v156, %v286
    %288 = vmatprep.mubr.f32.mxu0 0.0
    %289 = vmatmul.mubr.f32.gmra.mrb[0].mxu0 %v186
    %v290 = vpop.f32.mrb[0].mxu0
    %v291 = vadd.f32 %v152, %v290
    %v292 = vpop.f32.mrb[0].mxu0
    %v293 = vadd.f32 %v156, %v292
    %294 = vmatprep.mubr.f32.mxu0 0.0
    %295 = vmatmul.mubr.f32.gmra.mrb[0].mxu0 %v189
    %v296 = vpop.f32.mrb[0].mxu0
    %v297 = vadd.f32 %v152, %v296
    %v298 = vpop.f32.mrb[0].mxu0
    %v299 = vadd.f32 %v156, %v298
    %300 = vmatprep.mubr.f32.mxu0 0.0
    %301 = vmatmul.mubr.f32.gmra.mrb[0].mxu0 %v192
    %v302 = vpop.f32.mrb[0].mxu0
    %v303 = vadd.f32 %v152, %v302
    %v304 = vpop.f32.mrb[0].mxu0
    %v305 = vadd.f32 %v156, %v304
    %306 = vdwg.mxu0
    %307 = vmatprep.subr.mxu0 %v142
    %308 = vmatpush1.msra.mxu0 %v141
    %309 = vmatprep.subr.mxu0 %v146
    %310 = vmatpush1.msra.mxu0 %v145
    %311 = vmatprep.subr.mxu0 0.0
    %312 = vmatpush1.msra.mxu0 0.0
    %313 = vmatprep.subr.mxu0 0.0
    %314 = vmatpush1.msra.mxu0 0.0
    %315 = vmatprep.subr.mxu0 0.0
    %316 = vmatpush1.msra.mxu0 0.0
    %317 = vmatprep.subr.mxu0 0.0
    %318 = vmatpush1.msra.mxu0 0.0
    %319 = vmatprep.subr.mxu0 0.0
    %320 = vmatpush1.msra.mxu0 0.0
    %321 = vmatprep.subr.mxu0 0.0
    %322 = vmatpush1.msra.mxu0 0.0
    %323 = vmatprep.subr.mxu0 0.0
    %324 = vmatpush1.msra.mxu0 0.0
    %325 = vmatprep.subr.mxu0 0.0
    %326 = vmatpush1.msra.mxu0 0.0
    %327 = vmatprep.subr.mxu0 0.0
    %328 = vmatpush1.msra.mxu0 0.0
    %329 = vmatprep.subr.mxu0 0.0
    %330 = vmatpush1.msra.mxu0 0.0
    %331 = vmatprep.subr.mxu0 0.0
    %332 = vmatpush1.msra.mxu0 0.0
    %333 = vmatprep.subr.mxu0 0.0
    %334 = vmatpush1.msra.mxu0 0.0
    %335 = vmatprep.subr.mxu0 0.0
    %336 = vmatpush1.msra.mxu0 0.0
    %337 = vmatprep.subr.mxu0 0.0
    %338 = vmatpush1.msra.mxu0 0.0
    %339 = vmatprep.subr.mxu0 0.0
    %340 = vmatpush1.msra.mxu0 0.0
    %341 = vmatprep.subr.mxu0 0.0
    %342 = vmatpush1.msra.mxu0 0.0
    %343 = vmatprep.subr.mxu0 0.0
    %344 = vmatpush1.msra.mxu0 0.0
    %345 = vmatprep.subr.mxu0 0.0
    %346 = vmatpush1.msra.mxu0 0.0
    %347 = vmatprep.subr.mxu0 0.0
    %348 = vmatpush1.msra.mxu0 0.0
    %349 = vmatprep.subr.mxu0 0.0
    %350 = vmatpush1.msra.mxu0 0.0
    %351 = vmatprep.subr.mxu0 0.0
    %352 = vmatpush1.msra.mxu0 0.0
    %353 = vmatprep.subr.mxu0 0.0
    %354 = vmatpush1.msra.mxu0 0.0
    %355 = vmatprep.subr.mxu0 0.0
    %356 = vmatpush1.msra.mxu0 0.0
    %357 = vmatprep.subr.mxu0 0.0
    %358 = vmatpush1.msra.mxu0 0.0
    %359 = vmatprep.subr.mxu0 0.0
    %360 = vmatpush1.msra.mxu0 0.0
    %361 = vmatprep.subr.mxu0 0.0
    %362 = vmatpush1.msra.mxu0 0.0
    %363 = vmatprep.subr.mxu0 0.0
    %364 = vmatpush1.msra.mxu0 0.0
    %365 = vmatprep.subr.mxu0 0.0
    %366 = vmatpush1.msra.mxu0 0.0
    %367 = vmatprep.subr.mxu0 0.0
    %368 = vmatpush1.msra.mxu0 0.0
    %369 = vmatprep.subr.mxu0 0.0
    %370 = vmatpush1.msra.mxu0 0.0
    %371 = vmatprep.mubr.f32.mxu0 0.0
    %372 = vmatmul.mubr.f32.gmra.mrb[0].mxu0 %v171
    %v373 = vpop.f32.mrb[0].mxu0
    %v374 = vadd.f32 %v160, %v373
    %v375 = vpop.f32.mrb[0].mxu0
    %v376 = vadd.f32 %v164, %v375
    %377 = vmatprep.mubr.f32.mxu0 0.0
    %378 = vmatmul.mubr.f32.gmra.mrb[0].mxu0 %v174
    %v379 = vpop.f32.mrb[0].mxu0
    %v380 = vadd.f32 %v160, %v379
    %v381 = vpop.f32.mrb[0].mxu0
    %v382 = vadd.f32 %v164, %v381
    %383 = vmatprep.mubr.f32.mxu0 0.0
    %384 = vmatmul.mubr.f32.gmra.mrb[0].mxu0 %v177
    %v385 = vpop.f32.mrb[0].mxu0
    %v386 = vadd.f32 %v160, %v385
    %v387 = vpop.f32.mrb[0].mxu0
    %v388 = vadd.f32 %v164, %v387
    %389 = vmatprep.mubr.f32.mxu0 0.0
    %390 = vmatmul.mubr.f32.gmra.mrb[0].mxu0 %v180
    %v391 = vpop.f32.mrb[0].mxu0
    %v392 = vadd.f32 %v160, %v391
    %v393 = vpop.f32.mrb[0].mxu0
    %v394 = vadd.f32 %v164, %v393
    %395 = vmatprep.mubr.f32.mxu0 0.0
    %396 = vmatmul.mubr.f32.gmra.mrb[0].mxu0 %v183
    %v397 = vpop.f32.mrb[0].mxu0
    %v398 = vadd.f32 %v160, %v397
    %v399 = vpop.f32.mrb[0].mxu0
    %v400 = vadd.f32 %v164, %v399
    %401 = vmatprep.mubr.f32.mxu0 0.0
    %402 = vmatmul.mubr.f32.gmra.mrb[0].mxu0 %v186
    %v403 = vpop.f32.mrb[0].mxu0
    %v404 = vadd.f32 %v160, %v403
    %v405 = vpop.f32.mrb[0].mxu0
    %v406 = vadd.f32 %v164, %v405
    %407 = vmatprep.mubr.f32.mxu0 0.0
    %408 = vmatmul.mubr.f32.gmra.mrb[0].mxu0 %v189
    %v409 = vpop.f32.mrb[0].mxu0
    %v410 = vadd.f32 %v160, %v409
    %v411 = vpop.f32.mrb[0].mxu0
    %v412 = vadd.f32 %v164, %v411
    %413 = vmatprep.mubr.f32.mxu0 0.0
    %414 = vmatmul.mubr.f32.gmra.mrb[0].mxu0 %v192
    %v415 = vpop.f32.mrb[0].mxu0
    %v416 = vadd.f32 %v160, %v415
    %v417 = vpop.f32.mrb[0].mxu0
    %v418 = vadd.f32 %v164, %v417
    %419 = vdwg.mxu0
    %420 = vst [vmem:[#allocation2] sm:$0xff] %v261
    %421 = vst [vmem:[#allocation2 + $0x8] sm:$0xff] %v263
    %422 = vst [vmem:[#allocation2 + $0x10] sm:$0xff] %v374
    %423 = vst [vmem:[#allocation2 + $0x18] sm:$0xff] %v376
    %424 = vst [vmem:[#allocation2 + $0x20] sm:$0xff] %v267
    %425 = vst [vmem:[#allocation2 + $0x28] sm:$0xff] %v269
    %426 = vst [vmem:[#allocation2 + $0x30] sm:$0xff] %v380
    %427 = vst [vmem:[#allocation2 + $0x38] sm:$0xff] %v382
    %428 = vst [vmem:[#allocation2 + $0x40] sm:$0xff] %v273
    %429 = vst [vmem:[#allocation2 + $0x48] sm:$0xff] %v275
    %430 = vst [vmem:[#allocation2 + $0x50] sm:$0xff] %v386
    %431 = vst [vmem:[#allocation2 + $0x58] sm:$0xff] %v388
    %432 = vst [vmem:[#allocation2 + $0x60] sm:$0xff] %v279
    %433 = vst [vmem:[#allocation2 + $0x68] sm:$0xff] %v281
    %434 = vst [vmem:[#allocation2 + $0x70] sm:$0xff] %v392
    %435 = vst [vmem:[#allocation2 + $0x78] sm:$0xff] %v394
    %436 = vst [vmem:[#allocation2 + $0x80] sm:$0xff] %v285
    %437 = vst [vmem:[#allocation2 + $0x88] sm:$0xff] %v287
    %438 = vst [vmem:[#allocation2 + $0x90] sm:$0xff] %v398
    %439 = vst [vmem:[#allocation2 + $0x98] sm:$0xff] %v400
    %440 = vst [vmem:[#allocation2 + $0xa0] sm:$0xff] %v291
    %441 = vst [vmem:[#allocation2 + $0xa8] sm:$0xff] %v293
    %442 = vst [vmem:[#allocation2 + $0xb0] sm:$0xff] %v404
    %443 = vst [vmem:[#allocation2 + $0xb8] sm:$0xff] %v406
    %444 = vst [vmem:[#allocation2 + $0xc0] sm:$0xff] %v297
    %445 = vst [vmem:[#allocation2 + $0xc8] sm:$0xff] %v299
    %446 = vst [vmem:[#allocation2 + $0xd0] sm:$0xff] %v410
    %447 = vst [vmem:[#allocation2 + $0xd8] sm:$0xff] %v412
    %448 = vst [vmem:[#allocation2 + $0xe0] sm:$0xff] %v303
    %449 = vst [vmem:[#allocation2 + $0xe8] sm:$0xff] %v305
    %450 = vst [vmem:[#allocation2 + $0xf0] sm:$0xff] %v416
    %451 = vst [vmem:[#allocation2 + $0xf8] sm:$0xff] %v418
    %v452 = vld [vmem:[#allocation8] sm:$0xff]
    %v453 = vld [vmem:[#allocation8 + $0x8] sm:$0xff]
    %v454 = vld [vmem:[#allocation8 + $0x10] sm:$0xff]
    %v455 = vld [vmem:[#allocation8 + $0x18] sm:$0xff]
    %v456 = vld [vmem:[#allocation8 + $0x20] sm:$0xff]
    %v457 = vld [vmem:[#allocation8 + $0x28] sm:$0xff]
    %v458 = vld [vmem:[#allocation8 + $0x30] sm:$0xff]
    %v459 = vld [vmem:[#allocation8 + $0x38] sm:$0xff]
    %v460 = vld [vmem:[#allocation11] sm:$0xff]
    %v461 = vld [vmem:[#allocation11 + $0x8] sm:$0xff]
    %v462 = vld [vmem:[#allocation11 + $0x10] sm:$0xff]
    %v463 = vld [vmem:[#allocation11 + $0x18] sm:$0xff]
    %v464 = vld [vmem:[#allocation11 + $0x20] sm:$0xff]
    %v465 = vld [vmem:[#allocation11 + $0x28] sm:$0xff]
    %v466 = vld [vmem:[#allocation11 + $0x30] sm:$0xff]
    %v467 = vld [vmem:[#allocation11 + $0x38] sm:$0xff]
    %v468 = vld [vmem:[%s5] sm:$0xf]
    %v470 = vlaneseq
    %v471 = vshrl.u32 %v470, 7
    %v472 = vsub.s32 0, %v471
    %v473 = vrot.slane %v468, %v472
    %v474 = vlaneseq
    %v475 = vshrl.u32 %v474, 7
    %v476 = vsub.s32 1, %v475
    %v477 = vrot.slane %v468, %v476
    %v478 = vlaneseq
    %v479 = vshrl.u32 %v478, 7
    %v480 = vsub.s32 2, %v479
    %v481 = vrot.slane %v468, %v480
    %v482 = vlaneseq
    %v483 = vshrl.u32 %v482, 7
    %v484 = vsub.s32 3, %v483
    %v485 = vrot.slane %v468, %v484
    %v491 = vsel %vm169, %v452, 0
    %v494 = vsel %vm169, %v453, 0
    %v497 = vsel %vm169, %v454, 0
    %v500 = vsel %vm169, %v455, 0
    %v503 = vsel %vm169, %v456, 0
    %v506 = vsel %vm169, %v457, 0
    %v509 = vsel %vm169, %v458, 0
    %v512 = vsel %vm169, %v459, 0
    %514 = vmatprep.subr.mxu0 %v461
    %515 = vmatpush1.msra.mxu0 %v460
    %516 = vmatprep.subr.mxu0 %v465
    %517 = vmatpush1.msra.mxu0 %v464
    %518 = vmatprep.subr.mxu0 0.0
    %519 = vmatpush1.msra.mxu0 0.0
    %520 = vmatprep.subr.mxu0 0.0
    %521 = vmatpush1.msra.mxu0 0.0
    %522 = vmatprep.subr.mxu0 0.0
    %523 = vmatpush1.msra.mxu0 0.0
    %524 = vmatprep.subr.mxu0 0.0
    %525 = vmatpush1.msra.mxu0 0.0
    %526 = vmatprep.subr.mxu0 0.0
    %527 = vmatpush1.msra.mxu0 0.0
    %528 = vmatprep.subr.mxu0 0.0
    %529 = vmatpush1.msra.mxu0 0.0
    %530 = vmatprep.subr.mxu0 0.0
    %531 = vmatpush1.msra.mxu0 0.0
    %532 = vmatprep.subr.mxu0 0.0
    %533 = vmatpush1.msra.mxu0 0.0
    %534 = vmatprep.subr.mxu0 0.0
    %535 = vmatpush1.msra.mxu0 0.0
    %536 = vmatprep.subr.mxu0 0.0
    %537 = vmatpush1.msra.mxu0 0.0
    %538 = vmatprep.subr.mxu0 0.0
    %539 = vmatpush1.msra.mxu0 0.0
    %540 = vmatprep.subr.mxu0 0.0
    %541 = vmatpush1.msra.mxu0 0.0
    %542 = vmatprep.subr.mxu0 0.0
    %543 = vmatpush1.msra.mxu0 0.0
    %544 = vmatprep.subr.mxu0 0.0
    %545 = vmatpush1.msra.mxu0 0.0
    %546 = vmatprep.subr.mxu0 0.0
    %547 = vmatpush1.msra.mxu0 0.0
    %548 = vmatprep.subr.mxu0 0.0
    %549 = vmatpush1.msra.mxu0 0.0
    %550 = vmatprep.subr.mxu0 0.0
    %551 = vmatpush1.msra.mxu0 0.0
    %552 = vmatprep.subr.mxu0 0.0
    %553 = vmatpush1.msra.mxu0 0.0
    %554 = vmatprep.subr.mxu0 0.0
    %555 = vmatpush1.msra.mxu0 0.0
    %556 = vmatprep.subr.mxu0 0.0
    %557 = vmatpush1.msra.mxu0 0.0
    %558 = vmatprep.subr.mxu0 0.0
    %559 = vmatpush1.msra.mxu0 0.0
    %560 = vmatprep.subr.mxu0 0.0
    %561 = vmatpush1.msra.mxu0 0.0
    %562 = vmatprep.subr.mxu0 0.0
    %563 = vmatpush1.msra.mxu0 0.0
    %564 = vmatprep.subr.mxu0 0.0
    %565 = vmatpush1.msra.mxu0 0.0
    %566 = vmatprep.subr.mxu0 0.0
    %567 = vmatpush1.msra.mxu0 0.0
    %568 = vmatprep.subr.mxu0 0.0
    %569 = vmatpush1.msra.mxu0 0.0
    %570 = vmatprep.subr.mxu0 0.0
    %571 = vmatpush1.msra.mxu0 0.0
    %572 = vmatprep.subr.mxu0 0.0
    %573 = vmatpush1.msra.mxu0 0.0
    %574 = vmatprep.subr.mxu0 0.0
    %575 = vmatpush1.msra.mxu0 0.0
    %576 = vmatprep.subr.mxu0 0.0
    %577 = vmatpush1.msra.mxu0 0.0
    %578 = vmatprep.mubr.f32.mxu0 0.0
    %579 = vmatmul.mubr.f32.gmra.mrb[0].mxu0 %v491
    %v580 = vpop.f32.mrb[0].mxu0
    %v581 = vadd.f32 %v473, %v580
    %v582 = vpop.f32.mrb[0].mxu0
    %v583 = vadd.f32 %v477, %v582
    %584 = vmatprep.mubr.f32.mxu0 0.0
    %585 = vmatmul.mubr.f32.gmra.mrb[0].mxu0 %v494
    %v586 = vpop.f32.mrb[0].mxu0
    %v587 = vadd.f32 %v473, %v586
    %v588 = vpop.f32.mrb[0].mxu0
    %v589 = vadd.f32 %v477, %v588
    %590 = vmatprep.mubr.f32.mxu0 0.0
    %591 = vmatmul.mubr.f32.gmra.mrb[0].mxu0 %v497
    %v592 = vpop.f32.mrb[0].mxu0
    %v593 = vadd.f32 %v473, %v592
    %v594 = vpop.f32.mrb[0].mxu0
    %v595 = vadd.f32 %v477, %v594
    %596 = vmatprep.mubr.f32.mxu0 0.0
    %597 = vmatmul.mubr.f32.gmra.mrb[0].mxu0 %v500
    %v598 = vpop.f32.mrb[0].mxu0
    %v599 = vadd.f32 %v473, %v598
    %v600 = vpop.f32.mrb[0].mxu0
    %v601 = vadd.f32 %v477, %v600
    %602 = vmatprep.mubr.f32.mxu0 0.0
    %603 = vmatmul.mubr.f32.gmra.mrb[0].mxu0 %v503
    %v604 = vpop.f32.mrb[0].mxu0
    %v605 = vadd.f32 %v473, %v604
    %v606 = vpop.f32.mrb[0].mxu0
    %v607 = vadd.f32 %v477, %v606
    %608 = vmatprep.mubr.f32.mxu0 0.0
    %609 = vmatmul.mubr.f32.gmra.mrb[0].mxu0 %v506
    %v610 = vpop.f32.mrb[0].mxu0
    %v611 = vadd.f32 %v473, %v610
    %v612 = vpop.f32.mrb[0].mxu0
    %v613 = vadd.f32 %v477, %v612
    %614 = vmatprep.mubr.f32.mxu0 0.0
    %615 = vmatmul.mubr.f32.gmra.mrb[0].mxu0 %v509
    %v616 = vpop.f32.mrb[0].mxu0
    %v617 = vadd.f32 %v473, %v616
    %v618 = vpop.f32.mrb[0].mxu0
    %v619 = vadd.f32 %v477, %v618
    %620 = vmatprep.mubr.f32.mxu0 0.0
    %621 = vmatmul.mubr.f32.gmra.mrb[0].mxu0 %v512
    %v622 = vpop.f32.mrb[0].mxu0
    %v623 = vadd.f32 %v473, %v622
    %v624 = vpop.f32.mrb[0].mxu0
    %v625 = vadd.f32 %v477, %v624
    %626 = vdwg.mxu0
    %627 = vmatprep.subr.mxu0 %v463
    %628 = vmatpush1.msra.mxu0 %v462
    %629 = vmatprep.subr.mxu0 %v467
    %630 = vmatpush1.msra.mxu0 %v466
    %631 = vmatprep.subr.mxu0 0.0
    %632 = vmatpush1.msra.mxu0 0.0
    %633 = vmatprep.subr.mxu0 0.0
    %634 = vmatpush1.msra.mxu0 0.0
    %635 = vmatprep.subr.mxu0 0.0
    %636 = vmatpush1.msra.mxu0 0.0
    %637 = vmatprep.subr.mxu0 0.0
    %638 = vmatpush1.msra.mxu0 0.0
    %639 = vmatprep.subr.mxu0 0.0
    %640 = vmatpush1.msra.mxu0 0.0
    %641 = vmatprep.subr.mxu0 0.0
    %642 = vmatpush1.msra.mxu0 0.0
    %643 = vmatprep.subr.mxu0 0.0
    %644 = vmatpush1.msra.mxu0 0.0
    %645 = vmatprep.subr.mxu0 0.0
    %646 = vmatpush1.msra.mxu0 0.0
    %647 = vmatprep.subr.mxu0 0.0
    %648 = vmatpush1.msra.mxu0 0.0
    %649 = vmatprep.subr.mxu0 0.0
    %650 = vmatpush1.msra.mxu0 0.0
    %651 = vmatprep.subr.mxu0 0.0
    %652 = vmatpush1.msra.mxu0 0.0
    %653 = vmatprep.subr.mxu0 0.0
    %654 = vmatpush1.msra.mxu0 0.0
    %655 = vmatprep.subr.mxu0 0.0
    %656 = vmatpush1.msra.mxu0 0.0
    %657 = vmatprep.subr.mxu0 0.0
    %658 = vmatpush1.msra.mxu0 0.0
    %659 = vmatprep.subr.mxu0 0.0
    %660 = vmatpush1.msra.mxu0 0.0
    %661 = vmatprep.subr.mxu0 0.0
    %662 = vmatpush1.msra.mxu0 0.0
    %663 = vmatprep.subr.mxu0 0.0
    %664 = vmatpush1.msra.mxu0 0.0
    %665 = vmatprep.subr.mxu0 0.0
    %666 = vmatpush1.msra.mxu0 0.0
    %667 = vmatprep.subr.mxu0 0.0
    %668 = vmatpush1.msra.mxu0 0.0
    %669 = vmatprep.subr.mxu0 0.0
    %670 = vmatpush1.msra.mxu0 0.0
    %671 = vmatprep.subr.mxu0 0.0
    %672 = vmatpush1.msra.mxu0 0.0
    %673 = vmatprep.subr.mxu0 0.0
    %674 = vmatpush1.msra.mxu0 0.0
    %675 = vmatprep.subr.mxu0 0.0
    %676 = vmatpush1.msra.mxu0 0.0
    %677 = vmatprep.subr.mxu0 0.0
    %678 = vmatpush1.msra.mxu0 0.0
    %679 = vmatprep.subr.mxu0 0.0
    %680 = vmatpush1.msra.mxu0 0.0
    %681 = vmatprep.subr.mxu0 0.0
    %682 = vmatpush1.msra.mxu0 0.0
    %683 = vmatprep.subr.mxu0 0.0
    %684 = vmatpush1.msra.mxu0 0.0
    %685 = vmatprep.subr.mxu0 0.0
    %686 = vmatpush1.msra.mxu0 0.0
    %687 = vmatprep.subr.mxu0 0.0
    %688 = vmatpush1.msra.mxu0 0.0
    %689 = vmatprep.subr.mxu0 0.0
    %690 = vmatpush1.msra.mxu0 0.0
    %691 = vmatprep.mubr.f32.mxu0 0.0
    %692 = vmatmul.mubr.f32.gmra.mrb[0].mxu0 %v491
    %v693 = vpop.f32.mrb[0].mxu0
    %v694 = vadd.f32 %v481, %v693
    %v695 = vpop.f32.mrb[0].mxu0
    %v696 = vadd.f32 %v485, %v695
    %697 = vmatprep.mubr.f32.mxu0 0.0
    %698 = vmatmul.mubr.f32.gmra.mrb[0].mxu0 %v494
    %v699 = vpop.f32.mrb[0].mxu0
    %v700 = vadd.f32 %v481, %v699
    %v701 = vpop.f32.mrb[0].mxu0
    %v702 = vadd.f32 %v485, %v701
    %703 = vmatprep.mubr.f32.mxu0 0.0
    %704 = vmatmul.mubr.f32.gmra.mrb[0].mxu0 %v497
    %v705 = vpop.f32.mrb[0].mxu0
    %v706 = vadd.f32 %v481, %v705
    %v707 = vpop.f32.mrb[0].mxu0
    %v708 = vadd.f32 %v485, %v707
    %709 = vmatprep.mubr.f32.mxu0 0.0
    %710 = vmatmul.mubr.f32.gmra.mrb[0].mxu0 %v500
    %v711 = vpop.f32.mrb[0].mxu0
    %v712 = vadd.f32 %v481, %v711
    %v713 = vpop.f32.mrb[0].mxu0
    %v714 = vadd.f32 %v485, %v713
    %715 = vmatprep.mubr.f32.mxu0 0.0
    %716 = vmatmul.mubr.f32.gmra.mrb[0].mxu0 %v503
    %v717 = vpop.f32.mrb[0].mxu0
    %v718 = vadd.f32 %v481, %v717
    %v719 = vpop.f32.mrb[0].mxu0
    %v720 = vadd.f32 %v485, %v719
    %721 = vmatprep.mubr.f32.mxu0 0.0
    %722 = vmatmul.mubr.f32.gmra.mrb[0].mxu0 %v506
    %v723 = vpop.f32.mrb[0].mxu0
    %v724 = vadd.f32 %v481, %v723
    %v725 = vpop.f32.mrb[0].mxu0
    %v726 = vadd.f32 %v485, %v725
    %727 = vmatprep.mubr.f32.mxu0 0.0
    %728 = vmatmul.mubr.f32.gmra.mrb[0].mxu0 %v509
    %v729 = vpop.f32.mrb[0].mxu0
    %v730 = vadd.f32 %v481, %v729
    %v731 = vpop.f32.mrb[0].mxu0
    %v732 = vadd.f32 %v485, %v731
    %733 = vmatprep.mubr.f32.mxu0 0.0
    %734 = vmatmul.mubr.f32.gmra.mrb[0].mxu0 %v512
    %v735 = vpop.f32.mrb[0].mxu0
    %v736 = vadd.f32 %v481, %v735
    %v737 = vpop.f32.mrb[0].mxu0
    %v738 = vadd.f32 %v485, %v737
    %739 = vdwg.mxu0
    %s740 = scalar_lea.vmem [#allocation2], 256
    %741 = vst [vmem:[%s740] sm:$0xff] %v581
    %742 = vst [vmem:[%s740 + $0x8] sm:$0xff] %v583
    %743 = vst [vmem:[%s740 + $0x10] sm:$0xff] %v694
    %744 = vst [vmem:[%s740 + $0x18] sm:$0xff] %v696
    %745 = vst [vmem:[%s740 + $0x20] sm:$0xff] %v587
    %746 = vst [vmem:[%s740 + $0x28] sm:$0xff] %v589
    %747 = vst [vmem:[%s740 + $0x30] sm:$0xff] %v700
    %748 = vst [vmem:[%s740 + $0x38] sm:$0xff] %v702
    %749 = vst [vmem:[%s740 + $0x40] sm:$0xff] %v593
    %750 = vst [vmem:[%s740 + $0x48] sm:$0xff] %v595
    %751 = vst [vmem:[%s740 + $0x50] sm:$0xff] %v706
    %752 = vst [vmem:[%s740 + $0x58] sm:$0xff] %v708
    %753 = vst [vmem:[%s740 + $0x60] sm:$0xff] %v599
    %754 = vst [vmem:[%s740 + $0x68] sm:$0xff] %v601
    %755 = vst [vmem:[%s740 + $0x70] sm:$0xff] %v712
    %756 = vst [vmem:[%s740 + $0x78] sm:$0xff] %v714
    %757 = vst [vmem:[%s740 + $0x80] sm:$0xff] %v605
    %758 = vst [vmem:[%s740 + $0x88] sm:$0xff] %v607
    %759 = vst [vmem:[%s740 + $0x90] sm:$0xff] %v718
    %760 = vst [vmem:[%s740 + $0x98] sm:$0xff] %v720
    %761 = vst [vmem:[%s740 + $0xa0] sm:$0xff] %v611
    %762 = vst [vmem:[%s740 + $0xa8] sm:$0xff] %v613
    %763 = vst [vmem:[%s740 + $0xb0] sm:$0xff] %v724
    %764 = vst [vmem:[%s740 + $0xb8] sm:$0xff] %v726
    %765 = vst [vmem:[%s740 + $0xc0] sm:$0xff] %v617
    %766 = vst [vmem:[%s740 + $0xc8] sm:$0xff] %v619
    %767 = vst [vmem:[%s740 + $0xd0] sm:$0xff] %v730
    %768 = vst [vmem:[%s740 + $0xd8] sm:$0xff] %v732
    %769 = vst [vmem:[%s740 + $0xe0] sm:$0xff] %v623
    %770 = vst [vmem:[%s740 + $0xe8] sm:$0xff] %v625
    %771 = vst [vmem:[%s740 + $0xf0] sm:$0xff] %v736
    %772 = vst [vmem:[%s740 + $0xf8] sm:$0xff] %v738
    %v773 = vld [vmem:[#allocation13] sm:$0xff]
    %v774 = vld [vmem:[#allocation13 + $0x8] sm:$0xff]
    %v775 = vld [vmem:[#allocation13 + $0x10] sm:$0xff]
    %v776 = vld [vmem:[#allocation13 + $0x18] sm:$0xff]
    %v777 = vld [vmem:[#allocation13 + $0x20] sm:$0xff]
    %v778 = vld [vmem:[#allocation13 + $0x28] sm:$0xff]
    %v779 = vld [vmem:[#allocation13 + $0x30] sm:$0xff]
    %v780 = vld [vmem:[#allocation13 + $0x38] sm:$0xff]
    %v781 = vld [vmem:[#allocation13 + $0x40] sm:$0xff]
    %v782 = vld [vmem:[#allocation13 + $0x48] sm:$0xff]
    %v783 = vld [vmem:[#allocation13 + $0x50] sm:$0xff]
    %v784 = vld [vmem:[#allocation13 + $0x58] sm:$0xff]
    %v785 = vld [vmem:[#allocation13 + $0x60] sm:$0xff]
    %v786 = vld [vmem:[#allocation13 + $0x68] sm:$0xff]
    %v787 = vld [vmem:[#allocation13 + $0x70] sm:$0xff]
    %v788 = vld [vmem:[#allocation13 + $0x78] sm:$0xff]
    %v789 = vld [vmem:[#allocation13 + $0x80] sm:$0xff]
    %v790 = vld [vmem:[#allocation13 + $0x88] sm:$0xff]
    %v791 = vld [vmem:[#allocation13 + $0x90] sm:$0xff]
    %v792 = vld [vmem:[#allocation13 + $0x98] sm:$0xff]
    %v793 = vld [vmem:[#allocation13 + $0xa0] sm:$0xff]
    %v794 = vld [vmem:[#allocation13 + $0xa8] sm:$0xff]
    %v795 = vld [vmem:[#allocation13 + $0xb0] sm:$0xff]
    %v796 = vld [vmem:[#allocation13 + $0xb8] sm:$0xff]
    %v797 = vld [vmem:[#allocation13 + $0xc0] sm:$0xff]
    %v798 = vld [vmem:[#allocation13 + $0xc8] sm:$0xff]
    %v799 = vld [vmem:[#allocation13 + $0xd0] sm:$0xff]
    %v800 = vld [vmem:[#allocation13 + $0xd8] sm:$0xff]
    %v801 = vld [vmem:[#allocation13 + $0xe0] sm:$0xff]
    %v802 = vld [vmem:[#allocation13 + $0xe8] sm:$0xff]
    %v803 = vld [vmem:[#allocation13 + $0xf0] sm:$0xff]
    %v804 = vld [vmem:[#allocation13 + $0xf8] sm:$0xff]
    %v805 = vld [vmem:[#allocation13 + $0x100] sm:$0xff]
    %v806 = vld [vmem:[#allocation13 + $0x108] sm:$0xff]
    %v807 = vld [vmem:[#allocation13 + $0x110] sm:$0xff]
    %v808 = vld [vmem:[#allocation13 + $0x118] sm:$0xff]
    %v809 = vld [vmem:[#allocation13 + $0x120] sm:$0xff]
    %v810 = vld [vmem:[#allocation13 + $0x128] sm:$0xff]
    %v811 = vld [vmem:[#allocation13 + $0x130] sm:$0xff]
    %v812 = vld [vmem:[#allocation13 + $0x138] sm:$0xff]
    %v813 = vld [vmem:[#allocation13 + $0x140] sm:$0xff]
    %v814 = vld [vmem:[#allocation13 + $0x148] sm:$0xff]
    %v815 = vld [vmem:[#allocation13 + $0x150] sm:$0xff]
    %v816 = vld [vmem:[#allocation13 + $0x158] sm:$0xff]
    %v817 = vld [vmem:[#allocation13 + $0x160] sm:$0xff]
    %v818 = vld [vmem:[#allocation13 + $0x168] sm:$0xff]
    %v819 = vld [vmem:[#allocation13 + $0x170] sm:$0xff]
    %v820 = vld [vmem:[#allocation13 + $0x178] sm:$0xff]
    %v821 = vld [vmem:[#allocation13 + $0x180] sm:$0xff]
    %v822 = vld [vmem:[#allocation13 + $0x188] sm:$0xff]
    %v823 = vld [vmem:[#allocation13 + $0x190] sm:$0xff]
    %v824 = vld [vmem:[#allocation13 + $0x198] sm:$0xff]
    %v825 = vld [vmem:[#allocation13 + $0x1a0] sm:$0xff]
    %v826 = vld [vmem:[#allocation13 + $0x1a8] sm:$0xff]
    %v827 = vld [vmem:[#allocation13 + $0x1b0] sm:$0xff]
    %v828 = vld [vmem:[#allocation13 + $0x1b8] sm:$0xff]
    %v829 = vld [vmem:[#allocation13 + $0x1c0] sm:$0xff]
    %v830 = vld [vmem:[#allocation13 + $0x1c8] sm:$0xff]
    %v831 = vld [vmem:[#allocation13 + $0x1d0] sm:$0xff]
    %v832 = vld [vmem:[#allocation13 + $0x1d8] sm:$0xff]
    %v833 = vld [vmem:[#allocation13 + $0x1e0] sm:$0xff]
    %v834 = vld [vmem:[#allocation13 + $0x1e8] sm:$0xff]
    %v835 = vld [vmem:[#allocation13 + $0x1f0] sm:$0xff]
    %v836 = vld [vmem:[#allocation13 + $0x1f8] sm:$0xff]
    %v837 = vld [vmem:[#allocation14] sm:$0xff]
    %v838 = vld [vmem:[#allocation14 + $0x8] sm:$0xff]
    %v839 = vld [vmem:[#allocation14 + $0x10] sm:$0xff]
    %v840 = vld [vmem:[#allocation14 + $0x18] sm:$0xff]
    %v841 = vld [vmem:[#allocation14 + $0x20] sm:$0xff]
    %v842 = vld [vmem:[#allocation14 + $0x28] sm:$0xff]
    %v843 = vld [vmem:[#allocation14 + $0x30] sm:$0xff]
    %v844 = vld [vmem:[#allocation14 + $0x38] sm:$0xff]
    %v845 = vld [vmem:[#allocation14 + $0x40] sm:$0xff]
    %v846 = vld [vmem:[#allocation14 + $0x48] sm:$0xff]
    %v847 = vld [vmem:[#allocation14 + $0x50] sm:$0xff]
    %v848 = vld [vmem:[#allocation14 + $0x58] sm:$0xff]
    %v849 = vld [vmem:[#allocation14 + $0x60] sm:$0xff]
    %v850 = vld [vmem:[#allocation14 + $0x68] sm:$0xff]
    %v851 = vld [vmem:[#allocation14 + $0x70] sm:$0xff]
    %v852 = vld [vmem:[#allocation14 + $0x78] sm:$0xff]
    %v853 = vld [vmem:[#allocation14 + $0x80] sm:$0xff]
    %v854 = vld [vmem:[#allocation14 + $0x88] sm:$0xff]
    %v855 = vld [vmem:[#allocation14 + $0x90] sm:$0xff]
    %v856 = vld [vmem:[#allocation14 + $0x98] sm:$0xff]
    %v857 = vld [vmem:[#allocation14 + $0xa0] sm:$0xff]
    %v858 = vld [vmem:[#allocation14 + $0xa8] sm:$0xff]
    %v859 = vld [vmem:[#allocation14 + $0xb0] sm:$0xff]
    %v860 = vld [vmem:[#allocation14 + $0xb8] sm:$0xff]
    %v861 = vld [vmem:[#allocation14 + $0xc0] sm:$0xff]
    %v862 = vld [vmem:[#allocation14 + $0xc8] sm:$0xff]
    %v863 = vld [vmem:[#allocation14 + $0xd0] sm:$0xff]
    %v864 = vld [vmem:[#allocation14 + $0xd8] sm:$0xff]
    %v865 = vld [vmem:[#allocation14 + $0xe0] sm:$0xff]
    %v866 = vld [vmem:[#allocation14 + $0xe8] sm:$0xff]
    %v867 = vld [vmem:[#allocation14 + $0xf0] sm:$0xff]
    %v868 = vld [vmem:[#allocation14 + $0xf8] sm:$0xff]
    %v869 = vld [vmem:[#allocation14 + $0x100] sm:$0xff]
    %v870 = vld [vmem:[#allocation14 + $0x108] sm:$0xff]
    %v871 = vld [vmem:[#allocation14 + $0x110] sm:$0xff]
    %v872 = vld [vmem:[#allocation14 + $0x118] sm:$0xff]
    %v873 = vld [vmem:[#allocation14 + $0x120] sm:$0xff]
    %v874 = vld [vmem:[#allocation14 + $0x128] sm:$0xff]
    %v875 = vld [vmem:[#allocation14 + $0x130] sm:$0xff]
    %v876 = vld [vmem:[#allocation14 + $0x138] sm:$0xff]
    %v877 = vld [vmem:[#allocation14 + $0x140] sm:$0xff]
    %v878 = vld [vmem:[#allocation14 + $0x148] sm:$0xff]
    %v879 = vld [vmem:[#allocation14 + $0x150] sm:$0xff]
    %v880 = vld [vmem:[#allocation14 + $0x158] sm:$0xff]
    %v881 = vld [vmem:[#allocation14 + $0x160] sm:$0xff]
    %v882 = vld [vmem:[#allocation14 + $0x168] sm:$0xff]
    %v883 = vld [vmem:[#allocation14 + $0x170] sm:$0xff]
    %v884 = vld [vmem:[#allocation14 + $0x178] sm:$0xff]
    %v885 = vld [vmem:[#allocation14 + $0x180] sm:$0xff]
    %v886 = vld [vmem:[#allocation14 + $0x188] sm:$0xff]
    %v887 = vld [vmem:[#allocation14 + $0x190] sm:$0xff]
    %v888 = vld [vmem:[#allocation14 + $0x198] sm:$0xff]
    %v889 = vld [vmem:[#allocation14 + $0x1a0] sm:$0xff]
    %v890 = vld [vmem:[#allocation14 + $0x1a8] sm:$0xff]
    %v891 = vld [vmem:[#allocation14 + $0x1b0] sm:$0xff]
    %v892 = vld [vmem:[#allocation14 + $0x1b8] sm:$0xff]
    %v893 = vld [vmem:[#allocation14 + $0x1c0] sm:$0xff]
    %v894 = vld [vmem:[#allocation14 + $0x1c8] sm:$0xff]
    %v895 = vld [vmem:[#allocation14 + $0x1d0] sm:$0xff]
    %v896 = vld [vmem:[#allocation14 + $0x1d8] sm:$0xff]
    %v897 = vld [vmem:[#allocation14 + $0x1e0] sm:$0xff]
    %v898 = vld [vmem:[#allocation14 + $0x1e8] sm:$0xff]
    %v899 = vld [vmem:[#allocation14 + $0x1f0] sm:$0xff]
    %v900 = vld [vmem:[#allocation14 + $0x1f8] sm:$0xff]
    %v901 = vld [vmem:[#allocation3] sm:$0xff]
    %v902 = vld [vmem:[#allocation3 + $0x8] sm:$0xff]
    %v903 = vld [vmem:[#allocation4] sm:$0xff]
    %v904 = vld [vmem:[#allocation4 + $0x8] sm:$0xff]
    %905 = vmatprep.subr.mxu0 %v774
    %906 = vmatpush1.msra.mxu0 %v773
    %907 = vmatprep.subr.mxu0 %v778
    %908 = vmatpush1.msra.mxu0 %v777
    %909 = vmatprep.subr.mxu0 %v782
    %910 = vmatpush1.msra.mxu0 %v781
    %911 = vmatprep.subr.mxu0 %v786
    %912 = vmatpush1.msra.mxu0 %v785
    %913 = vmatprep.subr.mxu0 %v790
    %914 = vmatpush1.msra.mxu0 %v789
    %915 = vmatprep.subr.mxu0 %v794
    %916 = vmatpush1.msra.mxu0 %v793
    %917 = vmatprep.subr.mxu0 %v798
    %918 = vmatpush1.msra.mxu0 %v797
    %919 = vmatprep.subr.mxu0 %v802
    %920 = vmatpush1.msra.mxu0 %v801
    %921 = vmatprep.subr.mxu0 %v806
    %922 = vmatpush1.msra.mxu0 %v805
    %923 = vmatprep.subr.mxu0 %v810
    %924 = vmatpush1.msra.mxu0 %v809
    %925 = vmatprep.subr.mxu0 %v814
    %926 = vmatpush1.msra.mxu0 %v813
    %927 = vmatprep.subr.mxu0 %v818
    %928 = vmatpush1.msra.mxu0 %v817
    %929 = vmatprep.subr.mxu0 %v822
    %930 = vmatpush1.msra.mxu0 %v821
    %931 = vmatprep.subr.mxu0 %v826
    %932 = vmatpush1.msra.mxu0 %v825
    %933 = vmatprep.subr.mxu0 %v830
    %934 = vmatpush1.msra.mxu0 %v829
    %935 = vmatprep.subr.mxu0 %v834
    %936 = vmatpush1.msra.mxu0 %v833
    %937 = vmatprep.subr.mxu0 0.0
    %938 = vmatpush1.msra.mxu0 0.0
    %939 = vmatprep.subr.mxu0 0.0
    %940 = vmatpush1.msra.mxu0 0.0
    %941 = vmatprep.subr.mxu0 0.0
    %942 = vmatpush1.msra.mxu0 0.0
    %943 = vmatprep.subr.mxu0 0.0
    %944 = vmatpush1.msra.mxu0 0.0
    %945 = vmatprep.subr.mxu0 0.0
    %946 = vmatpush1.msra.mxu0 0.0
    %947 = vmatprep.subr.mxu0 0.0
    %948 = vmatpush1.msra.mxu0 0.0
    %949 = vmatprep.subr.mxu0 0.0
    %950 = vmatpush1.msra.mxu0 0.0
    %951 = vmatprep.subr.mxu0 0.0
    %952 = vmatpush1.msra.mxu0 0.0
    %953 = vmatprep.subr.mxu0 0.0
    %954 = vmatpush1.msra.mxu0 0.0
    %955 = vmatprep.subr.mxu0 0.0
    %956 = vmatpush1.msra.mxu0 0.0
    %957 = vmatprep.subr.mxu0 0.0
    %958 = vmatpush1.msra.mxu0 0.0
    %959 = vmatprep.subr.mxu0 0.0
    %960 = vmatpush1.msra.mxu0 0.0
    %961 = vmatprep.subr.mxu0 0.0
    %962 = vmatpush1.msra.mxu0 0.0
    %963 = vmatprep.subr.mxu0 0.0
    %964 = vmatpush1.msra.mxu0 0.0
    %965 = vmatprep.subr.mxu0 0.0
    %966 = vmatpush1.msra.mxu0 0.0
    %967 = vmatprep.subr.mxu0 0.0
    %968 = vmatpush1.msra.mxu0 0.0
    %969 = vmatprep.mubr.f32.mxu0 0.0
    %970 = vmatmul.mubr.f32.gmra.mrb[0].mxu0 %v901
    %v971 = vpop.f32.mrb[0].mxu0
    %v972 = vadd.f32 0.0, %v971
    %v973 = vpop.f32.mrb[0].mxu0
    %v974 = vadd.f32 0.0, %v973
    %975 = vdwg.mxu0
    %976 = vmatprep.subr.mxu0 %v776
    %977 = vmatpush1.msra.mxu0 %v775
    %978 = vmatprep.subr.mxu0 %v780
    %979 = vmatpush1.msra.mxu0 %v779
    %980 = vmatprep.subr.mxu0 %v784
    %981 = vmatpush1.msra.mxu0 %v783
    %982 = vmatprep.subr.mxu0 %v788
    %983 = vmatpush1.msra.mxu0 %v787
    %984 = vmatprep.subr.mxu0 %v792
    %985 = vmatpush1.msra.mxu0 %v791
    %986 = vmatprep.subr.mxu0 %v796
    %987 = vmatpush1.msra.mxu0 %v795
    %988 = vmatprep.subr.mxu0 %v800
    %989 = vmatpush1.msra.mxu0 %v799
    %990 = vmatprep.subr.mxu0 %v804
    %991 = vmatpush1.msra.mxu0 %v803
    %992 = vmatprep.subr.mxu0 %v808
    %993 = vmatpush1.msra.mxu0 %v807
    %994 = vmatprep.subr.mxu0 %v812
    %995 = vmatpush1.msra.mxu0 %v811
    %996 = vmatprep.subr.mxu0 %v816
    %997 = vmatpush1.msra.mxu0 %v815
    %998 = vmatprep.subr.mxu0 %v820
    %999 = vmatpush1.msra.mxu0 %v819
    %1000 = vmatprep.subr.mxu0 %v824
    %1001 = vmatpush1.msra.mxu0 %v823
    %1002 = vmatprep.subr.mxu0 %v828
    %1003 = vmatpush1.msra.mxu0 %v827
    %1004 = vmatprep.subr.mxu0 %v832
    %1005 = vmatpush1.msra.mxu0 %v831
    %1006 = vmatprep.subr.mxu0 %v836
    %1007 = vmatpush1.msra.mxu0 %v835
    %1008 = vmatprep.subr.mxu0 0.0
    %1009 = vmatpush1.msra.mxu0 0.0
    %1010 = vmatprep.subr.mxu0 0.0
    %1011 = vmatpush1.msra.mxu0 0.0
    %1012 = vmatprep.subr.mxu0 0.0
    %1013 = vmatpush1.msra.mxu0 0.0
    %1014 = vmatprep.subr.mxu0 0.0
    %1015 = vmatpush1.msra.mxu0 0.0
    %1016 = vmatprep.subr.mxu0 0.0
    %1017 = vmatpush1.msra.mxu0 0.0
    %1018 = vmatprep.subr.mxu0 0.0
    %1019 = vmatpush1.msra.mxu0 0.0
    %1020 = vmatprep.subr.mxu0 0.0
    %1021 = vmatpush1.msra.mxu0 0.0
    %1022 = vmatprep.subr.mxu0 0.0
    %1023 = vmatpush1.msra.mxu0 0.0
    %1024 = vmatprep.subr.mxu0 0.0
    %1025 = vmatpush1.msra.mxu0 0.0
    %1026 = vmatprep.subr.mxu0 0.0
    %1027 = vmatpush1.msra.mxu0 0.0
    %1028 = vmatprep.subr.mxu0 0.0
    %1029 = vmatpush1.msra.mxu0 0.0
    %1030 = vmatprep.subr.mxu0 0.0
    %1031 = vmatpush1.msra.mxu0 0.0
    %1032 = vmatprep.subr.mxu0 0.0
    %1033 = vmatpush1.msra.mxu0 0.0
    %1034 = vmatprep.subr.mxu0 0.0
    %1035 = vmatpush1.msra.mxu0 0.0
    %1036 = vmatprep.subr.mxu0 0.0
    %1037 = vmatpush1.msra.mxu0 0.0
    %1038 = vmatprep.subr.mxu0 0.0
    %1039 = vmatpush1.msra.mxu0 0.0
    %1040 = vmatprep.mubr.f32.mxu0 0.0
    %1041 = vmatmul.mubr.f32.gmra.mrb[0].mxu0 %v901
    %v1042 = vpop.f32.mrb[0].mxu0
    %v1043 = vadd.f32 0.0, %v1042
    %v1044 = vpop.f32.mrb[0].mxu0
    %v1045 = vadd.f32 0.0, %v1044
    %1046 = vdwg.mxu0
    %1047 = vmatprep.subr.mxu0 %v838
    %1048 = vmatpush1.msra.mxu0 %v837
    %1049 = vmatprep.subr.mxu0 %v842
    %1050 = vmatpush1.msra.mxu0 %v841
    %1051 = vmatprep.subr.mxu0 %v846
    %1052 = vmatpush1.msra.mxu0 %v845
    %1053 = vmatprep.subr.mxu0 %v850
    %1054 = vmatpush1.msra.mxu0 %v849
    %1055 = vmatprep.subr.mxu0 %v854
    %1056 = vmatpush1.msra.mxu0 %v853
    %1057 = vmatprep.subr.mxu0 %v858
    %1058 = vmatpush1.msra.mxu0 %v857
    %1059 = vmatprep.subr.mxu0 %v862
    %1060 = vmatpush1.msra.mxu0 %v861
    %1061 = vmatprep.subr.mxu0 %v866
    %1062 = vmatpush1.msra.mxu0 %v865
    %1063 = vmatprep.subr.mxu0 %v870
    %1064 = vmatpush1.msra.mxu0 %v869
    %1065 = vmatprep.subr.mxu0 %v874
    %1066 = vmatpush1.msra.mxu0 %v873
    %1067 = vmatprep.subr.mxu0 %v878
    %1068 = vmatpush1.msra.mxu0 %v877
    %1069 = vmatprep.subr.mxu0 %v882
    %1070 = vmatpush1.msra.mxu0 %v881
    %1071 = vmatprep.subr.mxu0 %v886
    %1072 = vmatpush1.msra.mxu0 %v885
    %1073 = vmatprep.subr.mxu0 %v890
    %1074 = vmatpush1.msra.mxu0 %v889
    %1075 = vmatprep.subr.mxu0 %v894
    %1076 = vmatpush1.msra.mxu0 %v893
    %1077 = vmatprep.subr.mxu0 %v898
    %1078 = vmatpush1.msra.mxu0 %v897
    %1079 = vmatprep.subr.mxu0 0.0
    %1080 = vmatpush1.msra.mxu0 0.0
    %1081 = vmatprep.subr.mxu0 0.0
    %1082 = vmatpush1.msra.mxu0 0.0
    %1083 = vmatprep.subr.mxu0 0.0
    %1084 = vmatpush1.msra.mxu0 0.0
    %1085 = vmatprep.subr.mxu0 0.0
    %1086 = vmatpush1.msra.mxu0 0.0
    %1087 = vmatprep.subr.mxu0 0.0
    %1088 = vmatpush1.msra.mxu0 0.0
    %1089 = vmatprep.subr.mxu0 0.0
    %1090 = vmatpush1.msra.mxu0 0.0
    %1091 = vmatprep.subr.mxu0 0.0
    %1092 = vmatpush1.msra.mxu0 0.0
    %1093 = vmatprep.subr.mxu0 0.0
    %1094 = vmatpush1.msra.mxu0 0.0
    %1095 = vmatprep.subr.mxu0 0.0
    %1096 = vmatpush1.msra.mxu0 0.0
    %1097 = vmatprep.subr.mxu0 0.0
    %1098 = vmatpush1.msra.mxu0 0.0
    %1099 = vmatprep.subr.mxu0 0.0
    %1100 = vmatpush1.msra.mxu0 0.0
    %1101 = vmatprep.subr.mxu0 0.0
    %1102 = vmatpush1.msra.mxu0 0.0
    %1103 = vmatprep.subr.mxu0 0.0
    %1104 = vmatpush1.msra.mxu0 0.0
    %1105 = vmatprep.subr.mxu0 0.0
    %1106 = vmatpush1.msra.mxu0 0.0
    %1107 = vmatprep.subr.mxu0 0.0
    %1108 = vmatpush1.msra.mxu0 0.0
    %1109 = vmatprep.subr.mxu0 0.0
    %1110 = vmatpush1.msra.mxu0 0.0
    %1111 = vmatprep.mubr.f32.mxu0 0.0
    %1112 = vmatmul.mubr.f32.gmra.mrb[0].mxu0 %v902
    %v1113 = vpop.f32.mrb[0].mxu0
    %v1114 = vadd.f32 0.0, %v1113
    %v1115 = vpop.f32.mrb[0].mxu0
    %v1116 = vadd.f32 0.0, %v1115
    %1117 = vdwg.mxu0
    %1118 = vmatprep.subr.mxu0 %v840
    %1119 = vmatpush1.msra.mxu0 %v839
    %1120 = vmatprep.subr.mxu0 %v844
    %1121 = vmatpush1.msra.mxu0 %v843
    %1122 = vmatprep.subr.mxu0 %v848
    %1123 = vmatpush1.msra.mxu0 %v847
    %1124 = vmatprep.subr.mxu0 %v852
    %1125 = vmatpush1.msra.mxu0 %v851
    %1126 = vmatprep.subr.mxu0 %v856
    %1127 = vmatpush1.msra.mxu0 %v855
    %1128 = vmatprep.subr.mxu0 %v860
    %1129 = vmatpush1.msra.mxu0 %v859
    %1130 = vmatprep.subr.mxu0 %v864
    %1131 = vmatpush1.msra.mxu0 %v863
    %1132 = vmatprep.subr.mxu0 %v868
    %1133 = vmatpush1.msra.mxu0 %v867
    %1134 = vmatprep.subr.mxu0 %v872
    %1135 = vmatpush1.msra.mxu0 %v871
    %1136 = vmatprep.subr.mxu0 %v876
    %1137 = vmatpush1.msra.mxu0 %v875
    %1138 = vmatprep.subr.mxu0 %v880
    %1139 = vmatpush1.msra.mxu0 %v879
    %1140 = vmatprep.subr.mxu0 %v884
    %1141 = vmatpush1.msra.mxu0 %v883
    %1142 = vmatprep.subr.mxu0 %v888
    %1143 = vmatpush1.msra.mxu0 %v887
    %1144 = vmatprep.subr.mxu0 %v892
    %1145 = vmatpush1.msra.mxu0 %v891
    %1146 = vmatprep.subr.mxu0 %v896
    %1147 = vmatpush1.msra.mxu0 %v895
    %1148 = vmatprep.subr.mxu0 %v900
    %1149 = vmatpush1.msra.mxu0 %v899
    %1150 = vmatprep.subr.mxu0 0.0
    %1151 = vmatpush1.msra.mxu0 0.0
    %1152 = vmatprep.subr.mxu0 0.0
    %1153 = vmatpush1.msra.mxu0 0.0
    %1154 = vmatprep.subr.mxu0 0.0
    %1155 = vmatpush1.msra.mxu0 0.0
    %1156 = vmatprep.subr.mxu0 0.0
    %1157 = vmatpush1.msra.mxu0 0.0
    %1158 = vmatprep.subr.mxu0 0.0
    %1159 = vmatpush1.msra.mxu0 0.0
    %1160 = vmatprep.subr.mxu0 0.0
    %1161 = vmatpush1.msra.mxu0 0.0
    %1162 = vmatprep.subr.mxu0 0.0
    %1163 = vmatpush1.msra.mxu0 0.0
    %1164 = vmatprep.subr.mxu0 0.0
    %1165 = vmatpush1.msra.mxu0 0.0
    %1166 = vmatprep.subr.mxu0 0.0
    %1167 = vmatpush1.msra.mxu0 0.0
    %1168 = vmatprep.subr.mxu0 0.0
    %1169 = vmatpush1.msra.mxu0 0.0
    %1170 = vmatprep.subr.mxu0 0.0
    %1171 = vmatpush1.msra.mxu0 0.0
    %1172 = vmatprep.subr.mxu0 0.0
    %1173 = vmatpush1.msra.mxu0 0.0
    %1174 = vmatprep.subr.mxu0 0.0
    %1175 = vmatpush1.msra.mxu0 0.0
    %1176 = vmatprep.subr.mxu0 0.0
    %1177 = vmatpush1.msra.mxu0 0.0
    %1178 = vmatprep.subr.mxu0 0.0
    %1179 = vmatpush1.msra.mxu0 0.0
    %1180 = vmatprep.subr.mxu0 0.0
    %1181 = vmatpush1.msra.mxu0 0.0
    %1182 = vmatprep.mubr.f32.mxu0 0.0
    %1183 = vmatmul.mubr.f32.gmra.mrb[0].mxu0 %v902
    %v1184 = vpop.f32.mrb[0].mxu0
    %v1185 = vadd.f32 0.0, %v1184
    %v1186 = vpop.f32.mrb[0].mxu0
    %v1187 = vadd.f32 0.0, %v1186
    %1188 = vdwg.mxu0
    %v1189 = vld [vmem:[#allocation2] sm:$0xff]
    %v1190 = vld [vmem:[#allocation2 + $0x8] sm:$0xff]
    %v1191 = vld [vmem:[#allocation2 + $0x10] sm:$0xff]
    %v1192 = vld [vmem:[#allocation2 + $0x18] sm:$0xff]
    %v1193 = vadd.f32 %v1189, %v972
    %v1194 = vadd.f32 %v1190, %v974
    %v1195 = vadd.f32 %v1191, %v1043
    %v1196 = vadd.f32 %v1192, %v1045
    %s1197 = scalar_lea.vmem [#allocation2], 480
    %v1198 = vld [vmem:[%s1197] sm:$0xff]
    %v1199 = vld [vmem:[%s1197 + $0x8] sm:$0xff]
    %v1200 = vld [vmem:[%s1197 + $0x10] sm:$0xff]
    %v1201 = vld [vmem:[%s1197 + $0x18] sm:$0xff]
    %v1202 = vadd.f32 %v1198, %v1114
    %v1203 = vadd.f32 %v1199, %v1116
    %v1204 = vadd.f32 %v1200, %v1185
    %v1205 = vadd.f32 %v1201, %v1187
    %v1206 = vxor.u32 %v1193, 2147483648
    %v1207 = vxor.u32 %v1202, 2147483648
    %v1208 = vmul.f32 %v1206, 1.442695
    %v1209 = vpow.pop %v1208
    %v1210 = vmul.f32 %v1207, 1.442695
    %v1211 = vpow.pop %v1210
    %v1212 = vadd.f32 %v1209, 1.0
    %v1213 = vadd.f32 %v1211, 1.0
    %v1214 = vrcp.pop %v1212
    %v1215 = vmul.f32 1.0, %v1214
    %v1216 = vrcp.pop %v1213
    %v1217 = vmul.f32 1.0, %v1216
    %v1218 = vxor.u32 %v1194, 2147483648
    %v1219 = vxor.u32 %v1203, 2147483648
    %v1220 = vmul.f32 %v1218, 1.442695
    %v1221 = vpow.pop %v1220
    %v1222 = vmul.f32 %v1219, 1.442695
    %v1223 = vpow.pop %v1222
    %v1224 = vadd.f32 %v1221, 1.0
    %v1225 = vadd.f32 %v1223, 1.0
    %v1226 = vrcp.pop %v1224
    %v1227 = vmul.f32 1.0, %v1226
    %v1228 = vrcp.pop %v1225
    %v1229 = vmul.f32 1.0, %v1228
    %v1230 = vtanh.pop %v1195
    %v1231 = vtanh.pop %v1204
    %v1232 = vxor.u32 %v1196, 2147483648
    %v1233 = vxor.u32 %v1205, 2147483648
    %v1234 = vmul.f32 %v1232, 1.442695
    %v1235 = vpow.pop %v1234
    %v1236 = vmul.f32 %v1233, 1.442695
    %v1237 = vpow.pop %v1236
    %v1238 = vadd.f32 %v1235, 1.0
    %v1239 = vadd.f32 %v1237, 1.0
    %v1240 = vrcp.pop %v1238
    %v1241 = vmul.f32 1.0, %v1240
    %v1242 = vrcp.pop %v1239
    %v1243 = vmul.f32 1.0, %v1242
    %v1244 = vmul.f32 %v1227, %v903
    %v1245 = vmul.f32 %v1229, %v904
    %v1246 = vmul.f32 %v1215, %v1230
    %v1247 = vmul.f32 %v1217, %v1231
    %v1248 = vadd.f32 %v1244, %v1246
    %v1249 = vadd.f32 %v1245, %v1247
    %v1250 = vtanh.pop %v1248
    %v1251 = vtanh.pop %v1249
    %v1252 = vmul.f32 %v1241, %v1250
    %v1253 = vmul.f32 %v1243, %v1251
    %1254 = vst [vmem:[#allocation16] sm:$0xff] %v1252
    %s1255 = scalar_lea.vmem [#allocation17], 56
    %1256 = vst [vmem:[%s1255] sm:$0xff] %v1253
    %1257 = vmatprep.subr.mxu0 %v774
    %1258 = vmatpush1.msra.mxu0 %v773
    %1259 = vmatprep.subr.mxu0 %v778
    %1260 = vmatpush1.msra.mxu0 %v777
    %1261 = vmatprep.subr.mxu0 %v782
    %1262 = vmatpush1.msra.mxu0 %v781
    %1263 = vmatprep.subr.mxu0 %v786
    %1264 = vmatpush1.msra.mxu0 %v785
    %1265 = vmatprep.subr.mxu0 %v790
    %1266 = vmatpush1.msra.mxu0 %v789
    %1267 = vmatprep.subr.mxu0 %v794
    %1268 = vmatpush1.msra.mxu0 %v793
    %1269 = vmatprep.subr.mxu0 %v798
    %1270 = vmatpush1.msra.mxu0 %v797
    %1271 = vmatprep.subr.mxu0 %v802
    %1272 = vmatpush1.msra.mxu0 %v801
    %1273 = vmatprep.subr.mxu0 %v806
    %1274 = vmatpush1.msra.mxu0 %v805
    %1275 = vmatprep.subr.mxu0 %v810
    %1276 = vmatpush1.msra.mxu0 %v809
    %1277 = vmatprep.subr.mxu0 %v814
    %1278 = vmatpush1.msra.mxu0 %v813
    %1279 = vmatprep.subr.mxu0 %v818
    %1280 = vmatpush1.msra.mxu0 %v817
    %1281 = vmatprep.subr.mxu0 %v822
    %1282 = vmatpush1.msra.mxu0 %v821
    %1283 = vmatprep.subr.mxu0 %v826
    %1284 = vmatpush1.msra.mxu0 %v825
    %1285 = vmatprep.subr.mxu0 %v830
    %1286 = vmatpush1.msra.mxu0 %v829
    %1287 = vmatprep.subr.mxu0 %v834
    %1288 = vmatpush1.msra.mxu0 %v833
    %1289 = vmatprep.subr.mxu0 0.0
    %1290 = vmatpush1.msra.mxu0 0.0
    %1291 = vmatprep.subr.mxu0 0.0
    %1292 = vmatpush1.msra.mxu0 0.0
    %1293 = vmatprep.subr.mxu0 0.0
    %1294 = vmatpush1.msra.mxu0 0.0
    %1295 = vmatprep.subr.mxu0 0.0
    %1296 = vmatpush1.msra.mxu0 0.0
    %1297 = vmatprep.subr.mxu0 0.0
    %1298 = vmatpush1.msra.mxu0 0.0
    %1299 = vmatprep.subr.mxu0 0.0
    %1300 = vmatpush1.msra.mxu0 0.0
    %1301 = vmatprep.subr.mxu0 0.0
    %1302 = vmatpush1.msra.mxu0 0.0
    %1303 = vmatprep.subr.mxu0 0.0
    %1304 = vmatpush1.msra.mxu0 0.0
    %1305 = vmatprep.subr.mxu0 0.0
    %1306 = vmatpush1.msra.mxu0 0.0
    %1307 = vmatprep.subr.mxu0 0.0
    %1308 = vmatpush1.msra.mxu0 0.0
    %1309 = vmatprep.subr.mxu0 0.0
    %1310 = vmatpush1.msra.mxu0 0.0
    %1311 = vmatprep.subr.mxu0 0.0
    %1312 = vmatpush1.msra.mxu0 0.0
    %1313 = vmatprep.subr.mxu0 0.0
    %1314 = vmatpush1.msra.mxu0 0.0
    %1315 = vmatprep.subr.mxu0 0.0
    %1316 = vmatpush1.msra.mxu0 0.0
    %1317 = vmatprep.subr.mxu0 0.0
    %1318 = vmatpush1.msra.mxu0 0.0
    %1319 = vmatprep.subr.mxu0 0.0
    %1320 = vmatpush1.msra.mxu0 0.0
    %1321 = vmatprep.mubr.f32.mxu0 0.0
    %1322 = vmatmul.mubr.f32.gmra.mrb[0].mxu0 %v1252
    %v1323 = vpop.f32.mrb[0].mxu0
    %v1324 = vadd.f32 0.0, %v1323
    %v1325 = vpop.f32.mrb[0].mxu0
    %v1326 = vadd.f32 0.0, %v1325
    %1327 = vdwg.mxu0
    %1328 = vmatprep.subr.mxu0 %v776
    %1329 = vmatpush1.msra.mxu0 %v775
    %1330 = vmatprep.subr.mxu0 %v780
    %1331 = vmatpush1.msra.mxu0 %v779
    %1332 = vmatprep.subr.mxu0 %v784
    %1333 = vmatpush1.msra.mxu0 %v783
    %1334 = vmatprep.subr.mxu0 %v788
    %1335 = vmatpush1.msra.mxu0 %v787
    %1336 = vmatprep.subr.mxu0 %v792
    %1337 = vmatpush1.msra.mxu0 %v791
    %1338 = vmatprep.subr.mxu0 %v796
    %1339 = vmatpush1.msra.mxu0 %v795
    %1340 = vmatprep.subr.mxu0 %v800
    %1341 = vmatpush1.msra.mxu0 %v799
    %1342 = vmatprep.subr.mxu0 %v804
    %1343 = vmatpush1.msra.mxu0 %v803
    %1344 = vmatprep.subr.mxu0 %v808
    %1345 = vmatpush1.msra.mxu0 %v807
    %1346 = vmatprep.subr.mxu0 %v812
    %1347 = vmatpush1.msra.mxu0 %v811
    %1348 = vmatprep.subr.mxu0 %v816
    %1349 = vmatpush1.msra.mxu0 %v815
    %1350 = vmatprep.subr.mxu0 %v820
    %1351 = vmatpush1.msra.mxu0 %v819
    %1352 = vmatprep.subr.mxu0 %v824
    %1353 = vmatpush1.msra.mxu0 %v823
    %1354 = vmatprep.subr.mxu0 %v828
    %1355 = vmatpush1.msra.mxu0 %v827
    %1356 = vmatprep.subr.mxu0 %v832
    %1357 = vmatpush1.msra.mxu0 %v831
    %1358 = vmatprep.subr.mxu0 %v836
    %1359 = vmatpush1.msra.mxu0 %v835
    %1360 = vmatprep.subr.mxu0 0.0
    %1361 = vmatpush1.msra.mxu0 0.0
    %1362 = vmatprep.subr.mxu0 0.0
    %1363 = vmatpush1.msra.mxu0 0.0
    %1364 = vmatprep.subr.mxu0 0.0
    %1365 = vmatpush1.msra.mxu0 0.0
    %1366 = vmatprep.subr.mxu0 0.0
    %1367 = vmatpush1.msra.mxu0 0.0
    %1368 = vmatprep.subr.mxu0 0.0
    %1369 = vmatpush1.msra.mxu0 0.0
    %1370 = vmatprep.subr.mxu0 0.0
    %1371 = vmatpush1.msra.mxu0 0.0
    %1372 = vmatprep.subr.mxu0 0.0
    %1373 = vmatpush1.msra.mxu0 0.0
    %1374 = vmatprep.subr.mxu0 0.0
    %1375 = vmatpush1.msra.mxu0 0.0
    %1376 = vmatprep.subr.mxu0 0.0
    %1377 = vmatpush1.msra.mxu0 0.0
    %1378 = vmatprep.subr.mxu0 0.0
    %1379 = vmatpush1.msra.mxu0 0.0
    %1380 = vmatprep.subr.mxu0 0.0
    %1381 = vmatpush1.msra.mxu0 0.0
    %1382 = vmatprep.subr.mxu0 0.0
    %1383 = vmatpush1.msra.mxu0 0.0
    %1384 = vmatprep.subr.mxu0 0.0
    %1385 = vmatpush1.msra.mxu0 0.0
    %1386 = vmatprep.subr.mxu0 0.0
    %1387 = vmatpush1.msra.mxu0 0.0
    %1388 = vmatprep.subr.mxu0 0.0
    %1389 = vmatpush1.msra.mxu0 0.0
    %1390 = vmatprep.subr.mxu0 0.0
    %1391 = vmatpush1.msra.mxu0 0.0
    %1392 = vmatprep.mubr.f32.mxu0 0.0
    %1393 = vmatmul.mubr.f32.gmra.mrb[0].mxu0 %v1252
    %v1394 = vpop.f32.mrb[0].mxu0
    %v1395 = vadd.f32 0.0, %v1394
    %v1396 = vpop.f32.mrb[0].mxu0
    %v1397 = vadd.f32 0.0, %v1396
    %1398 = vdwg.mxu0
    %1399 = vmatprep.subr.mxu0 %v838
    %1400 = vmatpush1.msra.mxu0 %v837
    %1401 = vmatprep.subr.mxu0 %v842
    %1402 = vmatpush1.msra.mxu0 %v841
    %1403 = vmatprep.subr.mxu0 %v846
    %1404 = vmatpush1.msra.mxu0 %v845
    %1405 = vmatprep.subr.mxu0 %v850
    %1406 = vmatpush1.msra.mxu0 %v849
    %1407 = vmatprep.subr.mxu0 %v854
    %1408 = vmatpush1.msra.mxu0 %v853
    %1409 = vmatprep.subr.mxu0 %v858
    %1410 = vmatpush1.msra.mxu0 %v857
    %1411 = vmatprep.subr.mxu0 %v862
    %1412 = vmatpush1.msra.mxu0 %v861
    %1413 = vmatprep.subr.mxu0 %v866
    %1414 = vmatpush1.msra.mxu0 %v865
    %1415 = vmatprep.subr.mxu0 %v870
    %1416 = vmatpush1.msra.mxu0 %v869
    %1417 = vmatprep.subr.mxu0 %v874
    %1418 = vmatpush1.msra.mxu0 %v873
    %1419 = vmatprep.subr.mxu0 %v878
    %1420 = vmatpush1.msra.mxu0 %v877
    %1421 = vmatprep.subr.mxu0 %v882
    %1422 = vmatpush1.msra.mxu0 %v881
    %1423 = vmatprep.subr.mxu0 %v886
    %1424 = vmatpush1.msra.mxu0 %v885
    %1425 = vmatprep.subr.mxu0 %v890
    %1426 = vmatpush1.msra.mxu0 %v889
    %1427 = vmatprep.subr.mxu0 %v894
    %1428 = vmatpush1.msra.mxu0 %v893
    %1429 = vmatprep.subr.mxu0 %v898
    %1430 = vmatpush1.msra.mxu0 %v897
    %1431 = vmatprep.subr.mxu0 0.0
    %1432 = vmatpush1.msra.mxu0 0.0
    %1433 = vmatprep.subr.mxu0 0.0
    %1434 = vmatpush1.msra.mxu0 0.0
    %1435 = vmatprep.subr.mxu0 0.0
    %1436 = vmatpush1.msra.mxu0 0.0
    %1437 = vmatprep.subr.mxu0 0.0
    %1438 = vmatpush1.msra.mxu0 0.0
    %1439 = vmatprep.subr.mxu0 0.0
    %1440 = vmatpush1.msra.mxu0 0.0
    %1441 = vmatprep.subr.mxu0 0.0
    %1442 = vmatpush1.msra.mxu0 0.0
    %1443 = vmatprep.subr.mxu0 0.0
    %1444 = vmatpush1.msra.mxu0 0.0
    %1445 = vmatprep.subr.mxu0 0.0
    %1446 = vmatpush1.msra.mxu0 0.0
    %1447 = vmatprep.subr.mxu0 0.0
    %1448 = vmatpush1.msra.mxu0 0.0
    %1449 = vmatprep.subr.mxu0 0.0
    %1450 = vmatpush1.msra.mxu0 0.0
    %1451 = vmatprep.subr.mxu0 0.0
    %1452 = vmatpush1.msra.mxu0 0.0
    %1453 = vmatprep.subr.mxu0 0.0
    %1454 = vmatpush1.msra.mxu0 0.0
    %1455 = vmatprep.subr.mxu0 0.0
    %1456 = vmatpush1.msra.mxu0 0.0
    %1457 = vmatprep.subr.mxu0 0.0
    %1458 = vmatpush1.msra.mxu0 0.0
    %1459 = vmatprep.subr.mxu0 0.0
    %1460 = vmatpush1.msra.mxu0 0.0
    %1461 = vmatprep.subr.mxu0 0.0
    %1462 = vmatpush1.msra.mxu0 0.0
    %1463 = vmatprep.mubr.f32.mxu0 0.0
    %1464 = vmatmul.mubr.f32.gmra.mrb[0].mxu0 %v1253
    %v1465 = vpop.f32.mrb[0].mxu0
    %v1466 = vadd.f32 0.0, %v1465
    %v1467 = vpop.f32.mrb[0].mxu0
    %v1468 = vadd.f32 0.0, %v1467
    %1469 = vdwg.mxu0
    %1470 = vmatprep.subr.mxu0 %v840
    %1471 = vmatpush1.msra.mxu0 %v839
    %1472 = vmatprep.subr.mxu0 %v844
    %1473 = vmatpush1.msra.mxu0 %v843
    %1474 = vmatprep.subr.mxu0 %v848
    %1475 = vmatpush1.msra.mxu0 %v847
    %1476 = vmatprep.subr.mxu0 %v852
    %1477 = vmatpush1.msra.mxu0 %v851
    %1478 = vmatprep.subr.mxu0 %v856
    %1479 = vmatpush1.msra.mxu0 %v855
    %1480 = vmatprep.subr.mxu0 %v860
    %1481 = vmatpush1.msra.mxu0 %v859
    %1482 = vmatprep.subr.mxu0 %v864
    %1483 = vmatpush1.msra.mxu0 %v863
    %1484 = vmatprep.subr.mxu0 %v868
    %1485 = vmatpush1.msra.mxu0 %v867
    %1486 = vmatprep.subr.mxu0 %v872
    %1487 = vmatpush1.msra.mxu0 %v871
    %1488 = vmatprep.subr.mxu0 %v876
    %1489 = vmatpush1.msra.mxu0 %v875
    %1490 = vmatprep.subr.mxu0 %v880
    %1491 = vmatpush1.msra.mxu0 %v879
    %1492 = vmatprep.subr.mxu0 %v884
    %1493 = vmatpush1.msra.mxu0 %v883
    %1494 = vmatprep.subr.mxu0 %v888
    %1495 = vmatpush1.msra.mxu0 %v887
    %1496 = vmatprep.subr.mxu0 %v892
    %1497 = vmatpush1.msra.mxu0 %v891
    %1498 = vmatprep.subr.mxu0 %v896
    %1499 = vmatpush1.msra.mxu0 %v895
    %1500 = vmatprep.subr.mxu0 %v900
    %1501 = vmatpush1.msra.mxu0 %v899
    %1502 = vmatprep.subr.mxu0 0.0
    %1503 = vmatpush1.msra.mxu0 0.0
    %1504 = vmatprep.subr.mxu0 0.0
    %1505 = vmatpush1.msra.mxu0 0.0
    %1506 = vmatprep.subr.mxu0 0.0
    %1507 = vmatpush1.msra.mxu0 0.0
    %1508 = vmatprep.subr.mxu0 0.0
    %1509 = vmatpush1.msra.mxu0 0.0
    %1510 = vmatprep.subr.mxu0 0.0
    %1511 = vmatpush1.msra.mxu0 0.0
    %1512 = vmatprep.subr.mxu0 0.0
    %1513 = vmatpush1.msra.mxu0 0.0
    %1514 = vmatprep.subr.mxu0 0.0
    %1515 = vmatpush1.msra.mxu0 0.0
    %1516 = vmatprep.subr.mxu0 0.0
    %1517 = vmatpush1.msra.mxu0 0.0
    %1518 = vmatprep.subr.mxu0 0.0
    %1519 = vmatpush1.msra.mxu0 0.0
    %1520 = vmatprep.subr.mxu0 0.0
    %1521 = vmatpush1.msra.mxu0 0.0
    %1522 = vmatprep.subr.mxu0 0.0
    %1523 = vmatpush1.msra.mxu0 0.0
    %1524 = vmatprep.subr.mxu0 0.0
    %1525 = vmatpush1.msra.mxu0 0.0
    %1526 = vmatprep.subr.mxu0 0.0
    %1527 = vmatpush1.msra.mxu0 0.0
    %1528 = vmatprep.subr.mxu0 0.0
    %1529 = vmatpush1.msra.mxu0 0.0
    %1530 = vmatprep.subr.mxu0 0.0
    %1531 = vmatpush1.msra.mxu0 0.0
    %1532 = vmatprep.subr.mxu0 0.0
    %1533 = vmatpush1.msra.mxu0 0.0
    %1534 = vmatprep.mubr.f32.mxu0 0.0
    %1535 = vmatmul.mubr.f32.gmra.mrb[0].mxu0 %v1253
    %v1536 = vpop.f32.mrb[0].mxu0
    %v1537 = vadd.f32 0.0, %v1536
    %v1538 = vpop.f32.mrb[0].mxu0
    %v1539 = vadd.f32 0.0, %v1538
    %1540 = vdwg.mxu0
    %s1541 = scalar_lea.vmem [#allocation2], 32
    %v1542 = vld [vmem:[%s1541] sm:$0xff]
    %v1543 = vld [vmem:[%s1541 + $0x8] sm:$0xff]
    %v1544 = vld [vmem:[%s1541 + $0x10] sm:$0xff]
    %v1545 = vld [vmem:[%s1541 + $0x18] sm:$0xff]
    %v1546 = vadd.f32 %v1542, %v1324
    %v1547 = vadd.f32 %v1543, %v1326
    %v1548 = vadd.f32 %v1544, %v1395
    %v1549 = vadd.f32 %v1545, %v1397
    %s1550 = scalar_lea.vmem [#allocation2], 448
    %v1551 = vld [vmem:[%s1550] sm:$0xff]
    %v1552 = vld [vmem:[%s1550 + $0x8] sm:$0xff]
    %v1553 = vld [vmem:[%s1550 + $0x10] sm:$0xff]
    %v1554 = vld [vmem:[%s1550 + $0x18] sm:$0xff]
    %v1555 = vadd.f32 %v1551, %v1466
    %v1556 = vadd.f32 %v1552, %v1468
    %v1557 = vadd.f32 %v1553, %v1537
    %v1558 = vadd.f32 %v1554, %v1539
    %v1559 = vxor.u32 %v1546, 2147483648
    %v1560 = vxor.u32 %v1555, 2147483648
    %v1561 = vmul.f32 %v1559, 1.442695
    %v1562 = vpow.pop %v1561
    %v1563 = vmul.f32 %v1560, 1.442695
    %v1564 = vpow.pop %v1563
    %v1565 = vadd.f32 %v1562, 1.0
    %v1566 = vadd.f32 %v1564, 1.0
    %v1567 = vrcp.pop %v1565
    %v1568 = vmul.f32 1.0, %v1567
    %v1569 = vrcp.pop %v1566
    %v1570 = vmul.f32 1.0, %v1569
    %v1571 = vxor.u32 %v1547, 2147483648
    %v1572 = vxor.u32 %v1556, 2147483648
    %v1573 = vmul.f32 %v1571, 1.442695
    %v1574 = vpow.pop %v1573
    %v1575 = vmul.f32 %v1572, 1.442695
    %v1576 = vpow.pop %v1575
    %v1577 = vadd.f32 %v1574, 1.0
    %v1578 = vadd.f32 %v1576, 1.0
    %v1579 = vrcp.pop %v1577
    %v1580 = vmul.f32 1.0, %v1579
    %v1581 = vrcp.pop %v1578
    %v1582 = vmul.f32 1.0, %v1581
    %v1583 = vtanh.pop %v1548
    %v1584 = vtanh.pop %v1557
    %v1585 = vxor.u32 %v1549, 2147483648
    %v1586 = vxor.u32 %v1558, 2147483648
    %v1587 = vmul.f32 %v1585, 1.442695
    %v1588 = vpow.pop %v1587
    %v1589 = vmul.f32 %v1586, 1.442695
    %v1590 = vpow.pop %v1589
    %v1591 = vadd.f32 %v1588, 1.0
    %v1592 = vadd.f32 %v1590, 1.0
    %v1593 = vrcp.pop %v1591
    %v1594 = vmul.f32 1.0, %v1593
    %v1595 = vrcp.pop %v1592
    %v1596 = vmul.f32 1.0, %v1595
    %v1597 = vmul.f32 %v1580, %v1248
    %v1598 = vmul.f32 %v1582, %v1249
    %v1599 = vmul.f32 %v1568, %v1583
    %v1600 = vmul.f32 %v1570, %v1584
    %v1601 = vadd.f32 %v1597, %v1599
    %v1602 = vadd.f32 %v1598, %v1600
    %v1603 = vtanh.pop %v1601
    %v1604 = vtanh.pop %v1602
    %v1605 = vmul.f32 %v1594, %v1603
    %v1606 = vmul.f32 %v1596, %v1604
    %s1607 = scalar_lea.vmem [#allocation16], 8
    %1608 = vst [vmem:[%s1607] sm:$0xff] %v1605
    %s1609 = scalar_lea.vmem [#allocation17], 48
    %1610 = vst [vmem:[%s1609] sm:$0xff] %v1606
    %1611 = vmatprep.subr.mxu0 %v774
    %1612 = vmatpush1.msra.mxu0 %v773
    %1613 = vmatprep.subr.mxu0 %v778
    %1614 = vmatpush1.msra.mxu0 %v777
    %1615 = vmatprep.subr.mxu0 %v782
    %1616 = vmatpush1.msra.mxu0 %v781
    %1617 = vmatprep.subr.mxu0 %v786
    %1618 = vmatpush1.msra.mxu0 %v785
    %1619 = vmatprep.subr.mxu0 %v790
    %1620 = vmatpush1.msra.mxu0 %v789
    %1621 = vmatprep.subr.mxu0 %v794
    %1622 = vmatpush1.msra.mxu0 %v793
    %1623 = vmatprep.subr.mxu0 %v798
    %1624 = vmatpush1.msra.mxu0 %v797
    %1625 = vmatprep.subr.mxu0 %v802
    %1626 = vmatpush1.msra.mxu0 %v801
    %1627 = vmatprep.subr.mxu0 %v806
    %1628 = vmatpush1.msra.mxu0 %v805
    %1629 = vmatprep.subr.mxu0 %v810
    %1630 = vmatpush1.msra.mxu0 %v809
    %1631 = vmatprep.subr.mxu0 %v814
    %1632 = vmatpush1.msra.mxu0 %v813
    %1633 = vmatprep.subr.mxu0 %v818
    %1634 = vmatpush1.msra.mxu0 %v817
    %1635 = vmatprep.subr.mxu0 %v822
    %1636 = vmatpush1.msra.mxu0 %v821
    %1637 = vmatprep.subr.mxu0 %v826
    %1638 = vmatpush1.msra.mxu0 %v825
    %1639 = vmatprep.subr.mxu0 %v830
    %1640 = vmatpush1.msra.mxu0 %v829
    %1641 = vmatprep.subr.mxu0 %v834
    %1642 = vmatpush1.msra.mxu0 %v833
    %1643 = vmatprep.subr.mxu0 0.0
    %1644 = vmatpush1.msra.mxu0 0.0
    %1645 = vmatprep.subr.mxu0 0.0
    %1646 = vmatpush1.msra.mxu0 0.0
    %1647 = vmatprep.subr.mxu0 0.0
    %1648 = vmatpush1.msra.mxu0 0.0
    %1649 = vmatprep.subr.mxu0 0.0
    %1650 = vmatpush1.msra.mxu0 0.0
    %1651 = vmatprep.subr.mxu0 0.0
    %1652 = vmatpush1.msra.mxu0 0.0
    %1653 = vmatprep.subr.mxu0 0.0
    %1654 = vmatpush1.msra.mxu0 0.0
    %1655 = vmatprep.subr.mxu0 0.0
    %1656 = vmatpush1.msra.mxu0 0.0
    %1657 = vmatprep.subr.mxu0 0.0
    %1658 = vmatpush1.msra.mxu0 0.0
    %1659 = vmatprep.subr.mxu0 0.0
    %1660 = vmatpush1.msra.mxu0 0.0
    %1661 = vmatprep.subr.mxu0 0.0
    %1662 = vmatpush1.msra.mxu0 0.0
    %1663 = vmatprep.subr.mxu0 0.0
    %1664 = vmatpush1.msra.mxu0 0.0
    %1665 = vmatprep.subr.mxu0 0.0
    %1666 = vmatpush1.msra.mxu0 0.0
    %1667 = vmatprep.subr.mxu0 0.0
    %1668 = vmatpush1.msra.mxu0 0.0
    %1669 = vmatprep.subr.mxu0 0.0
    %1670 = vmatpush1.msra.mxu0 0.0
    %1671 = vmatprep.subr.mxu0 0.0
    %1672 = vmatpush1.msra.mxu0 0.0
    %1673 = vmatprep.subr.mxu0 0.0
    %1674 = vmatpush1.msra.mxu0 0.0
    %1675 = vmatprep.mubr.f32.mxu0 0.0
    %1676 = vmatmul.mubr.f32.gmra.mrb[0].mxu0 %v1605
    %v1677 = vpop.f32.mrb[0].mxu0
    %v1678 = vadd.f32 0.0, %v1677
    %v1679 = vpop.f32.mrb[0].mxu0
    %v1680 = vadd.f32 0.0, %v1679
    %1681 = vdwg.mxu0
    %1682 = vmatprep.subr.mxu0 %v776
    %1683 = vmatpush1.msra.mxu0 %v775
    %1684 = vmatprep.subr.mxu0 %v780
    %1685 = vmatpush1.msra.mxu0 %v779
    %1686 = vmatprep.subr.mxu0 %v784
    %1687 = vmatpush1.msra.mxu0 %v783
    %1688 = vmatprep.subr.mxu0 %v788
    %1689 = vmatpush1.msra.mxu0 %v787
    %1690 = vmatprep.subr.mxu0 %v792
    %1691 = vmatpush1.msra.mxu0 %v791
    %1692 = vmatprep.subr.mxu0 %v796
    %1693 = vmatpush1.msra.mxu0 %v795
    %1694 = vmatprep.subr.mxu0 %v800
    %1695 = vmatpush1.msra.mxu0 %v799
    %1696 = vmatprep.subr.mxu0 %v804
    %1697 = vmatpush1.msra.mxu0 %v803
    %1698 = vmatprep.subr.mxu0 %v808
    %1699 = vmatpush1.msra.mxu0 %v807
    %1700 = vmatprep.subr.mxu0 %v812
    %1701 = vmatpush1.msra.mxu0 %v811
    %1702 = vmatprep.subr.mxu0 %v816
    %1703 = vmatpush1.msra.mxu0 %v815
    %1704 = vmatprep.subr.mxu0 %v820
    %1705 = vmatpush1.msra.mxu0 %v819
    %1706 = vmatprep.subr.mxu0 %v824
    %1707 = vmatpush1.msra.mxu0 %v823
    %1708 = vmatprep.subr.mxu0 %v828
    %1709 = vmatpush1.msra.mxu0 %v827
    %1710 = vmatprep.subr.mxu0 %v832
    %1711 = vmatpush1.msra.mxu0 %v831
    %1712 = vmatprep.subr.mxu0 %v836
    %1713 = vmatpush1.msra.mxu0 %v835
    %1714 = vmatprep.subr.mxu0 0.0
    %1715 = vmatpush1.msra.mxu0 0.0
    %1716 = vmatprep.subr.mxu0 0.0
    %1717 = vmatpush1.msra.mxu0 0.0
    %1718 = vmatprep.subr.mxu0 0.0
    %1719 = vmatpush1.msra.mxu0 0.0
    %1720 = vmatprep.subr.mxu0 0.0
    %1721 = vmatpush1.msra.mxu0 0.0
    %1722 = vmatprep.subr.mxu0 0.0
    %1723 = vmatpush1.msra.mxu0 0.0
    %1724 = vmatprep.subr.mxu0 0.0
    %1725 = vmatpush1.msra.mxu0 0.0
    %1726 = vmatprep.subr.mxu0 0.0
    %1727 = vmatpush1.msra.mxu0 0.0
    %1728 = vmatprep.subr.mxu0 0.0
    %1729 = vmatpush1.msra.mxu0 0.0
    %1730 = vmatprep.subr.mxu0 0.0
    %1731 = vmatpush1.msra.mxu0 0.0
    %1732 = vmatprep.subr.mxu0 0.0
    %1733 = vmatpush1.msra.mxu0 0.0
    %1734 = vmatprep.subr.mxu0 0.0
    %1735 = vmatpush1.msra.mxu0 0.0
    %1736 = vmatprep.subr.mxu0 0.0
    %1737 = vmatpush1.msra.mxu0 0.0
    %1738 = vmatprep.subr.mxu0 0.0
    %1739 = vmatpush1.msra.mxu0 0.0
    %1740 = vmatprep.subr.mxu0 0.0
    %1741 = vmatpush1.msra.mxu0 0.0
    %1742 = vmatprep.subr.mxu0 0.0
    %1743 = vmatpush1.msra.mxu0 0.0
    %1744 = vmatprep.subr.mxu0 0.0
    %1745 = vmatpush1.msra.mxu0 0.0
    %1746 = vmatprep.mubr.f32.mxu0 0.0
    %1747 = vmatmul.mubr.f32.gmra.mrb[0].mxu0 %v1605
    %v1748 = vpop.f32.mrb[0].mxu0
    %v1749 = vadd.f32 0.0, %v1748
    %v1750 = vpop.f32.mrb[0].mxu0
    %v1751 = vadd.f32 0.0, %v1750
    %1752 = vdwg.mxu0
    %1753 = vmatprep.subr.mxu0 %v838
    %1754 = vmatpush1.msra.mxu0 %v837
    %1755 = vmatprep.subr.mxu0 %v842
    %1756 = vmatpush1.msra.mxu0 %v841
    %1757 = vmatprep.subr.mxu0 %v846
    %1758 = vmatpush1.msra.mxu0 %v845
    %1759 = vmatprep.subr.mxu0 %v850
    %1760 = vmatpush1.msra.mxu0 %v849
    %1761 = vmatprep.subr.mxu0 %v854
    %1762 = vmatpush1.msra.mxu0 %v853
    %1763 = vmatprep.subr.mxu0 %v858
    %1764 = vmatpush1.msra.mxu0 %v857
    %1765 = vmatprep.subr.mxu0 %v862
    %1766 = vmatpush1.msra.mxu0 %v861
    %1767 = vmatprep.subr.mxu0 %v866
    %1768 = vmatpush1.msra.mxu0 %v865
    %1769 = vmatprep.subr.mxu0 %v870
    %1770 = vmatpush1.msra.mxu0 %v869
    %1771 = vmatprep.subr.mxu0 %v874
    %1772 = vmatpush1.msra.mxu0 %v873
    %1773 = vmatprep.subr.mxu0 %v878
    %1774 = vmatpush1.msra.mxu0 %v877
    %1775 = vmatprep.subr.mxu0 %v882
    %1776 = vmatpush1.msra.mxu0 %v881
    %1777 = vmatprep.subr.mxu0 %v886
    %1778 = vmatpush1.msra.mxu0 %v885
    %1779 = vmatprep.subr.mxu0 %v890
    %1780 = vmatpush1.msra.mxu0 %v889
    %1781 = vmatprep.subr.mxu0 %v894
    %1782 = vmatpush1.msra.mxu0 %v893
    %1783 = vmatprep.subr.mxu0 %v898
    %1784 = vmatpush1.msra.mxu0 %v897
    %1785 = vmatprep.subr.mxu0 0.0
    %1786 = vmatpush1.msra.mxu0 0.0
    %1787 = vmatprep.subr.mxu0 0.0
    %1788 = vmatpush1.msra.mxu0 0.0
    %1789 = vmatprep.subr.mxu0 0.0
    %1790 = vmatpush1.msra.mxu0 0.0
    %1791 = vmatprep.subr.mxu0 0.0
    %1792 = vmatpush1.msra.mxu0 0.0
    %1793 = vmatprep.subr.mxu0 0.0
    %1794 = vmatpush1.msra.mxu0 0.0
    %1795 = vmatprep.subr.mxu0 0.0
    %1796 = vmatpush1.msra.mxu0 0.0
    %1797 = vmatprep.subr.mxu0 0.0
    %1798 = vmatpush1.msra.mxu0 0.0
    %1799 = vmatprep.subr.mxu0 0.0
    %1800 = vmatpush1.msra.mxu0 0.0
    %1801 = vmatprep.subr.mxu0 0.0
    %1802 = vmatpush1.msra.mxu0 0.0
    %1803 = vmatprep.subr.mxu0 0.0
    %1804 = vmatpush1.msra.mxu0 0.0
    %1805 = vmatprep.subr.mxu0 0.0
    %1806 = vmatpush1.msra.mxu0 0.0
    %1807 = vmatprep.subr.mxu0 0.0
    %1808 = vmatpush1.msra.mxu0 0.0
    %1809 = vmatprep.subr.mxu0 0.0
    %1810 = vmatpush1.msra.mxu0 0.0
    %1811 = vmatprep.subr.mxu0 0.0
    %1812 = vmatpush1.msra.mxu0 0.0
    %1813 = vmatprep.subr.mxu0 0.0
    %1814 = vmatpush1.msra.mxu0 0.0
    %1815 = vmatprep.subr.mxu0 0.0
    %1816 = vmatpush1.msra.mxu0 0.0
    %1817 = vmatprep.mubr.f32.mxu0 0.0
    %1818 = vmatmul.mubr.f32.gmra.mrb[0].mxu0 %v1606
    %v1819 = vpop.f32.mrb[0].mxu0
    %v1820 = vadd.f32 0.0, %v1819
    %v1821 = vpop.f32.mrb[0].mxu0
    %v1822 = vadd.f32 0.0, %v1821
    %1823 = vdwg.mxu0
    %1824 = vmatprep.subr.mxu0 %v840
    %1825 = vmatpush1.msra.mxu0 %v839
    %1826 = vmatprep.subr.mxu0 %v844
    %1827 = vmatpush1.msra.mxu0 %v843
    %1828 = vmatprep.subr.mxu0 %v848
    %1829 = vmatpush1.msra.mxu0 %v847
    %1830 = vmatprep.subr.mxu0 %v852
    %1831 = vmatpush1.msra.mxu0 %v851
    %1832 = vmatprep.subr.mxu0 %v856
    %1833 = vmatpush1.msra.mxu0 %v855
    %1834 = vmatprep.subr.mxu0 %v860
    %1835 = vmatpush1.msra.mxu0 %v859
    %1836 = vmatprep.subr.mxu0 %v864
    %1837 = vmatpush1.msra.mxu0 %v863
    %1838 = vmatprep.subr.mxu0 %v868
    %1839 = vmatpush1.msra.mxu0 %v867
    %1840 = vmatprep.subr.mxu0 %v872
    %1841 = vmatpush1.msra.mxu0 %v871
    %1842 = vmatprep.subr.mxu0 %v876
    %1843 = vmatpush1.msra.mxu0 %v875
    %1844 = vmatprep.subr.mxu0 %v880
    %1845 = vmatpush1.msra.mxu0 %v879
    %1846 = vmatprep.subr.mxu0 %v884
    %1847 = vmatpush1.msra.mxu0 %v883
    %1848 = vmatprep.subr.mxu0 %v888
    %1849 = vmatpush1.msra.mxu0 %v887
    %1850 = vmatprep.subr.mxu0 %v892
    %1851 = vmatpush1.msra.mxu0 %v891
    %1852 = vmatprep.subr.mxu0 %v896
    %1853 = vmatpush1.msra.mxu0 %v895
    %1854 = vmatprep.subr.mxu0 %v900
    %1855 = vmatpush1.msra.mxu0 %v899
    %1856 = vmatprep.subr.mxu0 0.0
    %1857 = vmatpush1.msra.mxu0 0.0
    %1858 = vmatprep.subr.mxu0 0.0
    %1859 = vmatpush1.msra.mxu0 0.0
    %1860 = vmatprep.subr.mxu0 0.0
    %1861 = vmatpush1.msra.mxu0 0.0
    %1862 = vmatprep.subr.mxu0 0.0
    %1863 = vmatpush1.msra.mxu0 0.0
    %1864 = vmatprep.subr.mxu0 0.0
    %1865 = vmatpush1.msra.mxu0 0.0
    %1866 = vmatprep.subr.mxu0 0.0
    %1867 = vmatpush1.msra.mxu0 0.0
    %1868 = vmatprep.subr.mxu0 0.0
    %1869 = vmatpush1.msra.mxu0 0.0
    %1870 = vmatprep.subr.mxu0 0.0
    %1871 = vmatpush1.msra.mxu0 0.0
    %1872 = vmatprep.subr.mxu0 0.0
    %1873 = vmatpush1.msra.mxu0 0.0
    %1874 = vmatprep.subr.mxu0 0.0
    %1875 = vmatpush1.msra.mxu0 0.0
    %1876 = vmatprep.subr.mxu0 0.0
    %1877 = vmatpush1.msra.mxu0 0.0
    %1878 = vmatprep.subr.mxu0 0.0
    %1879 = vmatpush1.msra.mxu0 0.0
    %1880 = vmatprep.subr.mxu0 0.0
    %1881 = vmatpush1.msra.mxu0 0.0
    %1882 = vmatprep.subr.mxu0 0.0
    %1883 = vmatpush1.msra.mxu0 0.0
    %1884 = vmatprep.subr.mxu0 0.0
    %1885 = vmatpush1.msra.mxu0 0.0
    %1886 = vmatprep.subr.mxu0 0.0
    %1887 = vmatpush1.msra.mxu0 0.0
    %1888 = vmatprep.mubr.f32.mxu0 0.0
    %1889 = vmatmul.mubr.f32.gmra.mrb[0].mxu0 %v1606
    %v1890 = vpop.f32.mrb[0].mxu0
    %v1891 = vadd.f32 0.0, %v1890
    %v1892 = vpop.f32.mrb[0].mxu0
    %v1893 = vadd.f32 0.0, %v1892
    %1894 = vdwg.mxu0
    %s1895 = scalar_lea.vmem [#allocation2], 64
    %v1896 = vld [vmem:[%s1895] sm:$0xff]
    %v1897 = vld [vmem:[%s1895 + $0x8] sm:$0xff]
    %v1898 = vld [vmem:[%s1895 + $0x10] sm:$0xff]
    %v1899 = vld [vmem:[%s1895 + $0x18] sm:$0xff]
    %v1900 = vadd.f32 %v1896, %v1678
    %v1901 = vadd.f32 %v1897, %v1680
    %v1902 = vadd.f32 %v1898, %v1749
    %v1903 = vadd.f32 %v1899, %v1751
    %s1904 = scalar_lea.vmem [#allocation2], 416
    %v1905 = vld [vmem:[%s1904] sm:$0xff]
    %v1906 = vld [vmem:[%s1904 + $0x8] sm:$0xff]
    %v1907 = vld [vmem:[%s1904 + $0x10] sm:$0xff]
    %v1908 = vld [vmem:[%s1904 + $0x18] sm:$0xff]
    %v1909 = vadd.f32 %v1905, %v1820
    %v1910 = vadd.f32 %v1906, %v1822
    %v1911 = vadd.f32 %v1907, %v1891
    %v1912 = vadd.f32 %v1908, %v1893
    %v1913 = vxor.u32 %v1900, 2147483648
    %v1914 = vxor.u32 %v1909, 2147483648
    %v1915 = vmul.f32 %v1913, 1.442695
    %v1916 = vpow.pop %v1915
    %v1917 = vmul.f32 %v1914, 1.442695
    %v1918 = vpow.pop %v1917
    %v1919 = vadd.f32 %v1916, 1.0
    %v1920 = vadd.f32 %v1918, 1.0
    %v1921 = vrcp.pop %v1919
    %v1922 = vmul.f32 1.0, %v1921
    %v1923 = vrcp.pop %v1920
    %v1924 = vmul.f32 1.0, %v1923
    %v1925 = vxor.u32 %v1901, 2147483648
    %v1926 = vxor.u32 %v1910, 2147483648
    %v1927 = vmul.f32 %v1925, 1.442695
    %v1928 = vpow.pop %v1927
    %v1929 = vmul.f32 %v1926, 1.442695
    %v1930 = vpow.pop %v1929
    %v1931 = vadd.f32 %v1928, 1.0
    %v1932 = vadd.f32 %v1930, 1.0
    %v1933 = vrcp.pop %v1931
    %v1934 = vmul.f32 1.0, %v1933
    %v1935 = vrcp.pop %v1932
    %v1936 = vmul.f32 1.0, %v1935
    %v1937 = vtanh.pop %v1902
    %v1938 = vtanh.pop %v1911
    %v1939 = vxor.u32 %v1903, 2147483648
    %v1940 = vxor.u32 %v1912, 2147483648
    %v1941 = vmul.f32 %v1939, 1.442695
    %v1942 = vpow.pop %v1941
    %v1943 = vmul.f32 %v1940, 1.442695
    %v1944 = vpow.pop %v1943
    %v1945 = vadd.f32 %v1942, 1.0
    %v1946 = vadd.f32 %v1944, 1.0
    %v1947 = vrcp.pop %v1945
    %v1948 = vmul.f32 1.0, %v1947
    %v1949 = vrcp.pop %v1946
    %v1950 = vmul.f32 1.0, %v1949
    %v1951 = vmul.f32 %v1934, %v1601
    %v1952 = vmul.f32 %v1936, %v1602
    %v1953 = vmul.f32 %v1922, %v1937
    %v1954 = vmul.f32 %v1924, %v1938
    %v1955 = vadd.f32 %v1951, %v1953
    %v1956 = vadd.f32 %v1952, %v1954
    %v1957 = vtanh.pop %v1955
    %v1958 = vtanh.pop %v1956
    %v1959 = vmul.f32 %v1948, %v1957
    %v1960 = vmul.f32 %v1950, %v1958
    %s1961 = scalar_lea.vmem [#allocation16], 16
    %1962 = vst [vmem:[%s1961] sm:$0xff] %v1959
    %s1963 = scalar_lea.vmem [#allocation17], 40
    %1964 = vst [vmem:[%s1963] sm:$0xff] %v1960
    %1965 = vmatprep.subr.mxu0 %v774
    %1966 = vmatpush1.msra.mxu0 %v773
    %1967 = vmatprep.subr.mxu0 %v778
    %1968 = vmatpush1.msra.mxu0 %v777
    %1969 = vmatprep.subr.mxu0 %v782
    %1970 = vmatpush1.msra.mxu0 %v781
    %1971 = vmatprep.subr.mxu0 %v786
    %1972 = vmatpush1.msra.mxu0 %v785
    %1973 = vmatprep.subr.mxu0 %v790
    %1974 = vmatpush1.msra.mxu0 %v789
    %1975 = vmatprep.subr.mxu0 %v794
    %1976 = vmatpush1.msra.mxu0 %v793
    %1977 = vmatprep.subr.mxu0 %v798
    %1978 = vmatpush1.msra.mxu0 %v797
    %1979 = vmatprep.subr.mxu0 %v802
    %1980 = vmatpush1.msra.mxu0 %v801
    %1981 = vmatprep.subr.mxu0 %v806
    %1982 = vmatpush1.msra.mxu0 %v805
    %1983 = vmatprep.subr.mxu0 %v810
    %1984 = vmatpush1.msra.mxu0 %v809
    %1985 = vmatprep.subr.mxu0 %v814
    %1986 = vmatpush1.msra.mxu0 %v813
    %1987 = vmatprep.subr.mxu0 %v818
    %1988 = vmatpush1.msra.mxu0 %v817
    %1989 = vmatprep.subr.mxu0 %v822
    %1990 = vmatpush1.msra.mxu0 %v821
    %1991 = vmatprep.subr.mxu0 %v826
    %1992 = vmatpush1.msra.mxu0 %v825
    %1993 = vmatprep.subr.mxu0 %v830
    %1994 = vmatpush1.msra.mxu0 %v829
    %1995 = vmatprep.subr.mxu0 %v834
    %1996 = vmatpush1.msra.mxu0 %v833
    %1997 = vmatprep.subr.mxu0 0.0
    %1998 = vmatpush1.msra.mxu0 0.0
    %1999 = vmatprep.subr.mxu0 0.0
    %2000 = vmatpush1.msra.mxu0 0.0
    %2001 = vmatprep.subr.mxu0 0.0
    %2002 = vmatpush1.msra.mxu0 0.0
    %2003 = vmatprep.subr.mxu0 0.0
    %2004 = vmatpush1.msra.mxu0 0.0
    %2005 = vmatprep.subr.mxu0 0.0
    %2006 = vmatpush1.msra.mxu0 0.0
    %2007 = vmatprep.subr.mxu0 0.0
    %2008 = vmatpush1.msra.mxu0 0.0
    %2009 = vmatprep.subr.mxu0 0.0
    %2010 = vmatpush1.msra.mxu0 0.0
    %2011 = vmatprep.subr.mxu0 0.0
    %2012 = vmatpush1.msra.mxu0 0.0
    %2013 = vmatprep.subr.mxu0 0.0
    %2014 = vmatpush1.msra.mxu0 0.0
    %2015 = vmatprep.subr.mxu0 0.0
    %2016 = vmatpush1.msra.mxu0 0.0
    %2017 = vmatprep.subr.mxu0 0.0
    %2018 = vmatpush1.msra.mxu0 0.0
    %2019 = vmatprep.subr.mxu0 0.0
    %2020 = vmatpush1.msra.mxu0 0.0
    %2021 = vmatprep.subr.mxu0 0.0
    %2022 = vmatpush1.msra.mxu0 0.0
    %2023 = vmatprep.subr.mxu0 0.0
    %2024 = vmatpush1.msra.mxu0 0.0
    %2025 = vmatprep.subr.mxu0 0.0
    %2026 = vmatpush1.msra.mxu0 0.0
    %2027 = vmatprep.subr.mxu0 0.0
    %2028 = vmatpush1.msra.mxu0 0.0
    %2029 = vmatprep.mubr.f32.mxu0 0.0
    %2030 = vmatmul.mubr.f32.gmra.mrb[0].mxu0 %v1959
    %v2031 = vpop.f32.mrb[0].mxu0
    %v2032 = vadd.f32 0.0, %v2031
    %v2033 = vpop.f32.mrb[0].mxu0
    %v2034 = vadd.f32 0.0, %v2033
    %2035 = vdwg.mxu0
    %2036 = vmatprep.subr.mxu0 %v776
    %2037 = vmatpush1.msra.mxu0 %v775
    %2038 = vmatprep.subr.mxu0 %v780
    %2039 = vmatpush1.msra.mxu0 %v779
    %2040 = vmatprep.subr.mxu0 %v784
    %2041 = vmatpush1.msra.mxu0 %v783
    %2042 = vmatprep.subr.mxu0 %v788
    %2043 = vmatpush1.msra.mxu0 %v787
    %2044 = vmatprep.subr.mxu0 %v792
    %2045 = vmatpush1.msra.mxu0 %v791
    %2046 = vmatprep.subr.mxu0 %v796
    %2047 = vmatpush1.msra.mxu0 %v795
    %2048 = vmatprep.subr.mxu0 %v800
    %2049 = vmatpush1.msra.mxu0 %v799
    %2050 = vmatprep.subr.mxu0 %v804
    %2051 = vmatpush1.msra.mxu0 %v803
    %2052 = vmatprep.subr.mxu0 %v808
    %2053 = vmatpush1.msra.mxu0 %v807
    %2054 = vmatprep.subr.mxu0 %v812
    %2055 = vmatpush1.msra.mxu0 %v811
    %2056 = vmatprep.subr.mxu0 %v816
    %2057 = vmatpush1.msra.mxu0 %v815
    %2058 = vmatprep.subr.mxu0 %v820
    %2059 = vmatpush1.msra.mxu0 %v819
    %2060 = vmatprep.subr.mxu0 %v824
    %2061 = vmatpush1.msra.mxu0 %v823
    %2062 = vmatprep.subr.mxu0 %v828
    %2063 = vmatpush1.msra.mxu0 %v827
    %2064 = vmatprep.subr.mxu0 %v832
    %2065 = vmatpush1.msra.mxu0 %v831
    %2066 = vmatprep.subr.mxu0 %v836
    %2067 = vmatpush1.msra.mxu0 %v835
    %2068 = vmatprep.subr.mxu0 0.0
    %2069 = vmatpush1.msra.mxu0 0.0
    %2070 = vmatprep.subr.mxu0 0.0
    %2071 = vmatpush1.msra.mxu0 0.0
    %2072 = vmatprep.subr.mxu0 0.0
    %2073 = vmatpush1.msra.mxu0 0.0
    %2074 = vmatprep.subr.mxu0 0.0
    %2075 = vmatpush1.msra.mxu0 0.0
    %2076 = vmatprep.subr.mxu0 0.0
    %2077 = vmatpush1.msra.mxu0 0.0
    %2078 = vmatprep.subr.mxu0 0.0
    %2079 = vmatpush1.msra.mxu0 0.0
    %2080 = vmatprep.subr.mxu0 0.0
    %2081 = vmatpush1.msra.mxu0 0.0
    %2082 = vmatprep.subr.mxu0 0.0
    %2083 = vmatpush1.msra.mxu0 0.0
    %2084 = vmatprep.subr.mxu0 0.0
    %2085 = vmatpush1.msra.mxu0 0.0
    %2086 = vmatprep.subr.mxu0 0.0
    %2087 = vmatpush1.msra.mxu0 0.0
    %2088 = vmatprep.subr.mxu0 0.0
    %2089 = vmatpush1.msra.mxu0 0.0
    %2090 = vmatprep.subr.mxu0 0.0
    %2091 = vmatpush1.msra.mxu0 0.0
    %2092 = vmatprep.subr.mxu0 0.0
    %2093 = vmatpush1.msra.mxu0 0.0
    %2094 = vmatprep.subr.mxu0 0.0
    %2095 = vmatpush1.msra.mxu0 0.0
    %2096 = vmatprep.subr.mxu0 0.0
    %2097 = vmatpush1.msra.mxu0 0.0
    %2098 = vmatprep.subr.mxu0 0.0
    %2099 = vmatpush1.msra.mxu0 0.0
    %2100 = vmatprep.mubr.f32.mxu0 0.0
    %2101 = vmatmul.mubr.f32.gmra.mrb[0].mxu0 %v1959
    %v2102 = vpop.f32.mrb[0].mxu0
    %v2103 = vadd.f32 0.0, %v2102
    %v2104 = vpop.f32.mrb[0].mxu0
    %v2105 = vadd.f32 0.0, %v2104
    %2106 = vdwg.mxu0
    %2107 = vmatprep.subr.mxu0 %v838
    %2108 = vmatpush1.msra.mxu0 %v837
    %2109 = vmatprep.subr.mxu0 %v842
    %2110 = vmatpush1.msra.mxu0 %v841
    %2111 = vmatprep.subr.mxu0 %v846
    %2112 = vmatpush1.msra.mxu0 %v845
    %2113 = vmatprep.subr.mxu0 %v850
    %2114 = vmatpush1.msra.mxu0 %v849
    %2115 = vmatprep.subr.mxu0 %v854
    %2116 = vmatpush1.msra.mxu0 %v853
    %2117 = vmatprep.subr.mxu0 %v858
    %2118 = vmatpush1.msra.mxu0 %v857
    %2119 = vmatprep.subr.mxu0 %v862
    %2120 = vmatpush1.msra.mxu0 %v861
    %2121 = vmatprep.subr.mxu0 %v866
    %2122 = vmatpush1.msra.mxu0 %v865
    %2123 = vmatprep.subr.mxu0 %v870
    %2124 = vmatpush1.msra.mxu0 %v869
    %2125 = vmatprep.subr.mxu0 %v874
    %2126 = vmatpush1.msra.mxu0 %v873
    %2127 = vmatprep.subr.mxu0 %v878
    %2128 = vmatpush1.msra.mxu0 %v877
    %2129 = vmatprep.subr.mxu0 %v882
    %2130 = vmatpush1.msra.mxu0 %v881
    %2131 = vmatprep.subr.mxu0 %v886
    %2132 = vmatpush1.msra.mxu0 %v885
    %2133 = vmatprep.subr.mxu0 %v890
    %2134 = vmatpush1.msra.mxu0 %v889
    %2135 = vmatprep.subr.mxu0 %v894
    %2136 = vmatpush1.msra.mxu0 %v893
    %2137 = vmatprep.subr.mxu0 %v898
    %2138 = vmatpush1.msra.mxu0 %v897
    %2139 = vmatprep.subr.mxu0 0.0
    %2140 = vmatpush1.msra.mxu0 0.0
    %2141 = vmatprep.subr.mxu0 0.0
    %2142 = vmatpush1.msra.mxu0 0.0
    %2143 = vmatprep.subr.mxu0 0.0
    %2144 = vmatpush1.msra.mxu0 0.0
    %2145 = vmatprep.subr.mxu0 0.0
    %2146 = vmatpush1.msra.mxu0 0.0
    %2147 = vmatprep.subr.mxu0 0.0
    %2148 = vmatpush1.msra.mxu0 0.0
    %2149 = vmatprep.subr.mxu0 0.0
    %2150 = vmatpush1.msra.mxu0 0.0
    %2151 = vmatprep.subr.mxu0 0.0
    %2152 = vmatpush1.msra.mxu0 0.0
    %2153 = vmatprep.subr.mxu0 0.0
    %2154 = vmatpush1.msra.mxu0 0.0
    %2155 = vmatprep.subr.mxu0 0.0
    %2156 = vmatpush1.msra.mxu0 0.0
    %2157 = vmatprep.subr.mxu0 0.0
    %2158 = vmatpush1.msra.mxu0 0.0
    %2159 = vmatprep.subr.mxu0 0.0
    %2160 = vmatpush1.msra.mxu0 0.0
    %2161 = vmatprep.subr.mxu0 0.0
    %2162 = vmatpush1.msra.mxu0 0.0
    %2163 = vmatprep.subr.mxu0 0.0
    %2164 = vmatpush1.msra.mxu0 0.0
    %2165 = vmatprep.subr.mxu0 0.0
    %2166 = vmatpush1.msra.mxu0 0.0
    %2167 = vmatprep.subr.mxu0 0.0
    %2168 = vmatpush1.msra.mxu0 0.0
    %2169 = vmatprep.subr.mxu0 0.0
    %2170 = vmatpush1.msra.mxu0 0.0
    %2171 = vmatprep.mubr.f32.mxu0 0.0
    %2172 = vmatmul.mubr.f32.gmra.mrb[0].mxu0 %v1960
    %v2173 = vpop.f32.mrb[0].mxu0
    %v2174 = vadd.f32 0.0, %v2173
    %v2175 = vpop.f32.mrb[0].mxu0
    %v2176 = vadd.f32 0.0, %v2175
    %2177 = vdwg.mxu0
    %2178 = vmatprep.subr.mxu0 %v840
    %2179 = vmatpush1.msra.mxu0 %v839
    %2180 = vmatprep.subr.mxu0 %v844
    %2181 = vmatpush1.msra.mxu0 %v843
    %2182 = vmatprep.subr.mxu0 %v848
    %2183 = vmatpush1.msra.mxu0 %v847
    %2184 = vmatprep.subr.mxu0 %v852
    %2185 = vmatpush1.msra.mxu0 %v851
    %2186 = vmatprep.subr.mxu0 %v856
    %2187 = vmatpush1.msra.mxu0 %v855
    %2188 = vmatprep.subr.mxu0 %v860
    %2189 = vmatpush1.msra.mxu0 %v859
    %2190 = vmatprep.subr.mxu0 %v864
    %2191 = vmatpush1.msra.mxu0 %v863
    %2192 = vmatprep.subr.mxu0 %v868
    %2193 = vmatpush1.msra.mxu0 %v867
    %2194 = vmatprep.subr.mxu0 %v872
    %2195 = vmatpush1.msra.mxu0 %v871
    %2196 = vmatprep.subr.mxu0 %v876
    %2197 = vmatpush1.msra.mxu0 %v875
    %2198 = vmatprep.subr.mxu0 %v880
    %2199 = vmatpush1.msra.mxu0 %v879
    %2200 = vmatprep.subr.mxu0 %v884
    %2201 = vmatpush1.msra.mxu0 %v883
    %2202 = vmatprep.subr.mxu0 %v888
    %2203 = vmatpush1.msra.mxu0 %v887
    %2204 = vmatprep.subr.mxu0 %v892
    %2205 = vmatpush1.msra.mxu0 %v891
    %2206 = vmatprep.subr.mxu0 %v896
    %2207 = vmatpush1.msra.mxu0 %v895
    %2208 = vmatprep.subr.mxu0 %v900
    %2209 = vmatpush1.msra.mxu0 %v899
    %2210 = vmatprep.subr.mxu0 0.0
    %2211 = vmatpush1.msra.mxu0 0.0
    %2212 = vmatprep.subr.mxu0 0.0
    %2213 = vmatpush1.msra.mxu0 0.0
    %2214 = vmatprep.subr.mxu0 0.0
    %2215 = vmatpush1.msra.mxu0 0.0
    %2216 = vmatprep.subr.mxu0 0.0
    %2217 = vmatpush1.msra.mxu0 0.0
    %2218 = vmatprep.subr.mxu0 0.0
    %2219 = vmatpush1.msra.mxu0 0.0
    %2220 = vmatprep.subr.mxu0 0.0
    %2221 = vmatpush1.msra.mxu0 0.0
    %2222 = vmatprep.subr.mxu0 0.0
    %2223 = vmatpush1.msra.mxu0 0.0
    %2224 = vmatprep.subr.mxu0 0.0
    %2225 = vmatpush1.msra.mxu0 0.0
    %2226 = vmatprep.subr.mxu0 0.0
    %2227 = vmatpush1.msra.mxu0 0.0
    %2228 = vmatprep.subr.mxu0 0.0
    %2229 = vmatpush1.msra.mxu0 0.0
    %2230 = vmatprep.subr.mxu0 0.0
    %2231 = vmatpush1.msra.mxu0 0.0
    %2232 = vmatprep.subr.mxu0 0.0
    %2233 = vmatpush1.msra.mxu0 0.0
    %2234 = vmatprep.subr.mxu0 0.0
    %2235 = vmatpush1.msra.mxu0 0.0
    %2236 = vmatprep.subr.mxu0 0.0
    %2237 = vmatpush1.msra.mxu0 0.0
    %2238 = vmatprep.subr.mxu0 0.0
    %2239 = vmatpush1.msra.mxu0 0.0
    %2240 = vmatprep.subr.mxu0 0.0
    %2241 = vmatpush1.msra.mxu0 0.0
    %2242 = vmatprep.mubr.f32.mxu0 0.0
    %2243 = vmatmul.mubr.f32.gmra.mrb[0].mxu0 %v1960
    %v2244 = vpop.f32.mrb[0].mxu0
    %v2245 = vadd.f32 0.0, %v2244
    %v2246 = vpop.f32.mrb[0].mxu0
    %v2247 = vadd.f32 0.0, %v2246
    %2248 = vdwg.mxu0
    %s2249 = scalar_lea.vmem [#allocation2], 96
    %v2250 = vld [vmem:[%s2249] sm:$0xff]
    %v2251 = vld [vmem:[%s2249 + $0x8] sm:$0xff]
    %v2252 = vld [vmem:[%s2249 + $0x10] sm:$0xff]
    %v2253 = vld [vmem:[%s2249 + $0x18] sm:$0xff]
    %v2254 = vadd.f32 %v2250, %v2032
    %v2255 = vadd.f32 %v2251, %v2034
    %v2256 = vadd.f32 %v2252, %v2103
    %v2257 = vadd.f32 %v2253, %v2105
    %s2258 = scalar_lea.vmem [#allocation2], 384
    %v2259 = vld [vmem:[%s2258] sm:$0xff]
    %v2260 = vld [vmem:[%s2258 + $0x8] sm:$0xff]
    %v2261 = vld [vmem:[%s2258 + $0x10] sm:$0xff]
    %v2262 = vld [vmem:[%s2258 + $0x18] sm:$0xff]
    %v2263 = vadd.f32 %v2259, %v2174
    %v2264 = vadd.f32 %v2260, %v2176
    %v2265 = vadd.f32 %v2261, %v2245
    %v2266 = vadd.f32 %v2262, %v2247
    %v2267 = vxor.u32 %v2254, 2147483648
    %v2268 = vxor.u32 %v2263, 2147483648
    %v2269 = vmul.f32 %v2267, 1.442695
    %v2270 = vpow.pop %v2269
    %v2271 = vmul.f32 %v2268, 1.442695
    %v2272 = vpow.pop %v2271
    %v2273 = vadd.f32 %v2270, 1.0
    %v2274 = vadd.f32 %v2272, 1.0
    %v2275 = vrcp.pop %v2273
    %v2276 = vmul.f32 1.0, %v2275
    %v2277 = vrcp.pop %v2274
    %v2278 = vmul.f32 1.0, %v2277
    %v2279 = vxor.u32 %v2255, 2147483648
    %v2280 = vxor.u32 %v2264, 2147483648
    %v2281 = vmul.f32 %v2279, 1.442695
    %v2282 = vpow.pop %v2281
    %v2283 = vmul.f32 %v2280, 1.442695
    %v2284 = vpow.pop %v2283
    %v2285 = vadd.f32 %v2282, 1.0
    %v2286 = vadd.f32 %v2284, 1.0
    %v2287 = vrcp.pop %v2285
    %v2288 = vmul.f32 1.0, %v2287
    %v2289 = vrcp.pop %v2286
    %v2290 = vmul.f32 1.0, %v2289
    %v2291 = vtanh.pop %v2256
    %v2292 = vtanh.pop %v2265
    %v2293 = vxor.u32 %v2257, 2147483648
    %v2294 = vxor.u32 %v2266, 2147483648
    %v2295 = vmul.f32 %v2293, 1.442695
    %v2296 = vpow.pop %v2295
    %v2297 = vmul.f32 %v2294, 1.442695
    %v2298 = vpow.pop %v2297
    %v2299 = vadd.f32 %v2296, 1.0
    %v2300 = vadd.f32 %v2298, 1.0
    %v2301 = vrcp.pop %v2299
    %v2302 = vmul.f32 1.0, %v2301
    %v2303 = vrcp.pop %v2300
    %v2304 = vmul.f32 1.0, %v2303
    %v2305 = vmul.f32 %v2288, %v1955
    %v2306 = vmul.f32 %v2290, %v1956
    %v2307 = vmul.f32 %v2276, %v2291
    %v2308 = vmul.f32 %v2278, %v2292
    %v2309 = vadd.f32 %v2305, %v2307
    %v2310 = vadd.f32 %v2306, %v2308
    %v2311 = vtanh.pop %v2309
    %v2312 = vtanh.pop %v2310
    %v2313 = vmul.f32 %v2302, %v2311
    %v2314 = vmul.f32 %v2304, %v2312
    %s2315 = scalar_lea.vmem [#allocation16], 24
    %2316 = vst [vmem:[%s2315] sm:$0xff] %v2313
    %s2317 = scalar_lea.vmem [#allocation17], 32
    %2318 = vst [vmem:[%s2317] sm:$0xff] %v2314
    %2319 = vmatprep.subr.mxu0 %v774
    %2320 = vmatpush1.msra.mxu0 %v773
    %2321 = vmatprep.subr.mxu0 %v778
    %2322 = vmatpush1.msra.mxu0 %v777
    %2323 = vmatprep.subr.mxu0 %v782
    %2324 = vmatpush1.msra.mxu0 %v781
    %2325 = vmatprep.subr.mxu0 %v786
    %2326 = vmatpush1.msra.mxu0 %v785
    %2327 = vmatprep.subr.mxu0 %v790
    %2328 = vmatpush1.msra.mxu0 %v789
    %2329 = vmatprep.subr.mxu0 %v794
    %2330 = vmatpush1.msra.mxu0 %v793
    %2331 = vmatprep.subr.mxu0 %v798
    %2332 = vmatpush1.msra.mxu0 %v797
    %2333 = vmatprep.subr.mxu0 %v802
    %2334 = vmatpush1.msra.mxu0 %v801
    %2335 = vmatprep.subr.mxu0 %v806
    %2336 = vmatpush1.msra.mxu0 %v805
    %2337 = vmatprep.subr.mxu0 %v810
    %2338 = vmatpush1.msra.mxu0 %v809
    %2339 = vmatprep.subr.mxu0 %v814
    %2340 = vmatpush1.msra.mxu0 %v813
    %2341 = vmatprep.subr.mxu0 %v818
    %2342 = vmatpush1.msra.mxu0 %v817
    %2343 = vmatprep.subr.mxu0 %v822
    %2344 = vmatpush1.msra.mxu0 %v821
    %2345 = vmatprep.subr.mxu0 %v826
    %2346 = vmatpush1.msra.mxu0 %v825
    %2347 = vmatprep.subr.mxu0 %v830
    %2348 = vmatpush1.msra.mxu0 %v829
    %2349 = vmatprep.subr.mxu0 %v834
    %2350 = vmatpush1.msra.mxu0 %v833
    %2351 = vmatprep.subr.mxu0 0.0
    %2352 = vmatpush1.msra.mxu0 0.0
    %2353 = vmatprep.subr.mxu0 0.0
    %2354 = vmatpush1.msra.mxu0 0.0
    %2355 = vmatprep.subr.mxu0 0.0
    %2356 = vmatpush1.msra.mxu0 0.0
    %2357 = vmatprep.subr.mxu0 0.0
    %2358 = vmatpush1.msra.mxu0 0.0
    %2359 = vmatprep.subr.mxu0 0.0
    %2360 = vmatpush1.msra.mxu0 0.0
    %2361 = vmatprep.subr.mxu0 0.0
    %2362 = vmatpush1.msra.mxu0 0.0
    %2363 = vmatprep.subr.mxu0 0.0
    %2364 = vmatpush1.msra.mxu0 0.0
    %2365 = vmatprep.subr.mxu0 0.0
    %2366 = vmatpush1.msra.mxu0 0.0
    %2367 = vmatprep.subr.mxu0 0.0
    %2368 = vmatpush1.msra.mxu0 0.0
    %2369 = vmatprep.subr.mxu0 0.0
    %2370 = vmatpush1.msra.mxu0 0.0
    %2371 = vmatprep.subr.mxu0 0.0
    %2372 = vmatpush1.msra.mxu0 0.0
    %2373 = vmatprep.subr.mxu0 0.0
    %2374 = vmatpush1.msra.mxu0 0.0
    %2375 = vmatprep.subr.mxu0 0.0
    %2376 = vmatpush1.msra.mxu0 0.0
    %2377 = vmatprep.subr.mxu0 0.0
    %2378 = vmatpush1.msra.mxu0 0.0
    %2379 = vmatprep.subr.mxu0 0.0
    %2380 = vmatpush1.msra.mxu0 0.0
    %2381 = vmatprep.subr.mxu0 0.0
    %2382 = vmatpush1.msra.mxu0 0.0
    %2383 = vmatprep.mubr.f32.mxu0 0.0
    %2384 = vmatmul.mubr.f32.gmra.mrb[0].mxu0 %v2313
    %v2385 = vpop.f32.mrb[0].mxu0
    %v2386 = vadd.f32 0.0, %v2385
    %v2387 = vpop.f32.mrb[0].mxu0
    %v2388 = vadd.f32 0.0, %v2387
    %2389 = vdwg.mxu0
    %2390 = vmatprep.subr.mxu0 %v776
    %2391 = vmatpush1.msra.mxu0 %v775
    %2392 = vmatprep.subr.mxu0 %v780
    %2393 = vmatpush1.msra.mxu0 %v779
    %2394 = vmatprep.subr.mxu0 %v784
    %2395 = vmatpush1.msra.mxu0 %v783
    %2396 = vmatprep.subr.mxu0 %v788
    %2397 = vmatpush1.msra.mxu0 %v787
    %2398 = vmatprep.subr.mxu0 %v792
    %2399 = vmatpush1.msra.mxu0 %v791
    %2400 = vmatprep.subr.mxu0 %v796
    %2401 = vmatpush1.msra.mxu0 %v795
    %2402 = vmatprep.subr.mxu0 %v800
    %2403 = vmatpush1.msra.mxu0 %v799
    %2404 = vmatprep.subr.mxu0 %v804
    %2405 = vmatpush1.msra.mxu0 %v803
    %2406 = vmatprep.subr.mxu0 %v808
    %2407 = vmatpush1.msra.mxu0 %v807
    %2408 = vmatprep.subr.mxu0 %v812
    %2409 = vmatpush1.msra.mxu0 %v811
    %2410 = vmatprep.subr.mxu0 %v816
    %2411 = vmatpush1.msra.mxu0 %v815
    %2412 = vmatprep.subr.mxu0 %v820
    %2413 = vmatpush1.msra.mxu0 %v819
    %2414 = vmatprep.subr.mxu0 %v824
    %2415 = vmatpush1.msra.mxu0 %v823
    %2416 = vmatprep.subr.mxu0 %v828
    %2417 = vmatpush1.msra.mxu0 %v827
    %2418 = vmatprep.subr.mxu0 %v832
    %2419 = vmatpush1.msra.mxu0 %v831
    %2420 = vmatprep.subr.mxu0 %v836
    %2421 = vmatpush1.msra.mxu0 %v835
    %2422 = vmatprep.subr.mxu0 0.0
    %2423 = vmatpush1.msra.mxu0 0.0
    %2424 = vmatprep.subr.mxu0 0.0
    %2425 = vmatpush1.msra.mxu0 0.0
    %2426 = vmatprep.subr.mxu0 0.0
    %2427 = vmatpush1.msra.mxu0 0.0
    %2428 = vmatprep.subr.mxu0 0.0
    %2429 = vmatpush1.msra.mxu0 0.0
    %2430 = vmatprep.subr.mxu0 0.0
    %2431 = vmatpush1.msra.mxu0 0.0
    %2432 = vmatprep.subr.mxu0 0.0
    %2433 = vmatpush1.msra.mxu0 0.0
    %2434 = vmatprep.subr.mxu0 0.0
    %2435 = vmatpush1.msra.mxu0 0.0
    %2436 = vmatprep.subr.mxu0 0.0
    %2437 = vmatpush1.msra.mxu0 0.0
    %2438 = vmatprep.subr.mxu0 0.0
    %2439 = vmatpush1.msra.mxu0 0.0
    %2440 = vmatprep.subr.mxu0 0.0
    %2441 = vmatpush1.msra.mxu0 0.0
    %2442 = vmatprep.subr.mxu0 0.0
    %2443 = vmatpush1.msra.mxu0 0.0
    %2444 = vmatprep.subr.mxu0 0.0
    %2445 = vmatpush1.msra.mxu0 0.0
    %2446 = vmatprep.subr.mxu0 0.0
    %2447 = vmatpush1.msra.mxu0 0.0
    %2448 = vmatprep.subr.mxu0 0.0
    %2449 = vmatpush1.msra.mxu0 0.0
    %2450 = vmatprep.subr.mxu0 0.0
    %2451 = vmatpush1.msra.mxu0 0.0
    %2452 = vmatprep.subr.mxu0 0.0
    %2453 = vmatpush1.msra.mxu0 0.0
    %2454 = vmatprep.mubr.f32.mxu0 0.0
    %2455 = vmatmul.mubr.f32.gmra.mrb[0].mxu0 %v2313
    %v2456 = vpop.f32.mrb[0].mxu0
    %v2457 = vadd.f32 0.0, %v2456
    %v2458 = vpop.f32.mrb[0].mxu0
    %v2459 = vadd.f32 0.0, %v2458
    %2460 = vdwg.mxu0
    %2461 = vmatprep.subr.mxu0 %v838
    %2462 = vmatpush1.msra.mxu0 %v837
    %2463 = vmatprep.subr.mxu0 %v842
    %2464 = vmatpush1.msra.mxu0 %v841
    %2465 = vmatprep.subr.mxu0 %v846
    %2466 = vmatpush1.msra.mxu0 %v845
    %2467 = vmatprep.subr.mxu0 %v850
    %2468 = vmatpush1.msra.mxu0 %v849
    %2469 = vmatprep.subr.mxu0 %v854
    %2470 = vmatpush1.msra.mxu0 %v853
    %2471 = vmatprep.subr.mxu0 %v858
    %2472 = vmatpush1.msra.mxu0 %v857
    %2473 = vmatprep.subr.mxu0 %v862
    %2474 = vmatpush1.msra.mxu0 %v861
    %2475 = vmatprep.subr.mxu0 %v866
    %2476 = vmatpush1.msra.mxu0 %v865
    %2477 = vmatprep.subr.mxu0 %v870
    %2478 = vmatpush1.msra.mxu0 %v869
    %2479 = vmatprep.subr.mxu0 %v874
    %2480 = vmatpush1.msra.mxu0 %v873
    %2481 = vmatprep.subr.mxu0 %v878
    %2482 = vmatpush1.msra.mxu0 %v877
    %2483 = vmatprep.subr.mxu0 %v882
    %2484 = vmatpush1.msra.mxu0 %v881
    %2485 = vmatprep.subr.mxu0 %v886
    %2486 = vmatpush1.msra.mxu0 %v885
    %2487 = vmatprep.subr.mxu0 %v890
    %2488 = vmatpush1.msra.mxu0 %v889
    %2489 = vmatprep.subr.mxu0 %v894
    %2490 = vmatpush1.msra.mxu0 %v893
    %2491 = vmatprep.subr.mxu0 %v898
    %2492 = vmatpush1.msra.mxu0 %v897
    %2493 = vmatprep.subr.mxu0 0.0
    %2494 = vmatpush1.msra.mxu0 0.0
    %2495 = vmatprep.subr.mxu0 0.0
    %2496 = vmatpush1.msra.mxu0 0.0
    %2497 = vmatprep.subr.mxu0 0.0
    %2498 = vmatpush1.msra.mxu0 0.0
    %2499 = vmatprep.subr.mxu0 0.0
    %2500 = vmatpush1.msra.mxu0 0.0
    %2501 = vmatprep.subr.mxu0 0.0
    %2502 = vmatpush1.msra.mxu0 0.0
    %2503 = vmatprep.subr.mxu0 0.0
    %2504 = vmatpush1.msra.mxu0 0.0
    %2505 = vmatprep.subr.mxu0 0.0
    %2506 = vmatpush1.msra.mxu0 0.0
    %2507 = vmatprep.subr.mxu0 0.0
    %2508 = vmatpush1.msra.mxu0 0.0
    %2509 = vmatprep.subr.mxu0 0.0
    %2510 = vmatpush1.msra.mxu0 0.0
    %2511 = vmatprep.subr.mxu0 0.0
    %2512 = vmatpush1.msra.mxu0 0.0
    %2513 = vmatprep.subr.mxu0 0.0
    %2514 = vmatpush1.msra.mxu0 0.0
    %2515 = vmatprep.subr.mxu0 0.0
    %2516 = vmatpush1.msra.mxu0 0.0
    %2517 = vmatprep.subr.mxu0 0.0
    %2518 = vmatpush1.msra.mxu0 0.0
    %2519 = vmatprep.subr.mxu0 0.0
    %2520 = vmatpush1.msra.mxu0 0.0
    %2521 = vmatprep.subr.mxu0 0.0
    %2522 = vmatpush1.msra.mxu0 0.0
    %2523 = vmatprep.subr.mxu0 0.0
    %2524 = vmatpush1.msra.mxu0 0.0
    %2525 = vmatprep.mubr.f32.mxu0 0.0
    %2526 = vmatmul.mubr.f32.gmra.mrb[0].mxu0 %v2314
    %v2527 = vpop.f32.mrb[0].mxu0
    %v2528 = vadd.f32 0.0, %v2527
    %v2529 = vpop.f32.mrb[0].mxu0
    %v2530 = vadd.f32 0.0, %v2529
    %2531 = vdwg.mxu0
    %2532 = vmatprep.subr.mxu0 %v840
    %2533 = vmatpush1.msra.mxu0 %v839
    %2534 = vmatprep.subr.mxu0 %v844
    %2535 = vmatpush1.msra.mxu0 %v843
    %2536 = vmatprep.subr.mxu0 %v848
    %2537 = vmatpush1.msra.mxu0 %v847
    %2538 = vmatprep.subr.mxu0 %v852
    %2539 = vmatpush1.msra.mxu0 %v851
    %2540 = vmatprep.subr.mxu0 %v856
    %2541 = vmatpush1.msra.mxu0 %v855
    %2542 = vmatprep.subr.mxu0 %v860
    %2543 = vmatpush1.msra.mxu0 %v859
    %2544 = vmatprep.subr.mxu0 %v864
    %2545 = vmatpush1.msra.mxu0 %v863
    %2546 = vmatprep.subr.mxu0 %v868
    %2547 = vmatpush1.msra.mxu0 %v867
    %2548 = vmatprep.subr.mxu0 %v872
    %2549 = vmatpush1.msra.mxu0 %v871
    %2550 = vmatprep.subr.mxu0 %v876
    %2551 = vmatpush1.msra.mxu0 %v875
    %2552 = vmatprep.subr.mxu0 %v880
    %2553 = vmatpush1.msra.mxu0 %v879
    %2554 = vmatprep.subr.mxu0 %v884
    %2555 = vmatpush1.msra.mxu0 %v883
    %2556 = vmatprep.subr.mxu0 %v888
    %2557 = vmatpush1.msra.mxu0 %v887
    %2558 = vmatprep.subr.mxu0 %v892
    %2559 = vmatpush1.msra.mxu0 %v891
    %2560 = vmatprep.subr.mxu0 %v896
    %2561 = vmatpush1.msra.mxu0 %v895
    %2562 = vmatprep.subr.mxu0 %v900
    %2563 = vmatpush1.msra.mxu0 %v899
    %2564 = vmatprep.subr.mxu0 0.0
    %2565 = vmatpush1.msra.mxu0 0.0
    %2566 = vmatprep.subr.mxu0 0.0
    %2567 = vmatpush1.msra.mxu0 0.0
    %2568 = vmatprep.subr.mxu0 0.0
    %2569 = vmatpush1.msra.mxu0 0.0
    %2570 = vmatprep.subr.mxu0 0.0
    %2571 = vmatpush1.msra.mxu0 0.0
    %2572 = vmatprep.subr.mxu0 0.0
    %2573 = vmatpush1.msra.mxu0 0.0
    %2574 = vmatprep.subr.mxu0 0.0
    %2575 = vmatpush1.msra.mxu0 0.0
    %2576 = vmatprep.subr.mxu0 0.0
    %2577 = vmatpush1.msra.mxu0 0.0
    %2578 = vmatprep.subr.mxu0 0.0
    %2579 = vmatpush1.msra.mxu0 0.0
    %2580 = vmatprep.subr.mxu0 0.0
    %2581 = vmatpush1.msra.mxu0 0.0
    %2582 = vmatprep.subr.mxu0 0.0
    %2583 = vmatpush1.msra.mxu0 0.0
    %2584 = vmatprep.subr.mxu0 0.0
    %2585 = vmatpush1.msra.mxu0 0.0
    %2586 = vmatprep.subr.mxu0 0.0
    %2587 = vmatpush1.msra.mxu0 0.0
    %2588 = vmatprep.subr.mxu0 0.0
    %2589 = vmatpush1.msra.mxu0 0.0
    %2590 = vmatprep.subr.mxu0 0.0
    %2591 = vmatpush1.msra.mxu0 0.0
    %2592 = vmatprep.subr.mxu0 0.0
    %2593 = vmatpush1.msra.mxu0 0.0
    %2594 = vmatprep.subr.mxu0 0.0
    %2595 = vmatpush1.msra.mxu0 0.0
    %2596 = vmatprep.mubr.f32.mxu0 0.0
    %2597 = vmatmul.mubr.f32.gmra.mrb[0].mxu0 %v2314
    %v2598 = vpop.f32.mrb[0].mxu0
    %v2599 = vadd.f32 0.0, %v2598
    %v2600 = vpop.f32.mrb[0].mxu0
    %v2601 = vadd.f32 0.0, %v2600
    %2602 = vdwg.mxu0
    %s2603 = scalar_lea.vmem [#allocation2], 128
    %v2604 = vld [vmem:[%s2603] sm:$0xff]
    %v2605 = vld [vmem:[%s2603 + $0x8] sm:$0xff]
    %v2606 = vld [vmem:[%s2603 + $0x10] sm:$0xff]
    %v2607 = vld [vmem:[%s2603 + $0x18] sm:$0xff]
    %v2608 = vadd.f32 %v2604, %v2386
    %v2609 = vadd.f32 %v2605, %v2388
    %v2610 = vadd.f32 %v2606, %v2457
    %v2611 = vadd.f32 %v2607, %v2459
    %s2612 = scalar_lea.vmem [#allocation2], 352
    %v2613 = vld [vmem:[%s2612] sm:$0xff]
    %v2614 = vld [vmem:[%s2612 + $0x8] sm:$0xff]
    %v2615 = vld [vmem:[%s2612 + $0x10] sm:$0xff]
    %v2616 = vld [vmem:[%s2612 + $0x18] sm:$0xff]
    %v2617 = vadd.f32 %v2613, %v2528
    %v2618 = vadd.f32 %v2614, %v2530
    %v2619 = vadd.f32 %v2615, %v2599
    %v2620 = vadd.f32 %v2616, %v2601
    %v2621 = vxor.u32 %v2608, 2147483648
    %v2622 = vxor.u32 %v2617, 2147483648
    %v2623 = vmul.f32 %v2621, 1.442695
    %v2624 = vpow.pop %v2623
    %v2625 = vmul.f32 %v2622, 1.442695
    %v2626 = vpow.pop %v2625
    %v2627 = vadd.f32 %v2624, 1.0
    %v2628 = vadd.f32 %v2626, 1.0
    %v2629 = vrcp.pop %v2627
    %v2630 = vmul.f32 1.0, %v2629
    %v2631 = vrcp.pop %v2628
    %v2632 = vmul.f32 1.0, %v2631
    %v2633 = vxor.u32 %v2609, 2147483648
    %v2634 = vxor.u32 %v2618, 2147483648
    %v2635 = vmul.f32 %v2633, 1.442695
    %v2636 = vpow.pop %v2635
    %v2637 = vmul.f32 %v2634, 1.442695
    %v2638 = vpow.pop %v2637
    %v2639 = vadd.f32 %v2636, 1.0
    %v2640 = vadd.f32 %v2638, 1.0
    %v2641 = vrcp.pop %v2639
    %v2642 = vmul.f32 1.0, %v2641
    %v2643 = vrcp.pop %v2640
    %v2644 = vmul.f32 1.0, %v2643
    %v2645 = vtanh.pop %v2610
    %v2646 = vtanh.pop %v2619
    %v2647 = vxor.u32 %v2611, 2147483648
    %v2648 = vxor.u32 %v2620, 2147483648
    %v2649 = vmul.f32 %v2647, 1.442695
    %v2650 = vpow.pop %v2649
    %v2651 = vmul.f32 %v2648, 1.442695
    %v2652 = vpow.pop %v2651
    %v2653 = vadd.f32 %v2650, 1.0
    %v2654 = vadd.f32 %v2652, 1.0
    %v2655 = vrcp.pop %v2653
    %v2656 = vmul.f32 1.0, %v2655
    %v2657 = vrcp.pop %v2654
    %v2658 = vmul.f32 1.0, %v2657
    %v2659 = vmul.f32 %v2642, %v2309
    %v2660 = vmul.f32 %v2644, %v2310
    %v2661 = vmul.f32 %v2630, %v2645
    %v2662 = vmul.f32 %v2632, %v2646
    %v2663 = vadd.f32 %v2659, %v2661
    %v2664 = vadd.f32 %v2660, %v2662
    %v2665 = vtanh.pop %v2663
    %v2666 = vtanh.pop %v2664
    %v2667 = vmul.f32 %v2656, %v2665
    %v2668 = vmul.f32 %v2658, %v2666
    %s2669 = scalar_lea.vmem [#allocation16], 32
    %2670 = vst [vmem:[%s2669] sm:$0xff] %v2667
    %s2671 = scalar_lea.vmem [#allocation17], 24
    %2672 = vst [vmem:[%s2671] sm:$0xff] %v2668
    %2673 = vmatprep.subr.mxu0 %v774
    %2674 = vmatpush1.msra.mxu0 %v773
    %2675 = vmatprep.subr.mxu0 %v778
    %2676 = vmatpush1.msra.mxu0 %v777
    %2677 = vmatprep.subr.mxu0 %v782
    %2678 = vmatpush1.msra.mxu0 %v781
    %2679 = vmatprep.subr.mxu0 %v786
    %2680 = vmatpush1.msra.mxu0 %v785
    %2681 = vmatprep.subr.mxu0 %v790
    %2682 = vmatpush1.msra.mxu0 %v789
    %2683 = vmatprep.subr.mxu0 %v794
    %2684 = vmatpush1.msra.mxu0 %v793
    %2685 = vmatprep.subr.mxu0 %v798
    %2686 = vmatpush1.msra.mxu0 %v797
    %2687 = vmatprep.subr.mxu0 %v802
    %2688 = vmatpush1.msra.mxu0 %v801
    %2689 = vmatprep.subr.mxu0 %v806
    %2690 = vmatpush1.msra.mxu0 %v805
    %2691 = vmatprep.subr.mxu0 %v810
    %2692 = vmatpush1.msra.mxu0 %v809
    %2693 = vmatprep.subr.mxu0 %v814
    %2694 = vmatpush1.msra.mxu0 %v813
    %2695 = vmatprep.subr.mxu0 %v818
    %2696 = vmatpush1.msra.mxu0 %v817
    %2697 = vmatprep.subr.mxu0 %v822
    %2698 = vmatpush1.msra.mxu0 %v821
    %2699 = vmatprep.subr.mxu0 %v826
    %2700 = vmatpush1.msra.mxu0 %v825
    %2701 = vmatprep.subr.mxu0 %v830
    %2702 = vmatpush1.msra.mxu0 %v829
    %2703 = vmatprep.subr.mxu0 %v834
    %2704 = vmatpush1.msra.mxu0 %v833
    %2705 = vmatprep.subr.mxu0 0.0
    %2706 = vmatpush1.msra.mxu0 0.0
    %2707 = vmatprep.subr.mxu0 0.0
    %2708 = vmatpush1.msra.mxu0 0.0
    %2709 = vmatprep.subr.mxu0 0.0
    %2710 = vmatpush1.msra.mxu0 0.0
    %2711 = vmatprep.subr.mxu0 0.0
    %2712 = vmatpush1.msra.mxu0 0.0
    %2713 = vmatprep.subr.mxu0 0.0
    %2714 = vmatpush1.msra.mxu0 0.0
    %2715 = vmatprep.subr.mxu0 0.0
    %2716 = vmatpush1.msra.mxu0 0.0
    %2717 = vmatprep.subr.mxu0 0.0
    %2718 = vmatpush1.msra.mxu0 0.0
    %2719 = vmatprep.subr.mxu0 0.0
    %2720 = vmatpush1.msra.mxu0 0.0
    %2721 = vmatprep.subr.mxu0 0.0
    %2722 = vmatpush1.msra.mxu0 0.0
    %2723 = vmatprep.subr.mxu0 0.0
    %2724 = vmatpush1.msra.mxu0 0.0
    %2725 = vmatprep.subr.mxu0 0.0
    %2726 = vmatpush1.msra.mxu0 0.0
    %2727 = vmatprep.subr.mxu0 0.0
    %2728 = vmatpush1.msra.mxu0 0.0
    %2729 = vmatprep.subr.mxu0 0.0
    %2730 = vmatpush1.msra.mxu0 0.0
    %2731 = vmatprep.subr.mxu0 0.0
    %2732 = vmatpush1.msra.mxu0 0.0
    %2733 = vmatprep.subr.mxu0 0.0
    %2734 = vmatpush1.msra.mxu0 0.0
    %2735 = vmatprep.subr.mxu0 0.0
    %2736 = vmatpush1.msra.mxu0 0.0
    %2737 = vmatprep.mubr.f32.mxu0 0.0
    %2738 = vmatmul.mubr.f32.gmra.mrb[0].mxu0 %v2667
    %v2739 = vpop.f32.mrb[0].mxu0
    %v2740 = vadd.f32 0.0, %v2739
    %v2741 = vpop.f32.mrb[0].mxu0
    %v2742 = vadd.f32 0.0, %v2741
    %2743 = vdwg.mxu0
    %2744 = vmatprep.subr.mxu0 %v776
    %2745 = vmatpush1.msra.mxu0 %v775
    %2746 = vmatprep.subr.mxu0 %v780
    %2747 = vmatpush1.msra.mxu0 %v779
    %2748 = vmatprep.subr.mxu0 %v784
    %2749 = vmatpush1.msra.mxu0 %v783
    %2750 = vmatprep.subr.mxu0 %v788
    %2751 = vmatpush1.msra.mxu0 %v787
    %2752 = vmatprep.subr.mxu0 %v792
    %2753 = vmatpush1.msra.mxu0 %v791
    %2754 = vmatprep.subr.mxu0 %v796
    %2755 = vmatpush1.msra.mxu0 %v795
    %2756 = vmatprep.subr.mxu0 %v800
    %2757 = vmatpush1.msra.mxu0 %v799
    %2758 = vmatprep.subr.mxu0 %v804
    %2759 = vmatpush1.msra.mxu0 %v803
    %2760 = vmatprep.subr.mxu0 %v808
    %2761 = vmatpush1.msra.mxu0 %v807
    %2762 = vmatprep.subr.mxu0 %v812
    %2763 = vmatpush1.msra.mxu0 %v811
    %2764 = vmatprep.subr.mxu0 %v816
    %2765 = vmatpush1.msra.mxu0 %v815
    %2766 = vmatprep.subr.mxu0 %v820
    %2767 = vmatpush1.msra.mxu0 %v819
    %2768 = vmatprep.subr.mxu0 %v824
    %2769 = vmatpush1.msra.mxu0 %v823
    %2770 = vmatprep.subr.mxu0 %v828
    %2771 = vmatpush1.msra.mxu0 %v827
    %2772 = vmatprep.subr.mxu0 %v832
    %2773 = vmatpush1.msra.mxu0 %v831
    %2774 = vmatprep.subr.mxu0 %v836
    %2775 = vmatpush1.msra.mxu0 %v835
    %2776 = vmatprep.subr.mxu0 0.0
    %2777 = vmatpush1.msra.mxu0 0.0
    %2778 = vmatprep.subr.mxu0 0.0
    %2779 = vmatpush1.msra.mxu0 0.0
    %2780 = vmatprep.subr.mxu0 0.0
    %2781 = vmatpush1.msra.mxu0 0.0
    %2782 = vmatprep.subr.mxu0 0.0
    %2783 = vmatpush1.msra.mxu0 0.0
    %2784 = vmatprep.subr.mxu0 0.0
    %2785 = vmatpush1.msra.mxu0 0.0
    %2786 = vmatprep.subr.mxu0 0.0
    %2787 = vmatpush1.msra.mxu0 0.0
    %2788 = vmatprep.subr.mxu0 0.0
    %2789 = vmatpush1.msra.mxu0 0.0
    %2790 = vmatprep.subr.mxu0 0.0
    %2791 = vmatpush1.msra.mxu0 0.0
    %2792 = vmatprep.subr.mxu0 0.0
    %2793 = vmatpush1.msra.mxu0 0.0
    %2794 = vmatprep.subr.mxu0 0.0
    %2795 = vmatpush1.msra.mxu0 0.0
    %2796 = vmatprep.subr.mxu0 0.0
    %2797 = vmatpush1.msra.mxu0 0.0
    %2798 = vmatprep.subr.mxu0 0.0
    %2799 = vmatpush1.msra.mxu0 0.0
    %2800 = vmatprep.subr.mxu0 0.0
    %2801 = vmatpush1.msra.mxu0 0.0
    %2802 = vmatprep.subr.mxu0 0.0
    %2803 = vmatpush1.msra.mxu0 0.0
    %2804 = vmatprep.subr.mxu0 0.0
    %2805 = vmatpush1.msra.mxu0 0.0
    %2806 = vmatprep.subr.mxu0 0.0
    %2807 = vmatpush1.msra.mxu0 0.0
    %2808 = vmatprep.mubr.f32.mxu0 0.0
    %2809 = vmatmul.mubr.f32.gmra.mrb[0].mxu0 %v2667
    %v2810 = vpop.f32.mrb[0].mxu0
    %v2811 = vadd.f32 0.0, %v2810
    %v2812 = vpop.f32.mrb[0].mxu0
    %v2813 = vadd.f32 0.0, %v2812
    %2814 = vdwg.mxu0
    %2815 = vmatprep.subr.mxu0 %v838
    %2816 = vmatpush1.msra.mxu0 %v837
    %2817 = vmatprep.subr.mxu0 %v842
    %2818 = vmatpush1.msra.mxu0 %v841
    %2819 = vmatprep.subr.mxu0 %v846
    %2820 = vmatpush1.msra.mxu0 %v845
    %2821 = vmatprep.subr.mxu0 %v850
    %2822 = vmatpush1.msra.mxu0 %v849
    %2823 = vmatprep.subr.mxu0 %v854
    %2824 = vmatpush1.msra.mxu0 %v853
    %2825 = vmatprep.subr.mxu0 %v858
    %2826 = vmatpush1.msra.mxu0 %v857
    %2827 = vmatprep.subr.mxu0 %v862
    %2828 = vmatpush1.msra.mxu0 %v861
    %2829 = vmatprep.subr.mxu0 %v866
    %2830 = vmatpush1.msra.mxu0 %v865
    %2831 = vmatprep.subr.mxu0 %v870
    %2832 = vmatpush1.msra.mxu0 %v869
    %2833 = vmatprep.subr.mxu0 %v874
    %2834 = vmatpush1.msra.mxu0 %v873
    %2835 = vmatprep.subr.mxu0 %v878
    %2836 = vmatpush1.msra.mxu0 %v877
    %2837 = vmatprep.subr.mxu0 %v882
    %2838 = vmatpush1.msra.mxu0 %v881
    %2839 = vmatprep.subr.mxu0 %v886
    %2840 = vmatpush1.msra.mxu0 %v885
    %2841 = vmatprep.subr.mxu0 %v890
    %2842 = vmatpush1.msra.mxu0 %v889
    %2843 = vmatprep.subr.mxu0 %v894
    %2844 = vmatpush1.msra.mxu0 %v893
    %2845 = vmatprep.subr.mxu0 %v898
    %2846 = vmatpush1.msra.mxu0 %v897
    %2847 = vmatprep.subr.mxu0 0.0
    %2848 = vmatpush1.msra.mxu0 0.0
    %2849 = vmatprep.subr.mxu0 0.0
    %2850 = vmatpush1.msra.mxu0 0.0
    %2851 = vmatprep.subr.mxu0 0.0
    %2852 = vmatpush1.msra.mxu0 0.0
    %2853 = vmatprep.subr.mxu0 0.0
    %2854 = vmatpush1.msra.mxu0 0.0
    %2855 = vmatprep.subr.mxu0 0.0
    %2856 = vmatpush1.msra.mxu0 0.0
    %2857 = vmatprep.subr.mxu0 0.0
    %2858 = vmatpush1.msra.mxu0 0.0
    %2859 = vmatprep.subr.mxu0 0.0
    %2860 = vmatpush1.msra.mxu0 0.0
    %2861 = vmatprep.subr.mxu0 0.0
    %2862 = vmatpush1.msra.mxu0 0.0
    %2863 = vmatprep.subr.mxu0 0.0
    %2864 = vmatpush1.msra.mxu0 0.0
    %2865 = vmatprep.subr.mxu0 0.0
    %2866 = vmatpush1.msra.mxu0 0.0
    %2867 = vmatprep.subr.mxu0 0.0
    %2868 = vmatpush1.msra.mxu0 0.0
    %2869 = vmatprep.subr.mxu0 0.0
    %2870 = vmatpush1.msra.mxu0 0.0
    %2871 = vmatprep.subr.mxu0 0.0
    %2872 = vmatpush1.msra.mxu0 0.0
    %2873 = vmatprep.subr.mxu0 0.0
    %2874 = vmatpush1.msra.mxu0 0.0
    %2875 = vmatprep.subr.mxu0 0.0
    %2876 = vmatpush1.msra.mxu0 0.0
    %2877 = vmatprep.subr.mxu0 0.0
    %2878 = vmatpush1.msra.mxu0 0.0
    %2879 = vmatprep.mubr.f32.mxu0 0.0
    %2880 = vmatmul.mubr.f32.gmra.mrb[0].mxu0 %v2668
    %v2881 = vpop.f32.mrb[0].mxu0
    %v2882 = vadd.f32 0.0, %v2881
    %v2883 = vpop.f32.mrb[0].mxu0
    %v2884 = vadd.f32 0.0, %v2883
    %2885 = vdwg.mxu0
    %2886 = vmatprep.subr.mxu0 %v840
    %2887 = vmatpush1.msra.mxu0 %v839
    %2888 = vmatprep.subr.mxu0 %v844
    %2889 = vmatpush1.msra.mxu0 %v843
    %2890 = vmatprep.subr.mxu0 %v848
    %2891 = vmatpush1.msra.mxu0 %v847
    %2892 = vmatprep.subr.mxu0 %v852
    %2893 = vmatpush1.msra.mxu0 %v851
    %2894 = vmatprep.subr.mxu0 %v856
    %2895 = vmatpush1.msra.mxu0 %v855
    %2896 = vmatprep.subr.mxu0 %v860
    %2897 = vmatpush1.msra.mxu0 %v859
    %2898 = vmatprep.subr.mxu0 %v864
    %2899 = vmatpush1.msra.mxu0 %v863
    %2900 = vmatprep.subr.mxu0 %v868
    %2901 = vmatpush1.msra.mxu0 %v867
    %2902 = vmatprep.subr.mxu0 %v872
    %2903 = vmatpush1.msra.mxu0 %v871
    %2904 = vmatprep.subr.mxu0 %v876
    %2905 = vmatpush1.msra.mxu0 %v875
    %2906 = vmatprep.subr.mxu0 %v880
    %2907 = vmatpush1.msra.mxu0 %v879
    %2908 = vmatprep.subr.mxu0 %v884
    %2909 = vmatpush1.msra.mxu0 %v883
    %2910 = vmatprep.subr.mxu0 %v888
    %2911 = vmatpush1.msra.mxu0 %v887
    %2912 = vmatprep.subr.mxu0 %v892
    %2913 = vmatpush1.msra.mxu0 %v891
    %2914 = vmatprep.subr.mxu0 %v896
    %2915 = vmatpush1.msra.mxu0 %v895
    %2916 = vmatprep.subr.mxu0 %v900
    %2917 = vmatpush1.msra.mxu0 %v899
    %2918 = vmatprep.subr.mxu0 0.0
    %2919 = vmatpush1.msra.mxu0 0.0
    %2920 = vmatprep.subr.mxu0 0.0
    %2921 = vmatpush1.msra.mxu0 0.0
    %2922 = vmatprep.subr.mxu0 0.0
    %2923 = vmatpush1.msra.mxu0 0.0
    %2924 = vmatprep.subr.mxu0 0.0
    %2925 = vmatpush1.msra.mxu0 0.0
    %2926 = vmatprep.subr.mxu0 0.0
    %2927 = vmatpush1.msra.mxu0 0.0
    %2928 = vmatprep.subr.mxu0 0.0
    %2929 = vmatpush1.msra.mxu0 0.0
    %2930 = vmatprep.subr.mxu0 0.0
    %2931 = vmatpush1.msra.mxu0 0.0
    %2932 = vmatprep.subr.mxu0 0.0
    %2933 = vmatpush1.msra.mxu0 0.0
    %2934 = vmatprep.subr.mxu0 0.0
    %2935 = vmatpush1.msra.mxu0 0.0
    %2936 = vmatprep.subr.mxu0 0.0
    %2937 = vmatpush1.msra.mxu0 0.0
    %2938 = vmatprep.subr.mxu0 0.0
    %2939 = vmatpush1.msra.mxu0 0.0
    %2940 = vmatprep.subr.mxu0 0.0
    %2941 = vmatpush1.msra.mxu0 0.0
    %2942 = vmatprep.subr.mxu0 0.0
    %2943 = vmatpush1.msra.mxu0 0.0
    %2944 = vmatprep.subr.mxu0 0.0
    %2945 = vmatpush1.msra.mxu0 0.0
    %2946 = vmatprep.subr.mxu0 0.0
    %2947 = vmatpush1.msra.mxu0 0.0
    %2948 = vmatprep.subr.mxu0 0.0
    %2949 = vmatpush1.msra.mxu0 0.0
    %2950 = vmatprep.mubr.f32.mxu0 0.0
    %2951 = vmatmul.mubr.f32.gmra.mrb[0].mxu0 %v2668
    %v2952 = vpop.f32.mrb[0].mxu0
    %v2953 = vadd.f32 0.0, %v2952
    %v2954 = vpop.f32.mrb[0].mxu0
    %v2955 = vadd.f32 0.0, %v2954
    %2956 = vdwg.mxu0
    %s2957 = scalar_lea.vmem [#allocation2], 160
    %v2958 = vld [vmem:[%s2957] sm:$0xff]
    %v2959 = vld [vmem:[%s2957 + $0x8] sm:$0xff]
    %v2960 = vld [vmem:[%s2957 + $0x10] sm:$0xff]
    %v2961 = vld [vmem:[%s2957 + $0x18] sm:$0xff]
    %v2962 = vadd.f32 %v2958, %v2740
    %v2963 = vadd.f32 %v2959, %v2742
    %v2964 = vadd.f32 %v2960, %v2811
    %v2965 = vadd.f32 %v2961, %v2813
    %s2966 = scalar_lea.vmem [#allocation2], 320
    %v2967 = vld [vmem:[%s2966] sm:$0xff]
    %v2968 = vld [vmem:[%s2966 + $0x8] sm:$0xff]
    %v2969 = vld [vmem:[%s2966 + $0x10] sm:$0xff]
    %v2970 = vld [vmem:[%s2966 + $0x18] sm:$0xff]
    %v2971 = vadd.f32 %v2967, %v2882
    %v2972 = vadd.f32 %v2968, %v2884
    %v2973 = vadd.f32 %v2969, %v2953
    %v2974 = vadd.f32 %v2970, %v2955
    %v2975 = vxor.u32 %v2962, 2147483648
    %v2976 = vxor.u32 %v2971, 2147483648
    %v2977 = vmul.f32 %v2975, 1.442695
    %v2978 = vpow.pop %v2977
    %v2979 = vmul.f32 %v2976, 1.442695
    %v2980 = vpow.pop %v2979
    %v2981 = vadd.f32 %v2978, 1.0
    %v2982 = vadd.f32 %v2980, 1.0
    %v2983 = vrcp.pop %v2981
    %v2984 = vmul.f32 1.0, %v2983
    %v2985 = vrcp.pop %v2982
    %v2986 = vmul.f32 1.0, %v2985
    %v2987 = vxor.u32 %v2963, 2147483648
    %v2988 = vxor.u32 %v2972, 2147483648
    %v2989 = vmul.f32 %v2987, 1.442695
    %v2990 = vpow.pop %v2989
    %v2991 = vmul.f32 %v2988, 1.442695
    %v2992 = vpow.pop %v2991
    %v2993 = vadd.f32 %v2990, 1.0
    %v2994 = vadd.f32 %v2992, 1.0
    %v2995 = vrcp.pop %v2993
    %v2996 = vmul.f32 1.0, %v2995
    %v2997 = vrcp.pop %v2994
    %v2998 = vmul.f32 1.0, %v2997
    %v2999 = vtanh.pop %v2964
    %v3000 = vtanh.pop %v2973
    %v3001 = vxor.u32 %v2965, 2147483648
    %v3002 = vxor.u32 %v2974, 2147483648
    %v3003 = vmul.f32 %v3001, 1.442695
    %v3004 = vpow.pop %v3003
    %v3005 = vmul.f32 %v3002, 1.442695
    %v3006 = vpow.pop %v3005
    %v3007 = vadd.f32 %v3004, 1.0
    %v3008 = vadd.f32 %v3006, 1.0
    %v3009 = vrcp.pop %v3007
    %v3010 = vmul.f32 1.0, %v3009
    %v3011 = vrcp.pop %v3008
    %v3012 = vmul.f32 1.0, %v3011
    %v3013 = vmul.f32 %v2996, %v2663
    %v3014 = vmul.f32 %v2998, %v2664
    %v3015 = vmul.f32 %v2984, %v2999
    %v3016 = vmul.f32 %v2986, %v3000
    %v3017 = vadd.f32 %v3013, %v3015
    %v3018 = vadd.f32 %v3014, %v3016
    %v3019 = vtanh.pop %v3017
    %v3020 = vtanh.pop %v3018
    %v3021 = vmul.f32 %v3010, %v3019
    %v3022 = vmul.f32 %v3012, %v3020
    %s3023 = scalar_lea.vmem [#allocation16], 40
    %3024 = vst [vmem:[%s3023] sm:$0xff] %v3021
    %s3025 = scalar_lea.vmem [#allocation17], 16
    %3026 = vst [vmem:[%s3025] sm:$0xff] %v3022
    %3027 = vmatprep.subr.mxu0 %v774
    %3028 = vmatpush1.msra.mxu0 %v773
    %3029 = vmatprep.subr.mxu0 %v778
    %3030 = vmatpush1.msra.mxu0 %v777
    %3031 = vmatprep.subr.mxu0 %v782
    %3032 = vmatpush1.msra.mxu0 %v781
    %3033 = vmatprep.subr.mxu0 %v786
    %3034 = vmatpush1.msra.mxu0 %v785
    %3035 = vmatprep.subr.mxu0 %v790
    %3036 = vmatpush1.msra.mxu0 %v789
    %3037 = vmatprep.subr.mxu0 %v794
    %3038 = vmatpush1.msra.mxu0 %v793
    %3039 = vmatprep.subr.mxu0 %v798
    %3040 = vmatpush1.msra.mxu0 %v797
    %3041 = vmatprep.subr.mxu0 %v802
    %3042 = vmatpush1.msra.mxu0 %v801
    %3043 = vmatprep.subr.mxu0 %v806
    %3044 = vmatpush1.msra.mxu0 %v805
    %3045 = vmatprep.subr.mxu0 %v810
    %3046 = vmatpush1.msra.mxu0 %v809
    %3047 = vmatprep.subr.mxu0 %v814
    %3048 = vmatpush1.msra.mxu0 %v813
    %3049 = vmatprep.subr.mxu0 %v818
    %3050 = vmatpush1.msra.mxu0 %v817
    %3051 = vmatprep.subr.mxu0 %v822
    %3052 = vmatpush1.msra.mxu0 %v821
    %3053 = vmatprep.subr.mxu0 %v826
    %3054 = vmatpush1.msra.mxu0 %v825
    %3055 = vmatprep.subr.mxu0 %v830
    %3056 = vmatpush1.msra.mxu0 %v829
    %3057 = vmatprep.subr.mxu0 %v834
    %3058 = vmatpush1.msra.mxu0 %v833
    %3059 = vmatprep.subr.mxu0 0.0
    %3060 = vmatpush1.msra.mxu0 0.0
    %3061 = vmatprep.subr.mxu0 0.0
    %3062 = vmatpush1.msra.mxu0 0.0
    %3063 = vmatprep.subr.mxu0 0.0
    %3064 = vmatpush1.msra.mxu0 0.0
    %3065 = vmatprep.subr.mxu0 0.0
    %3066 = vmatpush1.msra.mxu0 0.0
    %3067 = vmatprep.subr.mxu0 0.0
    %3068 = vmatpush1.msra.mxu0 0.0
    %3069 = vmatprep.subr.mxu0 0.0
    %3070 = vmatpush1.msra.mxu0 0.0
    %3071 = vmatprep.subr.mxu0 0.0
    %3072 = vmatpush1.msra.mxu0 0.0
    %3073 = vmatprep.subr.mxu0 0.0
    %3074 = vmatpush1.msra.mxu0 0.0
    %3075 = vmatprep.subr.mxu0 0.0
    %3076 = vmatpush1.msra.mxu0 0.0
    %3077 = vmatprep.subr.mxu0 0.0
    %3078 = vmatpush1.msra.mxu0 0.0
    %3079 = vmatprep.subr.mxu0 0.0
    %3080 = vmatpush1.msra.mxu0 0.0
    %3081 = vmatprep.subr.mxu0 0.0
    %3082 = vmatpush1.msra.mxu0 0.0
    %3083 = vmatprep.subr.mxu0 0.0
    %3084 = vmatpush1.msra.mxu0 0.0
    %3085 = vmatprep.subr.mxu0 0.0
    %3086 = vmatpush1.msra.mxu0 0.0
    %3087 = vmatprep.subr.mxu0 0.0
    %3088 = vmatpush1.msra.mxu0 0.0
    %3089 = vmatprep.subr.mxu0 0.0
    %3090 = vmatpush1.msra.mxu0 0.0
    %3091 = vmatprep.mubr.f32.mxu0 0.0
    %3092 = vmatmul.mubr.f32.gmra.mrb[0].mxu0 %v3021
    %v3093 = vpop.f32.mrb[0].mxu0
    %v3094 = vadd.f32 0.0, %v3093
    %v3095 = vpop.f32.mrb[0].mxu0
    %v3096 = vadd.f32 0.0, %v3095
    %3097 = vdwg.mxu0
    %3098 = vmatprep.subr.mxu0 %v776
    %3099 = vmatpush1.msra.mxu0 %v775
    %3100 = vmatprep.subr.mxu0 %v780
    %3101 = vmatpush1.msra.mxu0 %v779
    %3102 = vmatprep.subr.mxu0 %v784
    %3103 = vmatpush1.msra.mxu0 %v783
    %3104 = vmatprep.subr.mxu0 %v788
    %3105 = vmatpush1.msra.mxu0 %v787
    %3106 = vmatprep.subr.mxu0 %v792
    %3107 = vmatpush1.msra.mxu0 %v791
    %3108 = vmatprep.subr.mxu0 %v796
    %3109 = vmatpush1.msra.mxu0 %v795
    %3110 = vmatprep.subr.mxu0 %v800
    %3111 = vmatpush1.msra.mxu0 %v799
    %3112 = vmatprep.subr.mxu0 %v804
    %3113 = vmatpush1.msra.mxu0 %v803
    %3114 = vmatprep.subr.mxu0 %v808
    %3115 = vmatpush1.msra.mxu0 %v807
    %3116 = vmatprep.subr.mxu0 %v812
    %3117 = vmatpush1.msra.mxu0 %v811
    %3118 = vmatprep.subr.mxu0 %v816
    %3119 = vmatpush1.msra.mxu0 %v815
    %3120 = vmatprep.subr.mxu0 %v820
    %3121 = vmatpush1.msra.mxu0 %v819
    %3122 = vmatprep.subr.mxu0 %v824
    %3123 = vmatpush1.msra.mxu0 %v823
    %3124 = vmatprep.subr.mxu0 %v828
    %3125 = vmatpush1.msra.mxu0 %v827
    %3126 = vmatprep.subr.mxu0 %v832
    %3127 = vmatpush1.msra.mxu0 %v831
    %3128 = vmatprep.subr.mxu0 %v836
    %3129 = vmatpush1.msra.mxu0 %v835
    %3130 = vmatprep.subr.mxu0 0.0
    %3131 = vmatpush1.msra.mxu0 0.0
    %3132 = vmatprep.subr.mxu0 0.0
    %3133 = vmatpush1.msra.mxu0 0.0
    %3134 = vmatprep.subr.mxu0 0.0
    %3135 = vmatpush1.msra.mxu0 0.0
    %3136 = vmatprep.subr.mxu0 0.0
    %3137 = vmatpush1.msra.mxu0 0.0
    %3138 = vmatprep.subr.mxu0 0.0
    %3139 = vmatpush1.msra.mxu0 0.0
    %3140 = vmatprep.subr.mxu0 0.0
    %3141 = vmatpush1.msra.mxu0 0.0
    %3142 = vmatprep.subr.mxu0 0.0
    %3143 = vmatpush1.msra.mxu0 0.0
    %3144 = vmatprep.subr.mxu0 0.0
    %3145 = vmatpush1.msra.mxu0 0.0
    %3146 = vmatprep.subr.mxu0 0.0
    %3147 = vmatpush1.msra.mxu0 0.0
    %3148 = vmatprep.subr.mxu0 0.0
    %3149 = vmatpush1.msra.mxu0 0.0
    %3150 = vmatprep.subr.mxu0 0.0
    %3151 = vmatpush1.msra.mxu0 0.0
    %3152 = vmatprep.subr.mxu0 0.0
    %3153 = vmatpush1.msra.mxu0 0.0
    %3154 = vmatprep.subr.mxu0 0.0
    %3155 = vmatpush1.msra.mxu0 0.0
    %3156 = vmatprep.subr.mxu0 0.0
    %3157 = vmatpush1.msra.mxu0 0.0
    %3158 = vmatprep.subr.mxu0 0.0
    %3159 = vmatpush1.msra.mxu0 0.0
    %3160 = vmatprep.subr.mxu0 0.0
    %3161 = vmatpush1.msra.mxu0 0.0
    %3162 = vmatprep.mubr.f32.mxu0 0.0
    %3163 = vmatmul.mubr.f32.gmra.mrb[0].mxu0 %v3021
    %v3164 = vpop.f32.mrb[0].mxu0
    %v3165 = vadd.f32 0.0, %v3164
    %v3166 = vpop.f32.mrb[0].mxu0
    %v3167 = vadd.f32 0.0, %v3166
    %3168 = vdwg.mxu0
    %3169 = vmatprep.subr.mxu0 %v838
    %3170 = vmatpush1.msra.mxu0 %v837
    %3171 = vmatprep.subr.mxu0 %v842
    %3172 = vmatpush1.msra.mxu0 %v841
    %3173 = vmatprep.subr.mxu0 %v846
    %3174 = vmatpush1.msra.mxu0 %v845
    %3175 = vmatprep.subr.mxu0 %v850
    %3176 = vmatpush1.msra.mxu0 %v849
    %3177 = vmatprep.subr.mxu0 %v854
    %3178 = vmatpush1.msra.mxu0 %v853
    %3179 = vmatprep.subr.mxu0 %v858
    %3180 = vmatpush1.msra.mxu0 %v857
    %3181 = vmatprep.subr.mxu0 %v862
    %3182 = vmatpush1.msra.mxu0 %v861
    %3183 = vmatprep.subr.mxu0 %v866
    %3184 = vmatpush1.msra.mxu0 %v865
    %3185 = vmatprep.subr.mxu0 %v870
    %3186 = vmatpush1.msra.mxu0 %v869
    %3187 = vmatprep.subr.mxu0 %v874
    %3188 = vmatpush1.msra.mxu0 %v873
    %3189 = vmatprep.subr.mxu0 %v878
    %3190 = vmatpush1.msra.mxu0 %v877
    %3191 = vmatprep.subr.mxu0 %v882
    %3192 = vmatpush1.msra.mxu0 %v881
    %3193 = vmatprep.subr.mxu0 %v886
    %3194 = vmatpush1.msra.mxu0 %v885
    %3195 = vmatprep.subr.mxu0 %v890
    %3196 = vmatpush1.msra.mxu0 %v889
    %3197 = vmatprep.subr.mxu0 %v894
    %3198 = vmatpush1.msra.mxu0 %v893
    %3199 = vmatprep.subr.mxu0 %v898
    %3200 = vmatpush1.msra.mxu0 %v897
    %3201 = vmatprep.subr.mxu0 0.0
    %3202 = vmatpush1.msra.mxu0 0.0
    %3203 = vmatprep.subr.mxu0 0.0
    %3204 = vmatpush1.msra.mxu0 0.0
    %3205 = vmatprep.subr.mxu0 0.0
    %3206 = vmatpush1.msra.mxu0 0.0
    %3207 = vmatprep.subr.mxu0 0.0
    %3208 = vmatpush1.msra.mxu0 0.0
    %3209 = vmatprep.subr.mxu0 0.0
    %3210 = vmatpush1.msra.mxu0 0.0
    %3211 = vmatprep.subr.mxu0 0.0
    %3212 = vmatpush1.msra.mxu0 0.0
    %3213 = vmatprep.subr.mxu0 0.0
    %3214 = vmatpush1.msra.mxu0 0.0
    %3215 = vmatprep.subr.mxu0 0.0
    %3216 = vmatpush1.msra.mxu0 0.0
    %3217 = vmatprep.subr.mxu0 0.0
    %3218 = vmatpush1.msra.mxu0 0.0
    %3219 = vmatprep.subr.mxu0 0.0
    %3220 = vmatpush1.msra.mxu0 0.0
    %3221 = vmatprep.subr.mxu0 0.0
    %3222 = vmatpush1.msra.mxu0 0.0
    %3223 = vmatprep.subr.mxu0 0.0
    %3224 = vmatpush1.msra.mxu0 0.0
    %3225 = vmatprep.subr.mxu0 0.0
    %3226 = vmatpush1.msra.mxu0 0.0
    %3227 = vmatprep.subr.mxu0 0.0
    %3228 = vmatpush1.msra.mxu0 0.0
    %3229 = vmatprep.subr.mxu0 0.0
    %3230 = vmatpush1.msra.mxu0 0.0
    %3231 = vmatprep.subr.mxu0 0.0
    %3232 = vmatpush1.msra.mxu0 0.0
    %3233 = vmatprep.mubr.f32.mxu0 0.0
    %3234 = vmatmul.mubr.f32.gmra.mrb[0].mxu0 %v3022
    %v3235 = vpop.f32.mrb[0].mxu0
    %v3236 = vadd.f32 0.0, %v3235
    %v3237 = vpop.f32.mrb[0].mxu0
    %v3238 = vadd.f32 0.0, %v3237
    %3239 = vdwg.mxu0
    %3240 = vmatprep.subr.mxu0 %v840
    %3241 = vmatpush1.msra.mxu0 %v839
    %3242 = vmatprep.subr.mxu0 %v844
    %3243 = vmatpush1.msra.mxu0 %v843
    %3244 = vmatprep.subr.mxu0 %v848
    %3245 = vmatpush1.msra.mxu0 %v847
    %3246 = vmatprep.subr.mxu0 %v852
    %3247 = vmatpush1.msra.mxu0 %v851
    %3248 = vmatprep.subr.mxu0 %v856
    %3249 = vmatpush1.msra.mxu0 %v855
    %3250 = vmatprep.subr.mxu0 %v860
    %3251 = vmatpush1.msra.mxu0 %v859
    %3252 = vmatprep.subr.mxu0 %v864
    %3253 = vmatpush1.msra.mxu0 %v863
    %3254 = vmatprep.subr.mxu0 %v868
    %3255 = vmatpush1.msra.mxu0 %v867
    %3256 = vmatprep.subr.mxu0 %v872
    %3257 = vmatpush1.msra.mxu0 %v871
    %3258 = vmatprep.subr.mxu0 %v876
    %3259 = vmatpush1.msra.mxu0 %v875
    %3260 = vmatprep.subr.mxu0 %v880
    %3261 = vmatpush1.msra.mxu0 %v879
    %3262 = vmatprep.subr.mxu0 %v884
    %3263 = vmatpush1.msra.mxu0 %v883
    %3264 = vmatprep.subr.mxu0 %v888
    %3265 = vmatpush1.msra.mxu0 %v887
    %3266 = vmatprep.subr.mxu0 %v892
    %3267 = vmatpush1.msra.mxu0 %v891
    %3268 = vmatprep.subr.mxu0 %v896
    %3269 = vmatpush1.msra.mxu0 %v895
    %3270 = vmatprep.subr.mxu0 %v900
    %3271 = vmatpush1.msra.mxu0 %v899
    %3272 = vmatprep.subr.mxu0 0.0
    %3273 = vmatpush1.msra.mxu0 0.0
    %3274 = vmatprep.subr.mxu0 0.0
    %3275 = vmatpush1.msra.mxu0 0.0
    %3276 = vmatprep.subr.mxu0 0.0
    %3277 = vmatpush1.msra.mxu0 0.0
    %3278 = vmatprep.subr.mxu0 0.0
    %3279 = vmatpush1.msra.mxu0 0.0
    %3280 = vmatprep.subr.mxu0 0.0
    %3281 = vmatpush1.msra.mxu0 0.0
    %3282 = vmatprep.subr.mxu0 0.0
    %3283 = vmatpush1.msra.mxu0 0.0
    %3284 = vmatprep.subr.mxu0 0.0
    %3285 = vmatpush1.msra.mxu0 0.0
    %3286 = vmatprep.subr.mxu0 0.0
    %3287 = vmatpush1.msra.mxu0 0.0
    %3288 = vmatprep.subr.mxu0 0.0
    %3289 = vmatpush1.msra.mxu0 0.0
    %3290 = vmatprep.subr.mxu0 0.0
    %3291 = vmatpush1.msra.mxu0 0.0
    %3292 = vmatprep.subr.mxu0 0.0
    %3293 = vmatpush1.msra.mxu0 0.0
    %3294 = vmatprep.subr.mxu0 0.0
    %3295 = vmatpush1.msra.mxu0 0.0
    %3296 = vmatprep.subr.mxu0 0.0
    %3297 = vmatpush1.msra.mxu0 0.0
    %3298 = vmatprep.subr.mxu0 0.0
    %3299 = vmatpush1.msra.mxu0 0.0
    %3300 = vmatprep.subr.mxu0 0.0
    %3301 = vmatpush1.msra.mxu0 0.0
    %3302 = vmatprep.subr.mxu0 0.0
    %3303 = vmatpush1.msra.mxu0 0.0
    %3304 = vmatprep.mubr.f32.mxu0 0.0
    %3305 = vmatmul.mubr.f32.gmra.mrb[0].mxu0 %v3022
    %v3306 = vpop.f32.mrb[0].mxu0
    %v3307 = vadd.f32 0.0, %v3306
    %v3308 = vpop.f32.mrb[0].mxu0
    %v3309 = vadd.f32 0.0, %v3308
    %3310 = vdwg.mxu0
    %s3311 = scalar_lea.vmem [#allocation2], 192
    %v3312 = vld [vmem:[%s3311] sm:$0xff]
    %v3313 = vld [vmem:[%s3311 + $0x8] sm:$0xff]
    %v3314 = vld [vmem:[%s3311 + $0x10] sm:$0xff]
    %v3315 = vld [vmem:[%s3311 + $0x18] sm:$0xff]
    %v3316 = vadd.f32 %v3312, %v3094
    %v3317 = vadd.f32 %v3313, %v3096
    %v3318 = vadd.f32 %v3314, %v3165
    %v3319 = vadd.f32 %v3315, %v3167
    %s3320 = scalar_lea.vmem [#allocation2], 288
    %v3321 = vld [vmem:[%s3320] sm:$0xff]
    %v3322 = vld [vmem:[%s3320 + $0x8] sm:$0xff]
    %v3323 = vld [vmem:[%s3320 + $0x10] sm:$0xff]
    %v3324 = vld [vmem:[%s3320 + $0x18] sm:$0xff]
    %v3325 = vadd.f32 %v3321, %v3236
    %v3326 = vadd.f32 %v3322, %v3238
    %v3327 = vadd.f32 %v3323, %v3307
    %v3328 = vadd.f32 %v3324, %v3309
    %v3329 = vxor.u32 %v3316, 2147483648
    %v3330 = vxor.u32 %v3325, 2147483648
    %v3331 = vmul.f32 %v3329, 1.442695
    %v3332 = vpow.pop %v3331
    %v3333 = vmul.f32 %v3330, 1.442695
    %v3334 = vpow.pop %v3333
    %v3335 = vadd.f32 %v3332, 1.0
    %v3336 = vadd.f32 %v3334, 1.0
    %v3337 = vrcp.pop %v3335
    %v3338 = vmul.f32 1.0, %v3337
    %v3339 = vrcp.pop %v3336
    %v3340 = vmul.f32 1.0, %v3339
    %v3341 = vxor.u32 %v3317, 2147483648
    %v3342 = vxor.u32 %v3326, 2147483648
    %v3343 = vmul.f32 %v3341, 1.442695
    %v3344 = vpow.pop %v3343
    %v3345 = vmul.f32 %v3342, 1.442695
    %v3346 = vpow.pop %v3345
    %v3347 = vadd.f32 %v3344, 1.0
    %v3348 = vadd.f32 %v3346, 1.0
    %v3349 = vrcp.pop %v3347
    %v3350 = vmul.f32 1.0, %v3349
    %v3351 = vrcp.pop %v3348
    %v3352 = vmul.f32 1.0, %v3351
    %v3353 = vtanh.pop %v3318
    %v3354 = vtanh.pop %v3327
    %v3355 = vxor.u32 %v3319, 2147483648
    %v3356 = vxor.u32 %v3328, 2147483648
    %v3357 = vmul.f32 %v3355, 1.442695
    %v3358 = vpow.pop %v3357
    %v3359 = vmul.f32 %v3356, 1.442695
    %v3360 = vpow.pop %v3359
    %v3361 = vadd.f32 %v3358, 1.0
    %v3362 = vadd.f32 %v3360, 1.0
    %v3363 = vrcp.pop %v3361
    %v3364 = vmul.f32 1.0, %v3363
    %v3365 = vrcp.pop %v3362
    %v3366 = vmul.f32 1.0, %v3365
    %v3367 = vmul.f32 %v3350, %v3017
    %v3368 = vmul.f32 %v3352, %v3018
    %v3369 = vmul.f32 %v3338, %v3353
    %v3370 = vmul.f32 %v3340, %v3354
    %v3371 = vadd.f32 %v3367, %v3369
    %v3372 = vadd.f32 %v3368, %v3370
    %v3373 = vtanh.pop %v3371
    %v3374 = vtanh.pop %v3372
    %v3375 = vmul.f32 %v3364, %v3373
    %v3376 = vmul.f32 %v3366, %v3374
    %s3377 = scalar_lea.vmem [#allocation16], 48
    %3378 = vst [vmem:[%s3377] sm:$0xff] %v3375
    %s3379 = scalar_lea.vmem [#allocation17], 8
    %3380 = vst [vmem:[%s3379] sm:$0xff] %v3376
    %3381 = vmatprep.subr.mxu0 %v774
    %3382 = vmatpush1.msra.mxu0 %v773
    %3383 = vmatprep.subr.mxu0 %v778
    %3384 = vmatpush1.msra.mxu0 %v777
    %3385 = vmatprep.subr.mxu0 %v782
    %3386 = vmatpush1.msra.mxu0 %v781
    %3387 = vmatprep.subr.mxu0 %v786
    %3388 = vmatpush1.msra.mxu0 %v785
    %3389 = vmatprep.subr.mxu0 %v790
    %3390 = vmatpush1.msra.mxu0 %v789
    %3391 = vmatprep.subr.mxu0 %v794
    %3392 = vmatpush1.msra.mxu0 %v793
    %3393 = vmatprep.subr.mxu0 %v798
    %3394 = vmatpush1.msra.mxu0 %v797
    %3395 = vmatprep.subr.mxu0 %v802
    %3396 = vmatpush1.msra.mxu0 %v801
    %3397 = vmatprep.subr.mxu0 %v806
    %3398 = vmatpush1.msra.mxu0 %v805
    %3399 = vmatprep.subr.mxu0 %v810
    %3400 = vmatpush1.msra.mxu0 %v809
    %3401 = vmatprep.subr.mxu0 %v814
    %3402 = vmatpush1.msra.mxu0 %v813
    %3403 = vmatprep.subr.mxu0 %v818
    %3404 = vmatpush1.msra.mxu0 %v817
    %3405 = vmatprep.subr.mxu0 %v822
    %3406 = vmatpush1.msra.mxu0 %v821
    %3407 = vmatprep.subr.mxu0 %v826
    %3408 = vmatpush1.msra.mxu0 %v825
    %3409 = vmatprep.subr.mxu0 %v830
    %3410 = vmatpush1.msra.mxu0 %v829
    %3411 = vmatprep.subr.mxu0 %v834
    %3412 = vmatpush1.msra.mxu0 %v833
    %3413 = vmatprep.subr.mxu0 0.0
    %3414 = vmatpush1.msra.mxu0 0.0
    %3415 = vmatprep.subr.mxu0 0.0
    %3416 = vmatpush1.msra.mxu0 0.0
    %3417 = vmatprep.subr.mxu0 0.0
    %3418 = vmatpush1.msra.mxu0 0.0
    %3419 = vmatprep.subr.mxu0 0.0
    %3420 = vmatpush1.msra.mxu0 0.0
    %3421 = vmatprep.subr.mxu0 0.0
    %3422 = vmatpush1.msra.mxu0 0.0
    %3423 = vmatprep.subr.mxu0 0.0
    %3424 = vmatpush1.msra.mxu0 0.0
    %3425 = vmatprep.subr.mxu0 0.0
    %3426 = vmatpush1.msra.mxu0 0.0
    %3427 = vmatprep.subr.mxu0 0.0
    %3428 = vmatpush1.msra.mxu0 0.0
    %3429 = vmatprep.subr.mxu0 0.0
    %3430 = vmatpush1.msra.mxu0 0.0
    %3431 = vmatprep.subr.mxu0 0.0
    %3432 = vmatpush1.msra.mxu0 0.0
    %3433 = vmatprep.subr.mxu0 0.0
    %3434 = vmatpush1.msra.mxu0 0.0
    %3435 = vmatprep.subr.mxu0 0.0
    %3436 = vmatpush1.msra.mxu0 0.0
    %3437 = vmatprep.subr.mxu0 0.0
    %3438 = vmatpush1.msra.mxu0 0.0
    %3439 = vmatprep.subr.mxu0 0.0
    %3440 = vmatpush1.msra.mxu0 0.0
    %3441 = vmatprep.subr.mxu0 0.0
    %3442 = vmatpush1.msra.mxu0 0.0
    %3443 = vmatprep.subr.mxu0 0.0
    %3444 = vmatpush1.msra.mxu0 0.0
    %3445 = vmatprep.mubr.f32.mxu0 0.0
    %3446 = vmatmul.mubr.f32.gmra.mrb[0].mxu0 %v3375
    %v3447 = vpop.f32.mrb[0].mxu0
    %v3448 = vadd.f32 0.0, %v3447
    %v3449 = vpop.f32.mrb[0].mxu0
    %v3450 = vadd.f32 0.0, %v3449
    %3451 = vdwg.mxu0
    %3452 = vmatprep.subr.mxu0 %v776
    %3453 = vmatpush1.msra.mxu0 %v775
    %3454 = vmatprep.subr.mxu0 %v780
    %3455 = vmatpush1.msra.mxu0 %v779
    %3456 = vmatprep.subr.mxu0 %v784
    %3457 = vmatpush1.msra.mxu0 %v783
    %3458 = vmatprep.subr.mxu0 %v788
    %3459 = vmatpush1.msra.mxu0 %v787
    %3460 = vmatprep.subr.mxu0 %v792
    %3461 = vmatpush1.msra.mxu0 %v791
    %3462 = vmatprep.subr.mxu0 %v796
    %3463 = vmatpush1.msra.mxu0 %v795
    %3464 = vmatprep.subr.mxu0 %v800
    %3465 = vmatpush1.msra.mxu0 %v799
    %3466 = vmatprep.subr.mxu0 %v804
    %3467 = vmatpush1.msra.mxu0 %v803
    %3468 = vmatprep.subr.mxu0 %v808
    %3469 = vmatpush1.msra.mxu0 %v807
    %3470 = vmatprep.subr.mxu0 %v812
    %3471 = vmatpush1.msra.mxu0 %v811
    %3472 = vmatprep.subr.mxu0 %v816
    %3473 = vmatpush1.msra.mxu0 %v815
    %3474 = vmatprep.subr.mxu0 %v820
    %3475 = vmatpush1.msra.mxu0 %v819
    %3476 = vmatprep.subr.mxu0 %v824
    %3477 = vmatpush1.msra.mxu0 %v823
    %3478 = vmatprep.subr.mxu0 %v828
    %3479 = vmatpush1.msra.mxu0 %v827
    %3480 = vmatprep.subr.mxu0 %v832
    %3481 = vmatpush1.msra.mxu0 %v831
    %3482 = vmatprep.subr.mxu0 %v836
    %3483 = vmatpush1.msra.mxu0 %v835
    %3484 = vmatprep.subr.mxu0 0.0
    %3485 = vmatpush1.msra.mxu0 0.0
    %3486 = vmatprep.subr.mxu0 0.0
    %3487 = vmatpush1.msra.mxu0 0.0
    %3488 = vmatprep.subr.mxu0 0.0
    %3489 = vmatpush1.msra.mxu0 0.0
    %3490 = vmatprep.subr.mxu0 0.0
    %3491 = vmatpush1.msra.mxu0 0.0
    %3492 = vmatprep.subr.mxu0 0.0
    %3493 = vmatpush1.msra.mxu0 0.0
    %3494 = vmatprep.subr.mxu0 0.0
    %3495 = vmatpush1.msra.mxu0 0.0
    %3496 = vmatprep.subr.mxu0 0.0
    %3497 = vmatpush1.msra.mxu0 0.0
    %3498 = vmatprep.subr.mxu0 0.0
    %3499 = vmatpush1.msra.mxu0 0.0
    %3500 = vmatprep.subr.mxu0 0.0
    %3501 = vmatpush1.msra.mxu0 0.0
    %3502 = vmatprep.subr.mxu0 0.0
    %3503 = vmatpush1.msra.mxu0 0.0
    %3504 = vmatprep.subr.mxu0 0.0
    %3505 = vmatpush1.msra.mxu0 0.0
    %3506 = vmatprep.subr.mxu0 0.0
    %3507 = vmatpush1.msra.mxu0 0.0
    %3508 = vmatprep.subr.mxu0 0.0
    %3509 = vmatpush1.msra.mxu0 0.0
    %3510 = vmatprep.subr.mxu0 0.0
    %3511 = vmatpush1.msra.mxu0 0.0
    %3512 = vmatprep.subr.mxu0 0.0
    %3513 = vmatpush1.msra.mxu0 0.0
    %3514 = vmatprep.subr.mxu0 0.0
    %3515 = vmatpush1.msra.mxu0 0.0
    %3516 = vmatprep.mubr.f32.mxu0 0.0
    %3517 = vmatmul.mubr.f32.gmra.mrb[0].mxu0 %v3375
    %v3518 = vpop.f32.mrb[0].mxu0
    %v3519 = vadd.f32 0.0, %v3518
    %v3520 = vpop.f32.mrb[0].mxu0
    %v3521 = vadd.f32 0.0, %v3520
    %3522 = vdwg.mxu0
    %3523 = vmatprep.subr.mxu0 %v838
    %3524 = vmatpush1.msra.mxu0 %v837
    %3525 = vmatprep.subr.mxu0 %v842
    %3526 = vmatpush1.msra.mxu0 %v841
    %3527 = vmatprep.subr.mxu0 %v846
    %3528 = vmatpush1.msra.mxu0 %v845
    %3529 = vmatprep.subr.mxu0 %v850
    %3530 = vmatpush1.msra.mxu0 %v849
    %3531 = vmatprep.subr.mxu0 %v854
    %3532 = vmatpush1.msra.mxu0 %v853
    %3533 = vmatprep.subr.mxu0 %v858
    %3534 = vmatpush1.msra.mxu0 %v857
    %3535 = vmatprep.subr.mxu0 %v862
    %3536 = vmatpush1.msra.mxu0 %v861
    %3537 = vmatprep.subr.mxu0 %v866
    %3538 = vmatpush1.msra.mxu0 %v865
    %3539 = vmatprep.subr.mxu0 %v870
    %3540 = vmatpush1.msra.mxu0 %v869
    %3541 = vmatprep.subr.mxu0 %v874
    %3542 = vmatpush1.msra.mxu0 %v873
    %3543 = vmatprep.subr.mxu0 %v878
    %3544 = vmatpush1.msra.mxu0 %v877
    %3545 = vmatprep.subr.mxu0 %v882
    %3546 = vmatpush1.msra.mxu0 %v881
    %3547 = vmatprep.subr.mxu0 %v886
    %3548 = vmatpush1.msra.mxu0 %v885
    %3549 = vmatprep.subr.mxu0 %v890
    %3550 = vmatpush1.msra.mxu0 %v889
    %3551 = vmatprep.subr.mxu0 %v894
    %3552 = vmatpush1.msra.mxu0 %v893
    %3553 = vmatprep.subr.mxu0 %v898
    %3554 = vmatpush1.msra.mxu0 %v897
    %3555 = vmatprep.subr.mxu0 0.0
    %3556 = vmatpush1.msra.mxu0 0.0
    %3557 = vmatprep.subr.mxu0 0.0
    %3558 = vmatpush1.msra.mxu0 0.0
    %3559 = vmatprep.subr.mxu0 0.0
    %3560 = vmatpush1.msra.mxu0 0.0
    %3561 = vmatprep.subr.mxu0 0.0
    %3562 = vmatpush1.msra.mxu0 0.0
    %3563 = vmatprep.subr.mxu0 0.0
    %3564 = vmatpush1.msra.mxu0 0.0
    %3565 = vmatprep.subr.mxu0 0.0
    %3566 = vmatpush1.msra.mxu0 0.0
    %3567 = vmatprep.subr.mxu0 0.0
    %3568 = vmatpush1.msra.mxu0 0.0
    %3569 = vmatprep.subr.mxu0 0.0
    %3570 = vmatpush1.msra.mxu0 0.0
    %3571 = vmatprep.subr.mxu0 0.0
    %3572 = vmatpush1.msra.mxu0 0.0
    %3573 = vmatprep.subr.mxu0 0.0
    %3574 = vmatpush1.msra.mxu0 0.0
    %3575 = vmatprep.subr.mxu0 0.0
    %3576 = vmatpush1.msra.mxu0 0.0
    %3577 = vmatprep.subr.mxu0 0.0
    %3578 = vmatpush1.msra.mxu0 0.0
    %3579 = vmatprep.subr.mxu0 0.0
    %3580 = vmatpush1.msra.mxu0 0.0
    %3581 = vmatprep.subr.mxu0 0.0
    %3582 = vmatpush1.msra.mxu0 0.0
    %3583 = vmatprep.subr.mxu0 0.0
    %3584 = vmatpush1.msra.mxu0 0.0
    %3585 = vmatprep.subr.mxu0 0.0
    %3586 = vmatpush1.msra.mxu0 0.0
    %3587 = vmatprep.mubr.f32.mxu0 0.0
    %3588 = vmatmul.mubr.f32.gmra.mrb[0].mxu0 %v3376
    %v3589 = vpop.f32.mrb[0].mxu0
    %v3590 = vadd.f32 0.0, %v3589
    %v3591 = vpop.f32.mrb[0].mxu0
    %v3592 = vadd.f32 0.0, %v3591
    %3593 = vdwg.mxu0
    %3594 = vmatprep.subr.mxu0 %v840
    %3595 = vmatpush1.msra.mxu0 %v839
    %3596 = vmatprep.subr.mxu0 %v844
    %3597 = vmatpush1.msra.mxu0 %v843
    %3598 = vmatprep.subr.mxu0 %v848
    %3599 = vmatpush1.msra.mxu0 %v847
    %3600 = vmatprep.subr.mxu0 %v852
    %3601 = vmatpush1.msra.mxu0 %v851
    %3602 = vmatprep.subr.mxu0 %v856
    %3603 = vmatpush1.msra.mxu0 %v855
    %3604 = vmatprep.subr.mxu0 %v860
    %3605 = vmatpush1.msra.mxu0 %v859
    %3606 = vmatprep.subr.mxu0 %v864
    %3607 = vmatpush1.msra.mxu0 %v863
    %3608 = vmatprep.subr.mxu0 %v868
    %3609 = vmatpush1.msra.mxu0 %v867
    %3610 = vmatprep.subr.mxu0 %v872
    %3611 = vmatpush1.msra.mxu0 %v871
    %3612 = vmatprep.subr.mxu0 %v876
    %3613 = vmatpush1.msra.mxu0 %v875
    %3614 = vmatprep.subr.mxu0 %v880
    %3615 = vmatpush1.msra.mxu0 %v879
    %3616 = vmatprep.subr.mxu0 %v884
    %3617 = vmatpush1.msra.mxu0 %v883
    %3618 = vmatprep.subr.mxu0 %v888
    %3619 = vmatpush1.msra.mxu0 %v887
    %3620 = vmatprep.subr.mxu0 %v892
    %3621 = vmatpush1.msra.mxu0 %v891
    %3622 = vmatprep.subr.mxu0 %v896
    %3623 = vmatpush1.msra.mxu0 %v895
    %3624 = vmatprep.subr.mxu0 %v900
    %3625 = vmatpush1.msra.mxu0 %v899
    %3626 = vmatprep.subr.mxu0 0.0
    %3627 = vmatpush1.msra.mxu0 0.0
    %3628 = vmatprep.subr.mxu0 0.0
    %3629 = vmatpush1.msra.mxu0 0.0
    %3630 = vmatprep.subr.mxu0 0.0
    %3631 = vmatpush1.msra.mxu0 0.0
    %3632 = vmatprep.subr.mxu0 0.0
    %3633 = vmatpush1.msra.mxu0 0.0
    %3634 = vmatprep.subr.mxu0 0.0
    %3635 = vmatpush1.msra.mxu0 0.0
    %3636 = vmatprep.subr.mxu0 0.0
    %3637 = vmatpush1.msra.mxu0 0.0
    %3638 = vmatprep.subr.mxu0 0.0
    %3639 = vmatpush1.msra.mxu0 0.0
    %3640 = vmatprep.subr.mxu0 0.0
    %3641 = vmatpush1.msra.mxu0 0.0
    %3642 = vmatprep.subr.mxu0 0.0
    %3643 = vmatpush1.msra.mxu0 0.0
    %3644 = vmatprep.subr.mxu0 0.0
    %3645 = vmatpush1.msra.mxu0 0.0
    %3646 = vmatprep.subr.mxu0 0.0
    %3647 = vmatpush1.msra.mxu0 0.0
    %3648 = vmatprep.subr.mxu0 0.0
    %3649 = vmatpush1.msra.mxu0 0.0
    %3650 = vmatprep.subr.mxu0 0.0
    %3651 = vmatpush1.msra.mxu0 0.0
    %3652 = vmatprep.subr.mxu0 0.0
    %3653 = vmatpush1.msra.mxu0 0.0
    %3654 = vmatprep.subr.mxu0 0.0
    %3655 = vmatpush1.msra.mxu0 0.0
    %3656 = vmatprep.subr.mxu0 0.0
    %3657 = vmatpush1.msra.mxu0 0.0
    %3658 = vmatprep.mubr.f32.mxu0 0.0
    %3659 = vmatmul.mubr.f32.gmra.mrb[0].mxu0 %v3376
    %v3660 = vpop.f32.mrb[0].mxu0
    %v3661 = vadd.f32 0.0, %v3660
    %v3662 = vpop.f32.mrb[0].mxu0
    %v3663 = vadd.f32 0.0, %v3662
    %3664 = vdwg.mxu0
    %s3665 = scalar_lea.vmem [#allocation2], 224
    %v3666 = vld [vmem:[%s3665] sm:$0xff]
    %v3667 = vld [vmem:[%s3665 + $0x8] sm:$0xff]
    %v3668 = vld [vmem:[%s3665 + $0x10] sm:$0xff]
    %v3669 = vld [vmem:[%s3665 + $0x18] sm:$0xff]
    %v3670 = vadd.f32 %v3666, %v3448
    %v3671 = vadd.f32 %v3667, %v3450
    %v3672 = vadd.f32 %v3668, %v3519
    %v3673 = vadd.f32 %v3669, %v3521
    %v3674 = vld [vmem:[%s740] sm:$0xff]
    %v3675 = vld [vmem:[%s740 + $0x8] sm:$0xff]
    %v3676 = vld [vmem:[%s740 + $0x10] sm:$0xff]
    %v3677 = vld [vmem:[%s740 + $0x18] sm:$0xff]
    %v3678 = vadd.f32 %v3674, %v3590
    %v3679 = vadd.f32 %v3675, %v3592
    %v3680 = vadd.f32 %v3676, %v3661
    %v3681 = vadd.f32 %v3677, %v3663
    %v3682 = vxor.u32 %v3670, 2147483648
    %v3683 = vxor.u32 %v3678, 2147483648
    %v3684 = vmul.f32 %v3682, 1.442695
    %v3685 = vpow.pop %v3684
    %v3686 = vmul.f32 %v3683, 1.442695
    %v3687 = vpow.pop %v3686
    %v3688 = vadd.f32 %v3685, 1.0
    %v3689 = vadd.f32 %v3687, 1.0
    %v3690 = vrcp.pop %v3688
    %v3691 = vmul.f32 1.0, %v3690
    %v3692 = vrcp.pop %v3689
    %v3693 = vmul.f32 1.0, %v3692
    %v3694 = vxor.u32 %v3671, 2147483648
    %v3695 = vxor.u32 %v3679, 2147483648
    %v3696 = vmul.f32 %v3694, 1.442695
    %v3697 = vpow.pop %v3696
    %v3698 = vmul.f32 %v3695, 1.442695
    %v3699 = vpow.pop %v3698
    %v3700 = vadd.f32 %v3697, 1.0
    %v3701 = vadd.f32 %v3699, 1.0
    %v3702 = vrcp.pop %v3700
    %v3703 = vmul.f32 1.0, %v3702
    %v3704 = vrcp.pop %v3701
    %v3705 = vmul.f32 1.0, %v3704
    %v3706 = vtanh.pop %v3672
    %v3707 = vtanh.pop %v3680
    %v3708 = vxor.u32 %v3673, 2147483648
    %v3709 = vxor.u32 %v3681, 2147483648
    %v3710 = vmul.f32 %v3708, 1.442695
    %v3711 = vpow.pop %v3710
    %v3712 = vmul.f32 %v3709, 1.442695
    %v3713 = vpow.pop %v3712
    %v3714 = vadd.f32 %v3711, 1.0
    %v3715 = vadd.f32 %v3713, 1.0
    %v3716 = vrcp.pop %v3714
    %v3717 = vmul.f32 1.0, %v3716
    %v3718 = vrcp.pop %v3715
    %v3719 = vmul.f32 1.0, %v3718
    %v3720 = vmul.f32 %v3703, %v3371
    %v3721 = vmul.f32 %v3705, %v3372
    %v3722 = vmul.f32 %v3691, %v3706
    %v3723 = vmul.f32 %v3693, %v3707
    %v3724 = vadd.f32 %v3720, %v3722
    %v3725 = vadd.f32 %v3721, %v3723
    %v3726 = vtanh.pop %v3724
    %v3727 = vtanh.pop %v3725
    %v3728 = vmul.f32 %v3717, %v3726
    %v3729 = vmul.f32 %v3719, %v3727
    %s3730 = scalar_lea.vmem [#allocation16], 56
    %3731 = vst [vmem:[%s3730] sm:$0xff] %v3728
    %3732 = vst [vmem:[#allocation17] sm:$0xff] %v3729
    %3733 = vst [vmem:[#allocation3] sm:$0xff] %v3728
    %3734 = vst [vmem:[#allocation3 + $0x8] sm:$0xff] %v3729
    %3735 = vst [vmem:[#allocation4] sm:$0xff] %v3724
    %3736 = vst [vmem:[#allocation4 + $0x8] sm:$0xff] %v3725
    // Predicated region
    $region62: #{tpu_custom_call.1} parent=1 // pred_check
      _
    $region63: #{tpu_custom_call.1} parent=1 // pred_check_branch
      %3738 = sbr.rel (0) target = $region65
    $region64: #{tpu_custom_call.1} parent=1 // pred_region
      %s3740 = ssub.s32 1024, 1024
      %3741 = vsyncadd [#allocation7], %s3740
      %s3742 = sshll.u32 [#allocation16], 4
      %s3743 = int_to_ptr.vmem [resolvable:$true] %s3742
      %3748 = dma.vmem_to_hbm [thread:$0]  %s3743, 1024, %s8, [#allocation7], 128, 128, 8
    $region65: #{tpu_custom_call.1} parent=1 // pred_fallthru
      _
    // Predicated region
    $region66: #{tpu_custom_call.1} parent=1 // pred_check
      _
    $region67: #{tpu_custom_call.1} parent=1 // pred_check_branch
      %3750 = sbr.rel (0) target = $region69
    $region68: #{tpu_custom_call.1} parent=1 // pred_region
      %s3751 = ssub.s32 0, 0
      %s3752 = smul.u32 8, %s3751
      %s3754 = ssub.s32 1024, 1024
      %3755 = vsyncadd [#allocation18], %s3754
      %s3756 = smul.addr %s3752, 128
      %s3757 = scalar_lea.hbm %s9, %s3756
      %s3758 = sshll.u32 [#allocation17], 4
      %s3759 = int_to_ptr.vmem [resolvable:$true] %s3758
      %3764 = dma.vmem_to_hbm [thread:$0]  %s3759, 1024, %s3757, [#allocation18], 128, 128, 8
    $region69: #{tpu_custom_call.1} parent=1 // pred_fallthru
      _
    // Predicated region
    $region70: #{tpu_custom_call.1} parent=1 // pred_check
      _
    $region71: #{tpu_custom_call.1} parent=1 // pred_check_branch
      %3766 = sbr.rel (0) target = $region73
    $region72: #{tpu_custom_call.1} parent=1 // pred_region
      %3767 = dma.done [#allocation7], 1024
    $region73: #{tpu_custom_call.1} parent=1 // pred_fallthru
      _
    // Predicated region
    $region74: #{tpu_custom_call.1} parent=1 // pred_check
      _
    $region75: #{tpu_custom_call.1} parent=1 // pred_check_branch
      %3769 = sbr.rel (0) target = $region77
    $region76: #{tpu_custom_call.1} parent=1 // pred_region
      %3770 = dma.done [#allocation18], 1024
    $region77: #{tpu_custom_call.1} parent=1 // pred_fallthru
      _
    %3771 = vsyncpa [#allocation6], 1
    %3772 = vsyncpa [#allocation9], 1
    %3773 = vsyncpa [#allocation12], 1
    %3774 = vsyncpa [#allocation15], 1
    %3775 = vsyncpa [#allocation7], 1
    %3776 = vsyncpa [#allocation18], 1

</llo_original>
